<compile_context>
chip_gen: v6e
topology: v6e:2x2x1
jax: 0.10.0
libtpu: 0.0.40
codegen_flags: <defaults>
</compile_context>

<pallas_src>
import math
from functools import partial

import jax
import jax.numpy as jnp
import numpy as np
from jax.experimental import pallas as pl
from jax.experimental.pallas import tpu as pltpu

_MASK_VAL = -1e30   # finite "minus infinity" for masked logits / running-max init


# ----------------------------- rotary glue -----------------------------------
def _rotate_interleaved(x):
    """Interleaved RoPE rotate: (x0, x1, x2, x3, ...) -> (-x1, x0, -x3, x2, ...)."""
    x1 = x[..., 0::2]
    x2 = x[..., 1::2]
    return jnp.stack([-x2, x1], axis=-1).reshape(x.shape)


def _partial_rotary(x, rot_dim, base=10000.0):
    """RotaryProjection on x[..., :rot_dim] for x of shape (B, L, H, E).

    Positions are flat sequence ids 0..L-1 (matches torch: cos/sin tables built
    as einsum('n,d->nd', pos, theta) repeated 'n d -> n (d 2)')."""
    L = x.shape[1]
    theta = 1.0 / (base ** (jnp.arange(0, rot_dim, 2, dtype=jnp.float32) / rot_dim))
    pos = jnp.arange(L, dtype=jnp.float32)
    m_theta = jnp.repeat(pos[:, None] * theta[None, :], 2, axis=-1)   # (L, rot_dim)
    cos = jnp.cos(m_theta)[None, :, None, :]
    sin = jnp.sin(m_theta)[None, :, None, :]
    x_rot, x_pass = x[..., :rot_dim], x[..., rot_dim:]
    x_rot = cos * x_rot + sin * _rotate_interleaved(x_rot)
    return jnp.concatenate([x_rot, x_pass], axis=-1).astype(x.dtype)


# ------------------------------ Pallas kernel ---------------------------------
def _time_attention_kernel(w_ref, q_ref, k_ref, v_ref, o_ref,
                           m_sc, l_sc, acc_sc, *, n_tokens, n_heads, kv_len):
    li = pl.program_id(1)
    si = pl.program_id(2)

    tl = q_ref.shape[1]
    ts = k_ref.shape[1]
    e = q_ref.shape[2] // n_heads
    d = v_ref.shape[2] // n_heads

    @pl.when(si == 0)
    def _init():
        m_sc[...] = jnp.full(m_sc.shape, _MASK_VAL, dtype=jnp.float32)
        l_sc[...] = jnp.zeros(l_sc.shape, dtype=jnp.float32)
        acc_sc[...] = jnp.zeros(acc_sc.shape, dtype=jnp.float32)

    # ---- mask / bias geometry, hoisted: built once per grid step, shared by all
    # heads.  Variate / token ids via f32 floor-div (exact for pos < 2^24) to
    # avoid vector integer div/mod.
    l_pos = li * tl + jax.lax.broadcasted_iota(jnp.int32, (tl, 1), 0)
    s_pos = si * ts + jax.lax.broadcasted_iota(jnp.int32, (1, ts), 1)
    nt_f = float(n_tokens)
    l_var = jnp.floor(l_pos.astype(jnp.float32) / nt_f).astype(jnp.int32)
    s_var = jnp.floor(s_pos.astype(jnp.float32) / nt_f).astype(jnp.int32)
    l_tok = l_pos - l_var * n_tokens
    s_tok = s_pos - s_var * n_tokens
    same_f = (l_var == s_var).astype(jnp.float32)            # (tl, ts)
    masked = s_tok > l_tok                                    # future token: disallowed
    if kv_len is not None:                                    # padded S tail (static)
        masked = jnp.logical_or(masked, s_pos >= kv_len)

    # Static head loop; all operands/state flow through ref slices so per-head
    # (tl, ts) temporaries are consumed within each iteration.
    for h in range(n_heads):
        e0, d0 = h * e, h * d

        qh = q_ref[0, :, e0:e0 + e]                           # (tl, e), input dtype
        kh = k_ref[0, :, e0:e0 + e]                           # (ts, e), input dtype
        s = jax.lax.dot_general(qh, kh, (((1,), (1,)), ((), ())),
                                preferred_element_type=jnp.float32)   # (tl, ts) f32

        # BinaryAttentionBias: scale already folded into w_ref in the wrapper.
        w_diff = w_ref[0, h]
        w_delta = w_ref[1, h] - w_diff
        s = s + (w_delta * same_f + w_diff)
        s = jnp.where(masked, _MASK_VAL, s)

        # Online softmax update (per head, lane column h of the state buffers).
        m_prev = m_sc[:, h:h + 1]                             # (tl, 1)
        m_new = jnp.maximum(m_prev, jnp.max(s, axis=-1, keepdims=True))
        alpha = jnp.exp(m_prev - m_new)
        p = jnp.exp(s - m_new)                                # masked -> underflow to 0

        l_sc[:, h:h + 1] = alpha * l_sc[:, h:h + 1] + jnp.sum(p, axis=-1, keepdims=True)
        m_sc[:, h:h + 1] = m_new

        vh = v_ref[0, :, d0:d0 + d]                           # (ts, d), input dtype
        pv = jax.lax.dot_general(p.astype(vh.dtype), vh, (((1,), (0,)), ((), ())),
                                 preferred_element_type=jnp.float32)  # (tl, d) f32
        acc_sc[:, d0:d0 + d] = alpha * acc_sc[:, d0:d0 + d] + pv

    @pl.when(si == pl.num_programs(2) - 1)
    def _finalize():
        for h in range(n_heads):
            d0 = h * d
            o_ref[0, :, d0:d0 + d] = (
                acc_sc[:, d0:d0 + d] / l_sc[:, h:h + 1]).astype(o_ref.dtype)


# ------------------------------ wrapper ----------------------------------------
def _round_up(x, m):
    return ((x + m - 1) // m) * m


def _tile(n, target, mult):
    """Tile size: a multiple of `mult`, at most max(target, mult); n is padded up."""
    t = min(max(target, mult), _round_up(n, mult))
    return _round_up(t, mult)


def time_attention_forward(queries, keys, values, emb_weight, *, n_vars, n_tokens,
                           scale=None, block_l=256, block_s=1024,
                           vmem_limit_bytes=48 * 1024 * 1024):
    """queries/keys: (B, L, H, E); values: (B, S, H, D); emb_weight: (2, H).

    Returns V with shape (B, L, H, D) (the torch module returns (V, None))."""
    B, L, H, E = queries.shape
    _, S, _, D = values.shape
    assert L == n_vars * n_tokens and S == L

    scale = scale if scale is not None else 1.0 / math.sqrt(E)
    rot_dim = int(E * 0.5)                       # partial_factor = (0.0, 0.5)

    # Rotary + softmax scale folded into q (elementwise, XLA-side), so the kernel
    # never rescales / re-casts the S-resident q tile per inner step.
    q = (_partial_rotary(queries, rot_dim) * scale).astype(queries.dtype)
    k = _partial_rotary(keys, rot_dim).astype(keys.dtype)

    # Free reshapes (H and E/D contiguous): lane-dense last dims, no transposes.
    q2 = q.reshape(B, L, H * E)
    k2 = k.reshape(B, S, H * E)
    v2 = values.reshape(B, S, H * D)

    # Tiles: TL multiple of 8; TS multiple of 128 for long sequences (8 otherwise).
    tl = _tile(L, block_l, 8)
    ts = _tile(S, block_s, 128 if S >= 128 else 8)
    Lp, Sp = _round_up(L, tl), _round_up(S, ts)
    if Lp != L:
        q2 = jnp.pad(q2, ((0, 0), (0, Lp - L), (0, 0)))
    if Sp != S:
        k2 = jnp.pad(k2, ((0, 0), (0, Sp - S), (0, 0)))
        v2 = jnp.pad(v2, ((0, 0), (0, Sp - S), (0, 0)))

    kernel = partial(_time_attention_kernel, n_tokens=n_tokens, n_heads=H,
                     kv_len=(S if Sp != S else None))

    out = pl.pallas_call(
        kernel,
        out_shape=jax.ShapeDtypeStruct((B, Lp, H * D), queries.dtype),
        grid=(B, Lp // tl, Sp // ts),
        in_specs=[
            pl.BlockSpec(memory_space=pltpu.MemorySpace.SMEM),          # (2, H) bias
            pl.BlockSpec((1, tl, H * E), lambda b, i, j: (b, i, 0)),    # q
            pl.BlockSpec((1, ts, H * E), lambda b, i, j: (b, j, 0)),    # k
            pl.BlockSpec((1, ts, H * D), lambda b, i, j: (b, j, 0)),    # v
        ],
        out_specs=pl.BlockSpec((1, tl, H * D), lambda b, i, j: (b, i, 0)),
        scratch_shapes=[
            pltpu.VMEM((tl, H), jnp.float32),        # running max   (lane-dense)
            pltpu.VMEM((tl, H), jnp.float32),        # running denom (lane-dense)
            pltpu.VMEM((tl, H * D), jnp.float32),    # running numerator (lane-dense)
        ],
        compiler_params=pltpu.CompilerParams(
            dimension_semantics=("parallel", "parallel", "arbitrary"),
            vmem_limit_bytes=vmem_limit_bytes),
    )((emb_weight * scale).astype(jnp.float32), q2, k2, v2)

    return out[:, :L, :].reshape(B, L, H, D)


# ------------------------------ pure-JAX reference ----------------------------
def time_attention_reference(queries, keys, values, emb_weight, *, n_vars, n_tokens,
                             scale=None):
    B, L, H, E = queries.shape
    _, S, _, D = values.shape
    rot_dim = int(E * 0.5)
    q = jnp.transpose(_partial_rotary(queries, rot_dim), (0, 2, 1, 3))
    k = jnp.transpose(_partial_rotary(keys, rot_dim), (0, 2, 1, 3))
    scale = scale if scale is not None else 1.0 / math.sqrt(E)

    pos = jnp.arange(n_vars * n_tokens)
    var_id = pos // n_tokens
    tok_id = pos % n_tokens
    same = var_id[:, None] == var_id[None, :]
    bias = jnp.where(same[None], emb_weight[1][:, None, None],
                     emb_weight[0][:, None, None])                       # (H, L, S)
    attn_mask = jnp.where((tok_id[None, :] > tok_id[:, None])[None], -jnp.inf, bias)

    scores = jnp.einsum('bhle,bhse->bhls', q, k,
                        precision=jax.lax.Precision.HIGHEST)
    A = jax.nn.softmax(scale * (scores + attn_mask[None]), axis=-1)
    return jnp.einsum('bhls,bshd->blhd', A, values,
                      precision=jax.lax.Precision.HIGHEST)


# ----------------------------------- main --------------------------------------
if __name__ == "__main__":
    def run_case(case_key, B, n_vars, n_tokens, H, E, block_l, block_s):
        L = S = n_vars * n_tokens
        D = E
        kq, kk, kv, kw = jax.random.split(case_key, 4)
        queries = jax.random.normal(kq, (B, L, H, E), dtype=jnp.float32)
        keys_ = jax.random.normal(kk, (B, S, H, E), dtype=jnp.float32)
        values = jax.random.normal(kv, (B, S, H, D), dtype=jnp.float32)
        # BinaryAttentionBias: nn.Embedding(2, num_heads).weight ~ N(0, 1)
        emb_weight = jax.random.normal(kw, (2, H), dtype=jnp.float32)

        V = time_attention_forward(queries, keys_, values, emb_weight,
                                   n_vars=n_vars, n_tokens=n_tokens,
                                   block_l=block_l, block_s=block_s)
        V = jax.block_until_ready(V)
        V_ref = time_attention_reference(queries, keys_, values, emb_weight,
                                         n_vars=n_vars, n_tokens=n_tokens)
        np.testing.assert_allclose(np.asarray(V), np.asarray(V_ref),
                                   rtol=2e-3, atol=2e-3)

    key = jax.random.PRNGKey(0)
    k1, k2 = jax.random.split(key)

    # Case 1: aligned shapes, small tiles -> exercises the multi-tile online
    # softmax path.  d_model = H * E = 128.
    run_case(k1, B=2, n_vars=2, n_tokens=8, H=8, E=16, block_l=8, block_s=8)

    # Case 2: ragged shapes (L = S = 21 -> padded to 24) -> exercises the
    # padding + tail-mask path.  d_model = 64.
    run_case(k2, B=2, n_vars=3, n_tokens=7, H=4, E=16, block_l=8, block_s=8)

    print("KERNEL_OK")
</pallas_src>

<mosaic_0001>
module attributes {stable_mosaic.version = 11 : i64} {
  func.func @_time_attention_kernel(%arg0: i32, %arg1: i32, %arg2: i32, %arg3: memref<2x8xf32, #tpu.memory_space<smem>>, %arg4: memref<1x8x128xf32, #tpu.memory_space<vmem>>, %arg5: memref<1x8x128xf32, #tpu.memory_space<vmem>>, %arg6: memref<1x8x128xf32, #tpu.memory_space<vmem>>, %arg7: memref<1x8x128xf32, #tpu.memory_space<vmem>>, %arg8: memref<8x8xf32, #tpu.memory_space<vmem>>, %arg9: memref<8x8xf32, #tpu.memory_space<vmem>>, %arg10: memref<8x128xf32, #tpu.memory_space<vmem>>) attributes {dimension_semantics = [#tpu.dimension_semantics<parallel>, #tpu.dimension_semantics<parallel>, #tpu.dimension_semantics<arbitrary>], iteration_bounds = array<i64: 2, 2, 2>, scalar_prefetch = 0 : i64, scratch_operands = 3 : i64, tpu.core_type = #tpu.core_type<tc>, window_params = [{transform_indices = @transform_0, window_bounds = array<i64: 2, 8>}, {transform_indices = @transform_1, window_bounds = array<i64: 1, 8, 128>}, {transform_indices = @transform_2, window_bounds = array<i64: 1, 8, 128>}, {transform_indices = @transform_3, window_bounds = array<i64: 1, 8, 128>}, {transform_indices = @transform_4, window_bounds = array<i64: 1, 8, 128>}]} {
    %c0_i32 = arith.constant 0 : i32
    %0 = arith.cmpi eq, %arg2, %c0_i32 : i32
    %1 = arith.extui %0 : i1 to i32
    %c0_i32_0 = arith.constant 0 : i32
    %2 = arith.cmpi ne, %1, %c0_i32_0 : i32
    scf.if %2 {
      %cst_231 = arith.constant -1.000000e+30 : f32
      %350 = vector.broadcast %cst_231 : f32 to vector<8x8xf32>
      %c0_232 = arith.constant 0 : index
      %c0_233 = arith.constant 0 : index
      %351 = vector.load %arg8[%c0_232, %c0_233] : memref<8x8xf32, #tpu.memory_space<vmem>>, vector<8x8xf32>
      tpu.vector_store %arg8[%c0_232, %c0_233], %350 {strides = array<i32>} : memref<8x8xf32, #tpu.memory_space<vmem>>, vector<8x8xf32>,
      %cst_234 = arith.constant 0.000000e+00 : f32
      %352 = vector.broadcast %cst_234 : f32 to vector<8x8xf32>
      %c0_235 = arith.constant 0 : index
      %c0_236 = arith.constant 0 : index
      %353 = vector.load %arg9[%c0_235, %c0_236] : memref<8x8xf32, #tpu.memory_space<vmem>>, vector<8x8xf32>
      tpu.vector_store %arg9[%c0_235, %c0_236], %352 {strides = array<i32>} : memref<8x8xf32, #tpu.memory_space<vmem>>, vector<8x8xf32>,
      %cst_237 = arith.constant 0.000000e+00 : f32
      %354 = vector.broadcast %cst_237 : f32 to vector<8x128xf32>
      %c0_238 = arith.constant 0 : index
      %c0_239 = arith.constant 0 : index
      %355 = vector.load %arg10[%c0_238, %c0_239] : memref<8x128xf32, #tpu.memory_space<vmem>>, vector<8x128xf32>
      tpu.vector_store %arg10[%c0_238, %c0_239], %354 {strides = array<i32>} : memref<8x128xf32, #tpu.memory_space<vmem>>, vector<8x128xf32>,
    } else {
    }
    %c8_i32 = arith.constant 8 : i32
    %3 = arith.muli %arg1, %c8_i32 : i32
    %4 = tpu.iota {dimensions = array<i32: 0>} : vector<8x1xi32>
    %5 = vector.broadcast %3 : i32 to vector<8x1xi32>
    %6 = arith.addi %5, %4 : vector<8x1xi32>
    %c8_i32_1 = arith.constant 8 : i32
    %7 = arith.muli %arg2, %c8_i32_1 : i32
    %8 = tpu.iota {dimensions = array<i32: 1>} : vector<1x8xi32>
    %9 = vector.broadcast %7 : i32 to vector<1x8xi32>
    %10 = arith.addi %9, %8 : vector<1x8xi32>
    %11 = arith.sitofp %6 : vector<8x1xi32> to vector<8x1xf32>
    %cst = arith.constant 8.000000e+00 : f32
    %12 = vector.broadcast %cst : f32 to vector<8x1xf32>
    %13 = arith.divf %11, %12 : vector<8x1xf32>
    %14 = math.floor %13 : vector<8x1xf32>
    %15 = arith.fptosi %14 : vector<8x1xf32> to vector<8x1xi32>
    %16 = arith.sitofp %10 : vector<1x8xi32> to vector<1x8xf32>
    %cst_2 = arith.constant 8.000000e+00 : f32
    %17 = vector.broadcast %cst_2 : f32 to vector<1x8xf32>
    %18 = arith.divf %16, %17 : vector<1x8xf32>
    %19 = math.floor %18 : vector<1x8xf32>
    %20 = arith.fptosi %19 : vector<1x8xf32> to vector<1x8xi32>
    %c8_i32_3 = arith.constant 8 : i32
    %21 = vector.broadcast %c8_i32_3 : i32 to vector<8x1xi32>
    %22 = arith.muli %15, %21 : vector<8x1xi32>
    %23 = arith.subi %6, %22 : vector<8x1xi32>
    %c8_i32_4 = arith.constant 8 : i32
    %24 = vector.broadcast %c8_i32_4 : i32 to vector<1x8xi32>
    %25 = arith.muli %20, %24 : vector<1x8xi32>
    %26 = arith.subi %10, %25 : vector<1x8xi32>
    %27 = vector.broadcast %15 : vector<8x1xi32> to vector<8x8xi32>
    %28 = vector.broadcast %20 : vector<1x8xi32> to vector<8x8xi32>
    %29 = arith.cmpi eq, %27, %28 : vector<8x8xi32>
    %30 = arith.extui %29 : vector<8x8xi1> to vector<8x8xi32>
    %31 = arith.sitofp %30 : vector<8x8xi32> to vector<8x8xf32>
    %32 = vector.broadcast %26 : vector<1x8xi32> to vector<8x8xi32>
    %33 = vector.broadcast %23 : vector<8x1xi32> to vector<8x8xi32>
    %34 = arith.cmpi sgt, %32, %33 : vector<8x8xi32>
    %c0 = arith.constant 0 : index
    %c0_5 = arith.constant 0 : index
    %c0_6 = arith.constant 0 : index
    %35 = vector.load %arg4[%c0, %c0_5, %c0_6] : memref<1x8x128xf32, #tpu.memory_space<vmem>>, vector<1x8x16xf32>
    %36 = vector.shape_cast %35 : vector<1x8x16xf32> to vector<8x16xf32>
    %c0_7 = arith.constant 0 : index
    %c0_8 = arith.constant 0 : index
    %c0_9 = arith.constant 0 : index
    %37 = vector.load %arg5[%c0_7, %c0_8, %c0_9] : memref<1x8x128xf32, #tpu.memory_space<vmem>>, vector<1x8x16xf32>
    %38 = vector.shape_cast %37 : vector<1x8x16xf32> to vector<8x16xf32>
    %cst_10 = arith.constant dense<0.000000e+00> : vector<8x8xf32>
    %39 = tpu.matmul %36, %38, %cst_10 {dimension_numbers = #tpu.dot_dimension_numbers<[1], [1], [0], [0], [0, 0, 1, 0], [], []>} : vector<8x16xf32>, vector<8x16xf32>, vector<8x8xf32> -> vector<8x8xf32>
    %c0_11 = arith.constant 0 : index
    %c0_12 = arith.constant 0 : index
    %40 = memref.load %arg3[%c0_11, %c0_12] : memref<2x8xf32, #tpu.memory_space<smem>>
    %c1 = arith.constant 1 : index
    %c0_13 = arith.constant 0 : index
    %41 = memref.load %arg3[%c1, %c0_13] : memref<2x8xf32, #tpu.memory_space<smem>>
    %42 = arith.subf %41, %40 : f32
    %43 = vector.broadcast %42 : f32 to vector<8x8xf32>
    %44 = arith.mulf %43, %31 : vector<8x8xf32>
    %45 = vector.broadcast %40 : f32 to vector<8x8xf32>
    %46 = arith.addf %44, %45 : vector<8x8xf32>
    %47 = arith.addf %39, %46 : vector<8x8xf32>
    %cst_14 = arith.constant -1.000000e+30 : f32
    %48 = vector.broadcast %cst_14 : f32 to vector<8x8xf32>
    %49 = arith.select %34, %48, %47 : vector<8x8xi1>, vector<8x8xf32>
    %c0_15 = arith.constant 0 : index
    %c0_16 = arith.constant 0 : index
    %50 = vector.load %arg8[%c0_15, %c0_16] : memref<8x8xf32, #tpu.memory_space<vmem>>, vector<8x1xf32>
    %cst_17 = arith.constant dense<0xFF800000> : vector<8xf32>
    %51 = vector.multi_reduction <maximumf>, %49, %cst_17 [1] : vector<8x8xf32> to vector<8xf32>
    %52 = vector.shape_cast %51 : vector<8xf32> to vector<8x1xf32>
    %53 = arith.maximumf %50, %52 : vector<8x1xf32>
    %54 = arith.subf %50, %53 : vector<8x1xf32>
    %55 = math.exp %54 : vector<8x1xf32>
    %56 = vector.broadcast %53 : vector<8x1xf32> to vector<8x8xf32>
    %57 = arith.subf %49, %56 : vector<8x8xf32>
    %58 = math.exp %57 : vector<8x8xf32>
    %c0_18 = arith.constant 0 : index
    %c0_19 = arith.constant 0 : index
    %59 = vector.load %arg9[%c0_18, %c0_19] : memref<8x8xf32, #tpu.memory_space<vmem>>, vector<8x1xf32>
    %60 = arith.mulf %55, %59 : vector<8x1xf32>
    %cst_20 = arith.constant dense<0.000000e+00> : vector<8xf32>
    %61 = vector.multi_reduction <add>, %58, %cst_20 [1] : vector<8x8xf32> to vector<8xf32>
    %62 = vector.shape_cast %61 : vector<8xf32> to vector<8x1xf32>
    %63 = arith.addf %60, %62 : vector<8x1xf32>
    %c0_21 = arith.constant 0 : index
    %c0_22 = arith.constant 0 : index
    %64 = vector.load %arg9[%c0_21, %c0_22] : memref<8x8xf32, #tpu.memory_space<vmem>>, vector<8x1xf32>
    tpu.vector_store %arg9[%c0_21, %c0_22], %63 {strides = array<i32>} : memref<8x8xf32, #tpu.memory_space<vmem>>, vector<8x1xf32>,
    %c0_23 = arith.constant 0 : index
    %c0_24 = arith.constant 0 : index
    %65 = vector.load %arg8[%c0_23, %c0_24] : memref<8x8xf32, #tpu.memory_space<vmem>>, vector<8x1xf32>
    tpu.vector_store %arg8[%c0_23, %c0_24], %53 {strides = array<i32>} : memref<8x8xf32, #tpu.memory_space<vmem>>, vector<8x1xf32>,
    %c0_25 = arith.constant 0 : index
    %c0_26 = arith.constant 0 : index
    %c0_27 = arith.constant 0 : index
    %66 = vector.load %arg6[%c0_25, %c0_26, %c0_27] : memref<1x8x128xf32, #tpu.memory_space<vmem>>, vector<1x8x16xf32>
    %67 = vector.shape_cast %66 : vector<1x8x16xf32> to vector<8x16xf32>
    %cst_28 = arith.constant dense<0.000000e+00> : vector<8x16xf32>
    %68 = tpu.matmul %58, %67, %cst_28 {dimension_numbers = #tpu.dot_dimension_numbers<[1], [0], [0], [1], [0, 0, 1, 1], [], []>} : vector<8x8xf32>, vector<8x16xf32>, vector<8x16xf32> -> vector<8x16xf32>
    %c0_29 = arith.constant 0 : index
    %c0_30 = arith.constant 0 : index
    %69 = vector.load %arg10[%c0_29, %c0_30] : memref<8x128xf32, #tpu.memory_space<vmem>>, vector<8x16xf32>
    %70 = vector.broadcast %55 : vector<8x1xf32> to vector<8x16xf32>
    %71 = arith.mulf %70, %69 : vector<8x16xf32>
    %72 = arith.addf %71, %68 : vector<8x16xf32>
    %c0_31 = arith.constant 0 : index
    %c0_32 = arith.constant 0 : index
    %73 = vector.load %arg10[%c0_31, %c0_32] : memref<8x128xf32, #tpu.memory_space<vmem>>, vector<8x16xf32>
    tpu.vector_store %arg10[%c0_31, %c0_32], %72 {strides = array<i32>} : memref<8x128xf32, #tpu.memory_space<vmem>>, vector<8x16xf32>,
    %c0_33 = arith.constant 0 : index
    %c0_34 = arith.constant 0 : index
    %c16 = arith.constant 16 : index
    %74 = vector.load %arg4[%c0_33, %c0_34, %c16] : memref<1x8x128xf32, #tpu.memory_space<vmem>>, vector<1x8x16xf32>
    %75 = vector.shape_cast %74 : vector<1x8x16xf32> to vector<8x16xf32>
    %c0_35 = arith.constant 0 : index
    %c0_36 = arith.constant 0 : index
    %c16_37 = arith.constant 16 : index
    %76 = vector.load %arg5[%c0_35, %c0_36, %c16_37] : memref<1x8x128xf32, #tpu.memory_space<vmem>>, vector<1x8x16xf32>
    %77 = vector.shape_cast %76 : vector<1x8x16xf32> to vector<8x16xf32>
    %cst_38 = arith.constant dense<0.000000e+00> : vector<8x8xf32>
    %78 = tpu.matmul %75, %77, %cst_38 {dimension_numbers = #tpu.dot_dimension_numbers<[1], [1], [0], [0], [0, 0, 1, 0], [], []>} : vector<8x16xf32>, vector<8x16xf32>, vector<8x8xf32> -> vector<8x8xf32>
    %c0_39 = arith.constant 0 : index
    %c1_40 = arith.constant 1 : index
    %79 = memref.load %arg3[%c0_39, %c1_40] : memref<2x8xf32, #tpu.memory_space<smem>>
    %c1_41 = arith.constant 1 : index
    %c1_42 = arith.constant 1 : index
    %80 = memref.load %arg3[%c1_41, %c1_42] : memref<2x8xf32, #tpu.memory_space<smem>>
    %81 = arith.subf %80, %79 : f32
    %82 = vector.broadcast %81 : f32 to vector<8x8xf32>
    %83 = arith.mulf %82, %31 : vector<8x8xf32>
    %84 = vector.broadcast %79 : f32 to vector<8x8xf32>
    %85 = arith.addf %83, %84 : vector<8x8xf32>
    %86 = arith.addf %78, %85 : vector<8x8xf32>
    %cst_43 = arith.constant -1.000000e+30 : f32
    %87 = vector.broadcast %cst_43 : f32 to vector<8x8xf32>
    %88 = arith.select %34, %87, %86 : vector<8x8xi1>, vector<8x8xf32>
    %c0_44 = arith.constant 0 : index
    %c1_45 = arith.constant 1 : index
    %89 = vector.load %arg8[%c0_44, %c1_45] : memref<8x8xf32, #tpu.memory_space<vmem>>, vector<8x1xf32>
    %cst_46 = arith.constant dense<0xFF800000> : vector<8xf32>
    %90 = vector.multi_reduction <maximumf>, %88, %cst_46 [1] : vector<8x8xf32> to vector<8xf32>
    %91 = vector.shape_cast %90 : vector<8xf32> to vector<8x1xf32>
    %92 = arith.maximumf %89, %91 : vector<8x1xf32>
    %93 = arith.subf %89, %92 : vector<8x1xf32>
    %94 = math.exp %93 : vector<8x1xf32>
    %95 = vector.broadcast %92 : vector<8x1xf32> to vector<8x8xf32>
    %96 = arith.subf %88, %95 : vector<8x8xf32>
    %97 = math.exp %96 : vector<8x8xf32>
    %c0_47 = arith.constant 0 : index
    %c1_48 = arith.constant 1 : index
    %98 = vector.load %arg9[%c0_47, %c1_48] : memref<8x8xf32, #tpu.memory_space<vmem>>, vector<8x1xf32>
    %99 = arith.mulf %94, %98 : vector<8x1xf32>
    %cst_49 = arith.constant dense<0.000000e+00> : vector<8xf32>
    %100 = vector.multi_reduction <add>, %97, %cst_49 [1] : vector<8x8xf32> to vector<8xf32>
    %101 = vector.shape_cast %100 : vector<8xf32> to vector<8x1xf32>
    %102 = arith.addf %99, %101 : vector<8x1xf32>
    %c0_50 = arith.constant 0 : index
    %c1_51 = arith.constant 1 : index
    %103 = vector.load %arg9[%c0_50, %c1_51] : memref<8x8xf32, #tpu.memory_space<vmem>>, vector<8x1xf32>
    tpu.vector_store %arg9[%c0_50, %c1_51], %102 {strides = array<i32>} : memref<8x8xf32, #tpu.memory_space<vmem>>, vector<8x1xf32>,
    %c0_52 = arith.constant 0 : index
    %c1_53 = arith.constant 1 : index
    %104 = vector.load %arg8[%c0_52, %c1_53] : memref<8x8xf32, #tpu.memory_space<vmem>>, vector<8x1xf32>
    tpu.vector_store %arg8[%c0_52, %c1_53], %92 {strides = array<i32>} : memref<8x8xf32, #tpu.memory_space<vmem>>, vector<8x1xf32>,
    %c0_54 = arith.constant 0 : index
    %c0_55 = arith.constant 0 : index
    %c16_56 = arith.constant 16 : index
    %105 = vector.load %arg6[%c0_54, %c0_55, %c16_56] : memref<1x8x128xf32, #tpu.memory_space<vmem>>, vector<1x8x16xf32>
    %106 = vector.shape_cast %105 : vector<1x8x16xf32> to vector<8x16xf32>
    %cst_57 = arith.constant dense<0.000000e+00> : vector<8x16xf32>
    %107 = tpu.matmul %97, %106, %cst_57 {dimension_numbers = #tpu.dot_dimension_numbers<[1], [0], [0], [1], [0, 0, 1, 1], [], []>} : vector<8x8xf32>, vector<8x16xf32>, vector<8x16xf32> -> vector<8x16xf32>
    %c0_58 = arith.constant 0 : index
    %c16_59 = arith.constant 16 : index
    %108 = vector.load %arg10[%c0_58, %c16_59] : memref<8x128xf32, #tpu.memory_space<vmem>>, vector<8x16xf32>
    %109 = vector.broadcast %94 : vector<8x1xf32> to vector<8x16xf32>
    %110 = arith.mulf %109, %108 : vector<8x16xf32>
    %111 = arith.addf %110, %107 : vector<8x16xf32>
    %c0_60 = arith.constant 0 : index
    %c16_61 = arith.constant 16 : index
    %112 = vector.load %arg10[%c0_60, %c16_61] : memref<8x128xf32, #tpu.memory_space<vmem>>, vector<8x16xf32>
    tpu.vector_store %arg10[%c0_60, %c16_61], %111 {strides = array<i32>} : memref<8x128xf32, #tpu.memory_space<vmem>>, vector<8x16xf32>,
    %c0_62 = arith.constant 0 : index
    %c0_63 = arith.constant 0 : index
    %c32 = arith.constant 32 : index
    %113 = vector.load %arg4[%c0_62, %c0_63, %c32] : memref<1x8x128xf32, #tpu.memory_space<vmem>>, vector<1x8x16xf32>
    %114 = vector.shape_cast %113 : vector<1x8x16xf32> to vector<8x16xf32>
    %c0_64 = arith.constant 0 : index
    %c0_65 = arith.constant 0 : index
    %c32_66 = arith.constant 32 : index
    %115 = vector.load %arg5[%c0_64, %c0_65, %c32_66] : memref<1x8x128xf32, #tpu.memory_space<vmem>>, vector<1x8x16xf32>
    %116 = vector.shape_cast %115 : vector<1x8x16xf32> to vector<8x16xf32>
    %cst_67 = arith.constant dense<0.000000e+00> : vector<8x8xf32>
    %117 = tpu.matmul %114, %116, %cst_67 {dimension_numbers = #tpu.dot_dimension_numbers<[1], [1], [0], [0], [0, 0, 1, 0], [], []>} : vector<8x16xf32>, vector<8x16xf32>, vector<8x8xf32> -> vector<8x8xf32>
    %c0_68 = arith.constant 0 : index
    %c2 = arith.constant 2 : index
    %118 = memref.load %arg3[%c0_68, %c2] : memref<2x8xf32, #tpu.memory_space<smem>>
    %c1_69 = arith.constant 1 : index
    %c2_70 = arith.constant 2 : index
    %119 = memref.load %arg3[%c1_69, %c2_70] : memref<2x8xf32, #tpu.memory_space<smem>>
    %120 = arith.subf %119, %118 : f32
    %121 = vector.broadcast %120 : f32 to vector<8x8xf32>
    %122 = arith.mulf %121, %31 : vector<8x8xf32>
    %123 = vector.broadcast %118 : f32 to vector<8x8xf32>
    %124 = arith.addf %122, %123 : vector<8x8xf32>
    %125 = arith.addf %117, %124 : vector<8x8xf32>
    %cst_71 = arith.constant -1.000000e+30 : f32
    %126 = vector.broadcast %cst_71 : f32 to vector<8x8xf32>
    %127 = arith.select %34, %126, %125 : vector<8x8xi1>, vector<8x8xf32>
    %c0_72 = arith.constant 0 : index
    %c2_73 = arith.constant 2 : index
    %128 = vector.load %arg8[%c0_72, %c2_73] : memref<8x8xf32, #tpu.memory_space<vmem>>, vector<8x1xf32>
    %cst_74 = arith.constant dense<0xFF800000> : vector<8xf32>
    %129 = vector.multi_reduction <maximumf>, %127, %cst_74 [1] : vector<8x8xf32> to vector<8xf32>
    %130 = vector.shape_cast %129 : vector<8xf32> to vector<8x1xf32>
    %131 = arith.maximumf %128, %130 : vector<8x1xf32>
    %132 = arith.subf %128, %131 : vector<8x1xf32>
    %133 = math.exp %132 : vector<8x1xf32>
    %134 = vector.broadcast %131 : vector<8x1xf32> to vector<8x8xf32>
    %135 = arith.subf %127, %134 : vector<8x8xf32>
    %136 = math.exp %135 : vector<8x8xf32>
    %c0_75 = arith.constant 0 : index
    %c2_76 = arith.constant 2 : index
    %137 = vector.load %arg9[%c0_75, %c2_76] : memref<8x8xf32, #tpu.memory_space<vmem>>, vector<8x1xf32>
    %138 = arith.mulf %133, %137 : vector<8x1xf32>
    %cst_77 = arith.constant dense<0.000000e+00> : vector<8xf32>
    %139 = vector.multi_reduction <add>, %136, %cst_77 [1] : vector<8x8xf32> to vector<8xf32>
    %140 = vector.shape_cast %139 : vector<8xf32> to vector<8x1xf32>
    %141 = arith.addf %138, %140 : vector<8x1xf32>
    %c0_78 = arith.constant 0 : index
    %c2_79 = arith.constant 2 : index
    %142 = vector.load %arg9[%c0_78, %c2_79] : memref<8x8xf32, #tpu.memory_space<vmem>>, vector<8x1xf32>
    tpu.vector_store %arg9[%c0_78, %c2_79], %141 {strides = array<i32>} : memref<8x8xf32, #tpu.memory_space<vmem>>, vector<8x1xf32>,
    %c0_80 = arith.constant 0 : index
    %c2_81 = arith.constant 2 : index
    %143 = vector.load %arg8[%c0_80, %c2_81] : memref<8x8xf32, #tpu.memory_space<vmem>>, vector<8x1xf32>
    tpu.vector_store %arg8[%c0_80, %c2_81], %131 {strides = array<i32>} : memref<8x8xf32, #tpu.memory_space<vmem>>, vector<8x1xf32>,
    %c0_82 = arith.constant 0 : index
    %c0_83 = arith.constant 0 : index
    %c32_84 = arith.constant 32 : index
    %144 = vector.load %arg6[%c0_82, %c0_83, %c32_84] : memref<1x8x128xf32, #tpu.memory_space<vmem>>, vector<1x8x16xf32>
    %145 = vector.shape_cast %144 : vector<1x8x16xf32> to vector<8x16xf32>
    %cst_85 = arith.constant dense<0.000000e+00> : vector<8x16xf32>
    %146 = tpu.matmul %136, %145, %cst_85 {dimension_numbers = #tpu.dot_dimension_numbers<[1], [0], [0], [1], [0, 0, 1, 1], [], []>} : vector<8x8xf32>, vector<8x16xf32>, vector<8x16xf32> -> vector<8x16xf32>
    %c0_86 = arith.constant 0 : index
    %c32_87 = arith.constant 32 : index
    %147 = vector.load %arg10[%c0_86, %c32_87] : memref<8x128xf32, #tpu.memory_space<vmem>>, vector<8x16xf32>
    %148 = vector.broadcast %133 : vector<8x1xf32> to vector<8x16xf32>
    %149 = arith.mulf %148, %147 : vector<8x16xf32>
    %150 = arith.addf %149, %146 : vector<8x16xf32>
    %c0_88 = arith.constant 0 : index
    %c32_89 = arith.constant 32 : index
    %151 = vector.load %arg10[%c0_88, %c32_89] : memref<8x128xf32, #tpu.memory_space<vmem>>, vector<8x16xf32>
    tpu.vector_store %arg10[%c0_88, %c32_89], %150 {strides = array<i32>} : memref<8x128xf32, #tpu.memory_space<vmem>>, vector<8x16xf32>,
    %c0_90 = arith.constant 0 : index
    %c0_91 = arith.constant 0 : index
    %c48 = arith.constant 48 : index
    %152 = vector.load %arg4[%c0_90, %c0_91, %c48] : memref<1x8x128xf32, #tpu.memory_space<vmem>>, vector<1x8x16xf32>
    %153 = vector.shape_cast %152 : vector<1x8x16xf32> to vector<8x16xf32>
    %c0_92 = arith.constant 0 : index
    %c0_93 = arith.constant 0 : index
    %c48_94 = arith.constant 48 : index
    %154 = vector.load %arg5[%c0_92, %c0_93, %c48_94] : memref<1x8x128xf32, #tpu.memory_space<vmem>>, vector<1x8x16xf32>
    %155 = vector.shape_cast %154 : vector<1x8x16xf32> to vector<8x16xf32>
    %cst_95 = arith.constant dense<0.000000e+00> : vector<8x8xf32>
    %156 = tpu.matmul %153, %155, %cst_95 {dimension_numbers = #tpu.dot_dimension_numbers<[1], [1], [0], [0], [0, 0, 1, 0], [], []>} : vector<8x16xf32>, vector<8x16xf32>, vector<8x8xf32> -> vector<8x8xf32>
    %c0_96 = arith.constant 0 : index
    %c3 = arith.constant 3 : index
    %157 = memref.load %arg3[%c0_96, %c3] : memref<2x8xf32, #tpu.memory_space<smem>>
    %c1_97 = arith.constant 1 : index
    %c3_98 = arith.constant 3 : index
    %158 = memref.load %arg3[%c1_97, %c3_98] : memref<2x8xf32, #tpu.memory_space<smem>>
    %159 = arith.subf %158, %157 : f32
    %160 = vector.broadcast %159 : f32 to vector<8x8xf32>
    %161 = arith.mulf %160, %31 : vector<8x8xf32>
    %162 = vector.broadcast %157 : f32 to vector<8x8xf32>
    %163 = arith.addf %161, %162 : vector<8x8xf32>
    %164 = arith.addf %156, %163 : vector<8x8xf32>
    %cst_99 = arith.constant -1.000000e+30 : f32
    %165 = vector.broadcast %cst_99 : f32 to vector<8x8xf32>
    %166 = arith.select %34, %165, %164 : vector<8x8xi1>, vector<8x8xf32>
    %c0_100 = arith.constant 0 : index
    %c3_101 = arith.constant 3 : index
    %167 = vector.load %arg8[%c0_100, %c3_101] : memref<8x8xf32, #tpu.memory_space<vmem>>, vector<8x1xf32>
    %cst_102 = arith.constant dense<0xFF800000> : vector<8xf32>
    %168 = vector.multi_reduction <maximumf>, %166, %cst_102 [1] : vector<8x8xf32> to vector<8xf32>
    %169 = vector.shape_cast %168 : vector<8xf32> to vector<8x1xf32>
    %170 = arith.maximumf %167, %169 : vector<8x1xf32>
    %171 = arith.subf %167, %170 : vector<8x1xf32>
    %172 = math.exp %171 : vector<8x1xf32>
    %173 = vector.broadcast %170 : vector<8x1xf32> to vector<8x8xf32>
    %174 = arith.subf %166, %173 : vector<8x8xf32>
    %175 = math.exp %174 : vector<8x8xf32>
    %c0_103 = arith.constant 0 : index
    %c3_104 = arith.constant 3 : index
    %176 = vector.load %arg9[%c0_103, %c3_104] : memref<8x8xf32, #tpu.memory_space<vmem>>, vector<8x1xf32>
    %177 = arith.mulf %172, %176 : vector<8x1xf32>
    %cst_105 = arith.constant dense<0.000000e+00> : vector<8xf32>
    %178 = vector.multi_reduction <add>, %175, %cst_105 [1] : vector<8x8xf32> to vector<8xf32>
    %179 = vector.shape_cast %178 : vector<8xf32> to vector<8x1xf32>
    %180 = arith.addf %177, %179 : vector<8x1xf32>
    %c0_106 = arith.constant 0 : index
    %c3_107 = arith.constant 3 : index
    %181 = vector.load %arg9[%c0_106, %c3_107] : memref<8x8xf32, #tpu.memory_space<vmem>>, vector<8x1xf32>
    tpu.vector_store %arg9[%c0_106, %c3_107], %180 {strides = array<i32>} : memref<8x8xf32, #tpu.memory_space<vmem>>, vector<8x1xf32>,
    %c0_108 = arith.constant 0 : index
    %c3_109 = arith.constant 3 : index
    %182 = vector.load %arg8[%c0_108, %c3_109] : memref<8x8xf32, #tpu.memory_space<vmem>>, vector<8x1xf32>
    tpu.vector_store %arg8[%c0_108, %c3_109], %170 {strides = array<i32>} : memref<8x8xf32, #tpu.memory_space<vmem>>, vector<8x1xf32>,
    %c0_110 = arith.constant 0 : index
    %c0_111 = arith.constant 0 : index
    %c48_112 = arith.constant 48 : index
    %183 = vector.load %arg6[%c0_110, %c0_111, %c48_112] : memref<1x8x128xf32, #tpu.memory_space<vmem>>, vector<1x8x16xf32>
    %184 = vector.shape_cast %183 : vector<1x8x16xf32> to vector<8x16xf32>
    %cst_113 = arith.constant dense<0.000000e+00> : vector<8x16xf32>
    %185 = tpu.matmul %175, %184, %cst_113 {dimension_numbers = #tpu.dot_dimension_numbers<[1], [0], [0], [1], [0, 0, 1, 1], [], []>} : vector<8x8xf32>, vector<8x16xf32>, vector<8x16xf32> -> vector<8x16xf32>
    %c0_114 = arith.constant 0 : index
    %c48_115 = arith.constant 48 : index
    %186 = vector.load %arg10[%c0_114, %c48_115] : memref<8x128xf32, #tpu.memory_space<vmem>>, vector<8x16xf32>
    %187 = vector.broadcast %172 : vector<8x1xf32> to vector<8x16xf32>
    %188 = arith.mulf %187, %186 : vector<8x16xf32>
    %189 = arith.addf %188, %185 : vector<8x16xf32>
    %c0_116 = arith.constant 0 : index
    %c48_117 = arith.constant 48 : index
    %190 = vector.load %arg10[%c0_116, %c48_117] : memref<8x128xf32, #tpu.memory_space<vmem>>, vector<8x16xf32>
    tpu.vector_store %arg10[%c0_116, %c48_117], %189 {strides = array<i32>} : memref<8x128xf32, #tpu.memory_space<vmem>>, vector<8x16xf32>,
    %c0_118 = arith.constant 0 : index
    %c0_119 = arith.constant 0 : index
    %c64 = arith.constant 64 : index
    %191 = vector.load %arg4[%c0_118, %c0_119, %c64] : memref<1x8x128xf32, #tpu.memory_space<vmem>>, vector<1x8x16xf32>
    %192 = vector.shape_cast %191 : vector<1x8x16xf32> to vector<8x16xf32>
    %c0_120 = arith.constant 0 : index
    %c0_121 = arith.constant 0 : index
    %c64_122 = arith.constant 64 : index
    %193 = vector.load %arg5[%c0_120, %c0_121, %c64_122] : memref<1x8x128xf32, #tpu.memory_space<vmem>>, vector<1x8x16xf32>
    %194 = vector.shape_cast %193 : vector<1x8x16xf32> to vector<8x16xf32>
    %cst_123 = arith.constant dense<0.000000e+00> : vector<8x8xf32>
    %195 = tpu.matmul %192, %194, %cst_123 {dimension_numbers = #tpu.dot_dimension_numbers<[1], [1], [0], [0], [0, 0, 1, 0], [], []>} : vector<8x16xf32>, vector<8x16xf32>, vector<8x8xf32> -> vector<8x8xf32>
    %c0_124 = arith.constant 0 : index
    %c4 = arith.constant 4 : index
    %196 = memref.load %arg3[%c0_124, %c4] : memref<2x8xf32, #tpu.memory_space<smem>>
    %c1_125 = arith.constant 1 : index
    %c4_126 = arith.constant 4 : index
    %197 = memref.load %arg3[%c1_125, %c4_126] : memref<2x8xf32, #tpu.memory_space<smem>>
    %198 = arith.subf %197, %196 : f32
    %199 = vector.broadcast %198 : f32 to vector<8x8xf32>
    %200 = arith.mulf %199, %31 : vector<8x8xf32>
    %201 = vector.broadcast %196 : f32 to vector<8x8xf32>
    %202 = arith.addf %200, %201 : vector<8x8xf32>
    %203 = arith.addf %195, %202 : vector<8x8xf32>
    %cst_127 = arith.constant -1.000000e+30 : f32
    %204 = vector.broadcast %cst_127 : f32 to vector<8x8xf32>
    %205 = arith.select %34, %204, %203 : vector<8x8xi1>, vector<8x8xf32>
    %c0_128 = arith.constant 0 : index
    %c4_129 = arith.constant 4 : index
    %206 = vector.load %arg8[%c0_128, %c4_129] : memref<8x8xf32, #tpu.memory_space<vmem>>, vector<8x1xf32>
    %cst_130 = arith.constant dense<0xFF800000> : vector<8xf32>
    %207 = vector.multi_reduction <maximumf>, %205, %cst_130 [1] : vector<8x8xf32> to vector<8xf32>
    %208 = vector.shape_cast %207 : vector<8xf32> to vector<8x1xf32>
    %209 = arith.maximumf %206, %208 : vector<8x1xf32>
    %210 = arith.subf %206, %209 : vector<8x1xf32>
    %211 = math.exp %210 : vector<8x1xf32>
    %212 = vector.broadcast %209 : vector<8x1xf32> to vector<8x8xf32>
    %213 = arith.subf %205, %212 : vector<8x8xf32>
    %214 = math.exp %213 : vector<8x8xf32>
    %c0_131 = arith.constant 0 : index
    %c4_132 = arith.constant 4 : index
    %215 = vector.load %arg9[%c0_131, %c4_132] : memref<8x8xf32, #tpu.memory_space<vmem>>, vector<8x1xf32>
    %216 = arith.mulf %211, %215 : vector<8x1xf32>
    %cst_133 = arith.constant dense<0.000000e+00> : vector<8xf32>
    %217 = vector.multi_reduction <add>, %214, %cst_133 [1] : vector<8x8xf32> to vector<8xf32>
    %218 = vector.shape_cast %217 : vector<8xf32> to vector<8x1xf32>
    %219 = arith.addf %216, %218 : vector<8x1xf32>
    %c0_134 = arith.constant 0 : index
    %c4_135 = arith.constant 4 : index
    %220 = vector.load %arg9[%c0_134, %c4_135] : memref<8x8xf32, #tpu.memory_space<vmem>>, vector<8x1xf32>
    tpu.vector_store %arg9[%c0_134, %c4_135], %219 {strides = array<i32>} : memref<8x8xf32, #tpu.memory_space<vmem>>, vector<8x1xf32>,
    %c0_136 = arith.constant 0 : index
    %c4_137 = arith.constant 4 : index
    %221 = vector.load %arg8[%c0_136, %c4_137] : memref<8x8xf32, #tpu.memory_space<vmem>>, vector<8x1xf32>
    tpu.vector_store %arg8[%c0_136, %c4_137], %209 {strides = array<i32>} : memref<8x8xf32, #tpu.memory_space<vmem>>, vector<8x1xf32>,
    %c0_138 = arith.constant 0 : index
    %c0_139 = arith.constant 0 : index
    %c64_140 = arith.constant 64 : index
    %222 = vector.load %arg6[%c0_138, %c0_139, %c64_140] : memref<1x8x128xf32, #tpu.memory_space<vmem>>, vector<1x8x16xf32>
    %223 = vector.shape_cast %222 : vector<1x8x16xf32> to vector<8x16xf32>
    %cst_141 = arith.constant dense<0.000000e+00> : vector<8x16xf32>
    %224 = tpu.matmul %214, %223, %cst_141 {dimension_numbers = #tpu.dot_dimension_numbers<[1], [0], [0], [1], [0, 0, 1, 1], [], []>} : vector<8x8xf32>, vector<8x16xf32>, vector<8x16xf32> -> vector<8x16xf32>
    %c0_142 = arith.constant 0 : index
    %c64_143 = arith.constant 64 : index
    %225 = vector.load %arg10[%c0_142, %c64_143] : memref<8x128xf32, #tpu.memory_space<vmem>>, vector<8x16xf32>
    %226 = vector.broadcast %211 : vector<8x1xf32> to vector<8x16xf32>
    %227 = arith.mulf %226, %225 : vector<8x16xf32>
    %228 = arith.addf %227, %224 : vector<8x16xf32>
    %c0_144 = arith.constant 0 : index
    %c64_145 = arith.constant 64 : index
    %229 = vector.load %arg10[%c0_144, %c64_145] : memref<8x128xf32, #tpu.memory_space<vmem>>, vector<8x16xf32>
    tpu.vector_store %arg10[%c0_144, %c64_145], %228 {strides = array<i32>} : memref<8x128xf32, #tpu.memory_space<vmem>>, vector<8x16xf32>,
    %c0_146 = arith.constant 0 : index
    %c0_147 = arith.constant 0 : index
    %c80 = arith.constant 80 : index
    %230 = vector.load %arg4[%c0_146, %c0_147, %c80] : memref<1x8x128xf32, #tpu.memory_space<vmem>>, vector<1x8x16xf32>
    %231 = vector.shape_cast %230 : vector<1x8x16xf32> to vector<8x16xf32>
    %c0_148 = arith.constant 0 : index
    %c0_149 = arith.constant 0 : index
    %c80_150 = arith.constant 80 : index
    %232 = vector.load %arg5[%c0_148, %c0_149, %c80_150] : memref<1x8x128xf32, #tpu.memory_space<vmem>>, vector<1x8x16xf32>
    %233 = vector.shape_cast %232 : vector<1x8x16xf32> to vector<8x16xf32>
    %cst_151 = arith.constant dense<0.000000e+00> : vector<8x8xf32>
    %234 = tpu.matmul %231, %233, %cst_151 {dimension_numbers = #tpu.dot_dimension_numbers<[1], [1], [0], [0], [0, 0, 1, 0], [], []>} : vector<8x16xf32>, vector<8x16xf32>, vector<8x8xf32> -> vector<8x8xf32>
    %c0_152 = arith.constant 0 : index
    %c5 = arith.constant 5 : index
    %235 = memref.load %arg3[%c0_152, %c5] : memref<2x8xf32, #tpu.memory_space<smem>>
    %c1_153 = arith.constant 1 : index
    %c5_154 = arith.constant 5 : index
    %236 = memref.load %arg3[%c1_153, %c5_154] : memref<2x8xf32, #tpu.memory_space<smem>>
    %237 = arith.subf %236, %235 : f32
    %238 = vector.broadcast %237 : f32 to vector<8x8xf32>
    %239 = arith.mulf %238, %31 : vector<8x8xf32>
    %240 = vector.broadcast %235 : f32 to vector<8x8xf32>
    %241 = arith.addf %239, %240 : vector<8x8xf32>
    %242 = arith.addf %234, %241 : vector<8x8xf32>
    %cst_155 = arith.constant -1.000000e+30 : f32
    %243 = vector.broadcast %cst_155 : f32 to vector<8x8xf32>
    %244 = arith.select %34, %243, %242 : vector<8x8xi1>, vector<8x8xf32>
    %c0_156 = arith.constant 0 : index
    %c5_157 = arith.constant 5 : index
    %245 = vector.load %arg8[%c0_156, %c5_157] : memref<8x8xf32, #tpu.memory_space<vmem>>, vector<8x1xf32>
    %cst_158 = arith.constant dense<0xFF800000> : vector<8xf32>
    %246 = vector.multi_reduction <maximumf>, %244, %cst_158 [1] : vector<8x8xf32> to vector<8xf32>
    %247 = vector.shape_cast %246 : vector<8xf32> to vector<8x1xf32>
    %248 = arith.maximumf %245, %247 : vector<8x1xf32>
    %249 = arith.subf %245, %248 : vector<8x1xf32>
    %250 = math.exp %249 : vector<8x1xf32>
    %251 = vector.broadcast %248 : vector<8x1xf32> to vector<8x8xf32>
    %252 = arith.subf %244, %251 : vector<8x8xf32>
    %253 = math.exp %252 : vector<8x8xf32>
    %c0_159 = arith.constant 0 : index
    %c5_160 = arith.constant 5 : index
    %254 = vector.load %arg9[%c0_159, %c5_160] : memref<8x8xf32, #tpu.memory_space<vmem>>, vector<8x1xf32>
    %255 = arith.mulf %250, %254 : vector<8x1xf32>
    %cst_161 = arith.constant dense<0.000000e+00> : vector<8xf32>
    %256 = vector.multi_reduction <add>, %253, %cst_161 [1] : vector<8x8xf32> to vector<8xf32>
    %257 = vector.shape_cast %256 : vector<8xf32> to vector<8x1xf32>
    %258 = arith.addf %255, %257 : vector<8x1xf32>
    %c0_162 = arith.constant 0 : index
    %c5_163 = arith.constant 5 : index
    %259 = vector.load %arg9[%c0_162, %c5_163] : memref<8x8xf32, #tpu.memory_space<vmem>>, vector<8x1xf32>
    tpu.vector_store %arg9[%c0_162, %c5_163], %258 {strides = array<i32>} : memref<8x8xf32, #tpu.memory_space<vmem>>, vector<8x1xf32>,
    %c0_164 = arith.constant 0 : index
    %c5_165 = arith.constant 5 : index
    %260 = vector.load %arg8[%c0_164, %c5_165] : memref<8x8xf32, #tpu.memory_space<vmem>>, vector<8x1xf32>
    tpu.vector_store %arg8[%c0_164, %c5_165], %248 {strides = array<i32>} : memref<8x8xf32, #tpu.memory_space<vmem>>, vector<8x1xf32>,
    %c0_166 = arith.constant 0 : index
    %c0_167 = arith.constant 0 : index
    %c80_168 = arith.constant 80 : index
    %261 = vector.load %arg6[%c0_166, %c0_167, %c80_168] : memref<1x8x128xf32, #tpu.memory_space<vmem>>, vector<1x8x16xf32>
    %262 = vector.shape_cast %261 : vector<1x8x16xf32> to vector<8x16xf32>
    %cst_169 = arith.constant dense<0.000000e+00> : vector<8x16xf32>
    %263 = tpu.matmul %253, %262, %cst_169 {dimension_numbers = #tpu.dot_dimension_numbers<[1], [0], [0], [1], [0, 0, 1, 1], [], []>} : vector<8x8xf32>, vector<8x16xf32>, vector<8x16xf32> -> vector<8x16xf32>
    %c0_170 = arith.constant 0 : index
    %c80_171 = arith.constant 80 : index
    %264 = vector.load %arg10[%c0_170, %c80_171] : memref<8x128xf32, #tpu.memory_space<vmem>>, vector<8x16xf32>
    %265 = vector.broadcast %250 : vector<8x1xf32> to vector<8x16xf32>
    %266 = arith.mulf %265, %264 : vector<8x16xf32>
    %267 = arith.addf %266, %263 : vector<8x16xf32>
    %c0_172 = arith.constant 0 : index
    %c80_173 = arith.constant 80 : index
    %268 = vector.load %arg10[%c0_172, %c80_173] : memref<8x128xf32, #tpu.memory_space<vmem>>, vector<8x16xf32>
    tpu.vector_store %arg10[%c0_172, %c80_173], %267 {strides = array<i32>} : memref<8x128xf32, #tpu.memory_space<vmem>>, vector<8x16xf32>,
    %c0_174 = arith.constant 0 : index
    %c0_175 = arith.constant 0 : index
    %c96 = arith.constant 96 : index
    %269 = vector.load %arg4[%c0_174, %c0_175, %c96] : memref<1x8x128xf32, #tpu.memory_space<vmem>>, vector<1x8x16xf32>
    %270 = vector.shape_cast %269 : vector<1x8x16xf32> to vector<8x16xf32>
    %c0_176 = arith.constant 0 : index
    %c0_177 = arith.constant 0 : index
    %c96_178 = arith.constant 96 : index
    %271 = vector.load %arg5[%c0_176, %c0_177, %c96_178] : memref<1x8x128xf32, #tpu.memory_space<vmem>>, vector<1x8x16xf32>
    %272 = vector.shape_cast %271 : vector<1x8x16xf32> to vector<8x16xf32>
    %cst_179 = arith.constant dense<0.000000e+00> : vector<8x8xf32>
    %273 = tpu.matmul %270, %272, %cst_179 {dimension_numbers = #tpu.dot_dimension_numbers<[1], [1], [0], [0], [0, 0, 1, 0], [], []>} : vector<8x16xf32>, vector<8x16xf32>, vector<8x8xf32> -> vector<8x8xf32>
    %c0_180 = arith.constant 0 : index
    %c6 = arith.constant 6 : index
    %274 = memref.load %arg3[%c0_180, %c6] : memref<2x8xf32, #tpu.memory_space<smem>>
    %c1_181 = arith.constant 1 : index
    %c6_182 = arith.constant 6 : index
    %275 = memref.load %arg3[%c1_181, %c6_182] : memref<2x8xf32, #tpu.memory_space<smem>>
    %276 = arith.subf %275, %274 : f32
    %277 = vector.broadcast %276 : f32 to vector<8x8xf32>
    %278 = arith.mulf %277, %31 : vector<8x8xf32>
    %279 = vector.broadcast %274 : f32 to vector<8x8xf32>
    %280 = arith.addf %278, %279 : vector<8x8xf32>
    %281 = arith.addf %273, %280 : vector<8x8xf32>
    %cst_183 = arith.constant -1.000000e+30 : f32
    %282 = vector.broadcast %cst_183 : f32 to vector<8x8xf32>
    %283 = arith.select %34, %282, %281 : vector<8x8xi1>, vector<8x8xf32>
    %c0_184 = arith.constant 0 : index
    %c6_185 = arith.constant 6 : index
    %284 = vector.load %arg8[%c0_184, %c6_185] : memref<8x8xf32, #tpu.memory_space<vmem>>, vector<8x1xf32>
    %cst_186 = arith.constant dense<0xFF800000> : vector<8xf32>
    %285 = vector.multi_reduction <maximumf>, %283, %cst_186 [1] : vector<8x8xf32> to vector<8xf32>
    %286 = vector.shape_cast %285 : vector<8xf32> to vector<8x1xf32>
    %287 = arith.maximumf %284, %286 : vector<8x1xf32>
    %288 = arith.subf %284, %287 : vector<8x1xf32>
    %289 = math.exp %288 : vector<8x1xf32>
    %290 = vector.broadcast %287 : vector<8x1xf32> to vector<8x8xf32>
    %291 = arith.subf %283, %290 : vector<8x8xf32>
    %292 = math.exp %291 : vector<8x8xf32>
    %c0_187 = arith.constant 0 : index
    %c6_188 = arith.constant 6 : index
    %293 = vector.load %arg9[%c0_187, %c6_188] : memref<8x8xf32, #tpu.memory_space<vmem>>, vector<8x1xf32>
    %294 = arith.mulf %289, %293 : vector<8x1xf32>
    %cst_189 = arith.constant dense<0.000000e+00> : vector<8xf32>
    %295 = vector.multi_reduction <add>, %292, %cst_189 [1] : vector<8x8xf32> to vector<8xf32>
    %296 = vector.shape_cast %295 : vector<8xf32> to vector<8x1xf32>
    %297 = arith.addf %294, %296 : vector<8x1xf32>
    %c0_190 = arith.constant 0 : index
    %c6_191 = arith.constant 6 : index
    %298 = vector.load %arg9[%c0_190, %c6_191] : memref<8x8xf32, #tpu.memory_space<vmem>>, vector<8x1xf32>
    tpu.vector_store %arg9[%c0_190, %c6_191], %297 {strides = array<i32>} : memref<8x8xf32, #tpu.memory_space<vmem>>, vector<8x1xf32>,
    %c0_192 = arith.constant 0 : index
    %c6_193 = arith.constant 6 : index
    %299 = vector.load %arg8[%c0_192, %c6_193] : memref<8x8xf32, #tpu.memory_space<vmem>>, vector<8x1xf32>
    tpu.vector_store %arg8[%c0_192, %c6_193], %287 {strides = array<i32>} : memref<8x8xf32, #tpu.memory_space<vmem>>, vector<8x1xf32>,
    %c0_194 = arith.constant 0 : index
    %c0_195 = arith.constant 0 : index
    %c96_196 = arith.constant 96 : index
    %300 = vector.load %arg6[%c0_194, %c0_195, %c96_196] : memref<1x8x128xf32, #tpu.memory_space<vmem>>, vector<1x8x16xf32>
    %301 = vector.shape_cast %300 : vector<1x8x16xf32> to vector<8x16xf32>
    %cst_197 = arith.constant dense<0.000000e+00> : vector<8x16xf32>
    %302 = tpu.matmul %292, %301, %cst_197 {dimension_numbers = #tpu.dot_dimension_numbers<[1], [0], [0], [1], [0, 0, 1, 1], [], []>} : vector<8x8xf32>, vector<8x16xf32>, vector<8x16xf32> -> vector<8x16xf32>
    %c0_198 = arith.constant 0 : index
    %c96_199 = arith.constant 96 : index
    %303 = vector.load %arg10[%c0_198, %c96_199] : memref<8x128xf32, #tpu.memory_space<vmem>>, vector<8x16xf32>
    %304 = vector.broadcast %289 : vector<8x1xf32> to vector<8x16xf32>
    %305 = arith.mulf %304, %303 : vector<8x16xf32>
    %306 = arith.addf %305, %302 : vector<8x16xf32>
    %c0_200 = arith.constant 0 : index
    %c96_201 = arith.constant 96 : index
    %307 = vector.load %arg10[%c0_200, %c96_201] : memref<8x128xf32, #tpu.memory_space<vmem>>, vector<8x16xf32>
    tpu.vector_store %arg10[%c0_200, %c96_201], %306 {strides = array<i32>} : memref<8x128xf32, #tpu.memory_space<vmem>>, vector<8x16xf32>,
    %c0_202 = arith.constant 0 : index
    %c0_203 = arith.constant 0 : index
    %c112 = arith.constant 112 : index
    %308 = vector.load %arg4[%c0_202, %c0_203, %c112] : memref<1x8x128xf32, #tpu.memory_space<vmem>>, vector<1x8x16xf32>
    %309 = vector.shape_cast %308 : vector<1x8x16xf32> to vector<8x16xf32>
    %c0_204 = arith.constant 0 : index
    %c0_205 = arith.constant 0 : index
    %c112_206 = arith.constant 112 : index
    %310 = vector.load %arg5[%c0_204, %c0_205, %c112_206] : memref<1x8x128xf32, #tpu.memory_space<vmem>>, vector<1x8x16xf32>
    %311 = vector.shape_cast %310 : vector<1x8x16xf32> to vector<8x16xf32>
    %cst_207 = arith.constant dense<0.000000e+00> : vector<8x8xf32>
    %312 = tpu.matmul %309, %311, %cst_207 {dimension_numbers = #tpu.dot_dimension_numbers<[1], [1], [0], [0], [0, 0, 1, 0], [], []>} : vector<8x16xf32>, vector<8x16xf32>, vector<8x8xf32> -> vector<8x8xf32>
    %c0_208 = arith.constant 0 : index
    %c7 = arith.constant 7 : index
    %313 = memref.load %arg3[%c0_208, %c7] : memref<2x8xf32, #tpu.memory_space<smem>>
    %c1_209 = arith.constant 1 : index
    %c7_210 = arith.constant 7 : index
    %314 = memref.load %arg3[%c1_209, %c7_210] : memref<2x8xf32, #tpu.memory_space<smem>>
    %315 = arith.subf %314, %313 : f32
    %316 = vector.broadcast %315 : f32 to vector<8x8xf32>
    %317 = arith.mulf %316, %31 : vector<8x8xf32>
    %318 = vector.broadcast %313 : f32 to vector<8x8xf32>
    %319 = arith.addf %317, %318 : vector<8x8xf32>
    %320 = arith.addf %312, %319 : vector<8x8xf32>
    %cst_211 = arith.constant -1.000000e+30 : f32
    %321 = vector.broadcast %cst_211 : f32 to vector<8x8xf32>
    %322 = arith.select %34, %321, %320 : vector<8x8xi1>, vector<8x8xf32>
    %c0_212 = arith.constant 0 : index
    %c7_213 = arith.constant 7 : index
    %323 = vector.load %arg8[%c0_212, %c7_213] : memref<8x8xf32, #tpu.memory_space<vmem>>, vector<8x1xf32>
    %cst_214 = arith.constant dense<0xFF800000> : vector<8xf32>
    %324 = vector.multi_reduction <maximumf>, %322, %cst_214 [1] : vector<8x8xf32> to vector<8xf32>
    %325 = vector.shape_cast %324 : vector<8xf32> to vector<8x1xf32>
    %326 = arith.maximumf %323, %325 : vector<8x1xf32>
    %327 = arith.subf %323, %326 : vector<8x1xf32>
    %328 = math.exp %327 : vector<8x1xf32>
    %329 = vector.broadcast %326 : vector<8x1xf32> to vector<8x8xf32>
    %330 = arith.subf %322, %329 : vector<8x8xf32>
    %331 = math.exp %330 : vector<8x8xf32>
    %c0_215 = arith.constant 0 : index
    %c7_216 = arith.constant 7 : index
    %332 = vector.load %arg9[%c0_215, %c7_216] : memref<8x8xf32, #tpu.memory_space<vmem>>, vector<8x1xf32>
    %333 = arith.mulf %328, %332 : vector<8x1xf32>
    %cst_217 = arith.constant dense<0.000000e+00> : vector<8xf32>
    %334 = vector.multi_reduction <add>, %331, %cst_217 [1] : vector<8x8xf32> to vector<8xf32>
    %335 = vector.shape_cast %334 : vector<8xf32> to vector<8x1xf32>
    %336 = arith.addf %333, %335 : vector<8x1xf32>
    %c0_218 = arith.constant 0 : index
    %c7_219 = arith.constant 7 : index
    %337 = vector.load %arg9[%c0_218, %c7_219] : memref<8x8xf32, #tpu.memory_space<vmem>>, vector<8x1xf32>
    tpu.vector_store %arg9[%c0_218, %c7_219], %336 {strides = array<i32>} : memref<8x8xf32, #tpu.memory_space<vmem>>, vector<8x1xf32>,
    %c0_220 = arith.constant 0 : index
    %c7_221 = arith.constant 7 : index
    %338 = vector.load %arg8[%c0_220, %c7_221] : memref<8x8xf32, #tpu.memory_space<vmem>>, vector<8x1xf32>
    tpu.vector_store %arg8[%c0_220, %c7_221], %326 {strides = array<i32>} : memref<8x8xf32, #tpu.memory_space<vmem>>, vector<8x1xf32>,
    %c0_222 = arith.constant 0 : index
    %c0_223 = arith.constant 0 : index
    %c112_224 = arith.constant 112 : index
    %339 = vector.load %arg6[%c0_222, %c0_223, %c112_224] : memref<1x8x128xf32, #tpu.memory_space<vmem>>, vector<1x8x16xf32>
    %340 = vector.shape_cast %339 : vector<1x8x16xf32> to vector<8x16xf32>
    %cst_225 = arith.constant dense<0.000000e+00> : vector<8x16xf32>
    %341 = tpu.matmul %331, %340, %cst_225 {dimension_numbers = #tpu.dot_dimension_numbers<[1], [0], [0], [1], [0, 0, 1, 1], [], []>} : vector<8x8xf32>, vector<8x16xf32>, vector<8x16xf32> -> vector<8x16xf32>
    %c0_226 = arith.constant 0 : index
    %c112_227 = arith.constant 112 : index
    %342 = vector.load %arg10[%c0_226, %c112_227] : memref<8x128xf32, #tpu.memory_space<vmem>>, vector<8x16xf32>
    %343 = vector.broadcast %328 : vector<8x1xf32> to vector<8x16xf32>
    %344 = arith.mulf %343, %342 : vector<8x16xf32>
    %345 = arith.addf %344, %341 : vector<8x16xf32>
    %c0_228 = arith.constant 0 : index
    %c112_229 = arith.constant 112 : index
    %346 = vector.load %arg10[%c0_228, %c112_229] : memref<8x128xf32, #tpu.memory_space<vmem>>, vector<8x16xf32>
    tpu.vector_store %arg10[%c0_228, %c112_229], %345 {strides = array<i32>} : memref<8x128xf32, #tpu.memory_space<vmem>>, vector<8x16xf32>,
    %c1_i32 = arith.constant 1 : i32
    %347 = arith.cmpi eq, %arg2, %c1_i32 : i32
    %348 = arith.extui %347 : i1 to i32
    %c0_i32_230 = arith.constant 0 : i32
    %349 = arith.cmpi ne, %348, %c0_i32_230 : i32
    scf.if %349 {
      %c0_231 = arith.constant 0 : index
      %c0_232 = arith.constant 0 : index
      %350 = vector.load %arg10[%c0_231, %c0_232] : memref<8x128xf32, #tpu.memory_space<vmem>>, vector<8x16xf32>
      %c0_233 = arith.constant 0 : index
      %c0_234 = arith.constant 0 : index
      %351 = vector.load %arg9[%c0_233, %c0_234] : memref<8x8xf32, #tpu.memory_space<vmem>>, vector<8x1xf32>
      %352 = vector.broadcast %351 : vector<8x1xf32> to vector<8x16xf32>
      %353 = arith.divf %350, %352 : vector<8x16xf32>
      %c0_235 = arith.constant 0 : index
      %c0_236 = arith.constant 0 : index
      %c0_237 = arith.constant 0 : index
      %354 = vector.load %arg7[%c0_235, %c0_236, %c0_237] : memref<1x8x128xf32, #tpu.memory_space<vmem>>, vector<1x8x16xf32>
      %355 = vector.shape_cast %354 : vector<1x8x16xf32> to vector<8x16xf32>
      %356 = vector.shape_cast %353 : vector<8x16xf32> to vector<1x8x16xf32>
      tpu.vector_store %arg7[%c0_235, %c0_236, %c0_237], %356 {strides = array<i32>} : memref<1x8x128xf32, #tpu.memory_space<vmem>>, vector<1x8x16xf32>,
      %c0_238 = arith.constant 0 : index
      %c16_239 = arith.constant 16 : index
      %357 = vector.load %arg10[%c0_238, %c16_239] : memref<8x128xf32, #tpu.memory_space<vmem>>, vector<8x16xf32>
      %c0_240 = arith.constant 0 : index
      %c1_241 = arith.constant 1 : index
      %358 = vector.load %arg9[%c0_240, %c1_241] : memref<8x8xf32, #tpu.memory_space<vmem>>, vector<8x1xf32>
      %359 = vector.broadcast %358 : vector<8x1xf32> to vector<8x16xf32>
      %360 = arith.divf %357, %359 : vector<8x16xf32>
      %c0_242 = arith.constant 0 : index
      %c0_243 = arith.constant 0 : index
      %c16_244 = arith.constant 16 : index
      %361 = vector.load %arg7[%c0_242, %c0_243, %c16_244] : memref<1x8x128xf32, #tpu.memory_space<vmem>>, vector<1x8x16xf32>
      %362 = vector.shape_cast %361 : vector<1x8x16xf32> to vector<8x16xf32>
      %363 = vector.shape_cast %360 : vector<8x16xf32> to vector<1x8x16xf32>
      tpu.vector_store %arg7[%c0_242, %c0_243, %c16_244], %363 {strides = array<i32>} : memref<1x8x128xf32, #tpu.memory_space<vmem>>, vector<1x8x16xf32>,
      %c0_245 = arith.constant 0 : index
      %c32_246 = arith.constant 32 : index
      %364 = vector.load %arg10[%c0_245, %c32_246] : memref<8x128xf32, #tpu.memory_space<vmem>>, vector<8x16xf32>
      %c0_247 = arith.constant 0 : index
      %c2_248 = arith.constant 2 : index
      %365 = vector.load %arg9[%c0_247, %c2_248] : memref<8x8xf32, #tpu.memory_space<vmem>>, vector<8x1xf32>
      %366 = vector.broadcast %365 : vector<8x1xf32> to vector<8x16xf32>
      %367 = arith.divf %364, %366 : vector<8x16xf32>
      %c0_249 = arith.constant 0 : index
      %c0_250 = arith.constant 0 : index
      %c32_251 = arith.constant 32 : index
      %368 = vector.load %arg7[%c0_249, %c0_250, %c32_251] : memref<1x8x128xf32, #tpu.memory_space<vmem>>, vector<1x8x16xf32>
      %369 = vector.shape_cast %368 : vector<1x8x16xf32> to vector<8x16xf32>
      %370 = vector.shape_cast %367 : vector<8x16xf32> to vector<1x8x16xf32>
      tpu.vector_store %arg7[%c0_249, %c0_250, %c32_251], %370 {strides = array<i32>} : memref<1x8x128xf32, #tpu.memory_space<vmem>>, vector<1x8x16xf32>,
      %c0_252 = arith.constant 0 : index
      %c48_253 = arith.constant 48 : index
      %371 = vector.load %arg10[%c0_252, %c48_253] : memref<8x128xf32, #tpu.memory_space<vmem>>, vector<8x16xf32>
      %c0_254 = arith.constant 0 : index
      %c3_255 = arith.constant 3 : index
      %372 = vector.load %arg9[%c0_254, %c3_255] : memref<8x8xf32, #tpu.memory_space<vmem>>, vector<8x1xf32>
      %373 = vector.broadcast %372 : vector<8x1xf32> to vector<8x16xf32>
      %374 = arith.divf %371, %373 : vector<8x16xf32>
      %c0_256 = arith.constant 0 : index
      %c0_257 = arith.constant 0 : index
      %c48_258 = arith.constant 48 : index
      %375 = vector.load %arg7[%c0_256, %c0_257, %c48_258] : memref<1x8x128xf32, #tpu.memory_space<vmem>>, vector<1x8x16xf32>
      %376 = vector.shape_cast %375 : vector<1x8x16xf32> to vector<8x16xf32>
      %377 = vector.shape_cast %374 : vector<8x16xf32> to vector<1x8x16xf32>
      tpu.vector_store %arg7[%c0_256, %c0_257, %c48_258], %377 {strides = array<i32>} : memref<1x8x128xf32, #tpu.memory_space<vmem>>, vector<1x8x16xf32>,
      %c0_259 = arith.constant 0 : index
      %c64_260 = arith.constant 64 : index
      %378 = vector.load %arg10[%c0_259, %c64_260] : memref<8x128xf32, #tpu.memory_space<vmem>>, vector<8x16xf32>
      %c0_261 = arith.constant 0 : index
      %c4_262 = arith.constant 4 : index
      %379 = vector.load %arg9[%c0_261, %c4_262] : memref<8x8xf32, #tpu.memory_space<vmem>>, vector<8x1xf32>
      %380 = vector.broadcast %379 : vector<8x1xf32> to vector<8x16xf32>
      %381 = arith.divf %378, %380 : vector<8x16xf32>
      %c0_263 = arith.constant 0 : index
      %c0_264 = arith.constant 0 : index
      %c64_265 = arith.constant 64 : index
      %382 = vector.load %arg7[%c0_263, %c0_264, %c64_265] : memref<1x8x128xf32, #tpu.memory_space<vmem>>, vector<1x8x16xf32>
      %383 = vector.shape_cast %382 : vector<1x8x16xf32> to vector<8x16xf32>
      %384 = vector.shape_cast %381 : vector<8x16xf32> to vector<1x8x16xf32>
      tpu.vector_store %arg7[%c0_263, %c0_264, %c64_265], %384 {strides = array<i32>} : memref<1x8x128xf32, #tpu.memory_space<vmem>>, vector<1x8x16xf32>,
      %c0_266 = arith.constant 0 : index
      %c80_267 = arith.constant 80 : index
      %385 = vector.load %arg10[%c0_266, %c80_267] : memref<8x128xf32, #tpu.memory_space<vmem>>, vector<8x16xf32>
      %c0_268 = arith.constant 0 : index
      %c5_269 = arith.constant 5 : index
      %386 = vector.load %arg9[%c0_268, %c5_269] : memref<8x8xf32, #tpu.memory_space<vmem>>, vector<8x1xf32>
      %387 = vector.broadcast %386 : vector<8x1xf32> to vector<8x16xf32>
      %388 = arith.divf %385, %387 : vector<8x16xf32>
      %c0_270 = arith.constant 0 : index
      %c0_271 = arith.constant 0 : index
      %c80_272 = arith.constant 80 : index
      %389 = vector.load %arg7[%c0_270, %c0_271, %c80_272] : memref<1x8x128xf32, #tpu.memory_space<vmem>>, vector<1x8x16xf32>
      %390 = vector.shape_cast %389 : vector<1x8x16xf32> to vector<8x16xf32>
      %391 = vector.shape_cast %388 : vector<8x16xf32> to vector<1x8x16xf32>
      tpu.vector_store %arg7[%c0_270, %c0_271, %c80_272], %391 {strides = array<i32>} : memref<1x8x128xf32, #tpu.memory_space<vmem>>, vector<1x8x16xf32>,
      %c0_273 = arith.constant 0 : index
      %c96_274 = arith.constant 96 : index
      %392 = vector.load %arg10[%c0_273, %c96_274] : memref<8x128xf32, #tpu.memory_space<vmem>>, vector<8x16xf32>
      %c0_275 = arith.constant 0 : index
      %c6_276 = arith.constant 6 : index
      %393 = vector.load %arg9[%c0_275, %c6_276] : memref<8x8xf32, #tpu.memory_space<vmem>>, vector<8x1xf32>
      %394 = vector.broadcast %393 : vector<8x1xf32> to vector<8x16xf32>
      %395 = arith.divf %392, %394 : vector<8x16xf32>
      %c0_277 = arith.constant 0 : index
      %c0_278 = arith.constant 0 : index
      %c96_279 = arith.constant 96 : index
      %396 = vector.load %arg7[%c0_277, %c0_278, %c96_279] : memref<1x8x128xf32, #tpu.memory_space<vmem>>, vector<1x8x16xf32>
      %397 = vector.shape_cast %396 : vector<1x8x16xf32> to vector<8x16xf32>
      %398 = vector.shape_cast %395 : vector<8x16xf32> to vector<1x8x16xf32>
      tpu.vector_store %arg7[%c0_277, %c0_278, %c96_279], %398 {strides = array<i32>} : memref<1x8x128xf32, #tpu.memory_space<vmem>>, vector<1x8x16xf32>,
      %c0_280 = arith.constant 0 : index
      %c112_281 = arith.constant 112 : index
      %399 = vector.load %arg10[%c0_280, %c112_281] : memref<8x128xf32, #tpu.memory_space<vmem>>, vector<8x16xf32>
      %c0_282 = arith.constant 0 : index
      %c7_283 = arith.constant 7 : index
      %400 = vector.load %arg9[%c0_282, %c7_283] : memref<8x8xf32, #tpu.memory_space<vmem>>, vector<8x1xf32>
      %401 = vector.broadcast %400 : vector<8x1xf32> to vector<8x16xf32>
      %402 = arith.divf %399, %401 : vector<8x16xf32>
      %c0_284 = arith.constant 0 : index
      %c0_285 = arith.constant 0 : index
      %c112_286 = arith.constant 112 : index
      %403 = vector.load %arg7[%c0_284, %c0_285, %c112_286] : memref<1x8x128xf32, #tpu.memory_space<vmem>>, vector<1x8x16xf32>
      %404 = vector.shape_cast %403 : vector<1x8x16xf32> to vector<8x16xf32>
      %405 = vector.shape_cast %402 : vector<8x16xf32> to vector<1x8x16xf32>
      tpu.vector_store %arg7[%c0_284, %c0_285, %c112_286], %405 {strides = array<i32>} : memref<1x8x128xf32, #tpu.memory_space<vmem>>, vector<1x8x16xf32>,
    } else {
    }
    return
  }
  func.func @transform_0(%arg0: i32, %arg1: i32, %arg2: i32) -> (i32, i32) {
    %c0_i32 = arith.constant 0 : i32
    %c0_i32_0 = arith.constant 0 : i32
    %c0_i32_1 = arith.constant 0 : i32
    return %c0_i32, %c0_i32_0 : i32, i32
  }
  func.func @transform_1(%arg0: i32, %arg1: i32, %arg2: i32) -> (i32, i32, i32) {
    %c0_i32 = arith.constant 0 : i32
    %c0_i32_0 = arith.constant 0 : i32
    return %arg0, %arg1, %c0_i32 : i32, i32, i32
  }
  func.func @transform_2(%arg0: i32, %arg1: i32, %arg2: i32) -> (i32, i32, i32) {
    %c0_i32 = arith.constant 0 : i32
    %c0_i32_0 = arith.constant 0 : i32
    return %arg0, %arg2, %c0_i32 : i32, i32, i32
  }
  func.func @transform_3(%arg0: i32, %arg1: i32, %arg2: i32) -> (i32, i32, i32) {
    %c0_i32 = arith.constant 0 : i32
    %c0_i32_0 = arith.constant 0 : i32
    return %arg0, %arg2, %c0_i32 : i32, i32, i32
  }
  func.func @transform_4(%arg0: i32, %arg1: i32, %arg2: i32) -> (i32, i32, i32) {
    %c0_i32 = arith.constant 0 : i32
    %c0_i32_0 = arith.constant 0 : i32
    return %arg0, %arg1, %c0_i32 : i32, i32, i32
  }
}

</mosaic_0001>

<llo_original>
// kernel: tpu_custom_call.1
$region0: #{tpu_custom_call.1}
  #allocation0 [shape = 'u32[]', space=smem, size = 0x4, offset = 0x4, fixed_abs, tag = 'smem constant byte address 0x4 - core index']
  #allocation1 [shape = 'u32[144,128]{1,0:T(1,128)}', space=vmem, size = 0x12000, scoped, tag = 'internal scratch']
  #allocation2 [shape = 'f32[8,8]{1,0:T(8,128)}', space=vmem, size = 0x1000, scoped, tag = 'scratch operand']
  #allocation3 [shape = 'f32[8,8]{1,0:T(8,128)}', space=vmem, size = 0x1000, scoped, tag = 'scratch operand']
  #allocation4 [shape = 'f32[8,128]{1,0:T(8,128)}', space=vmem, size = 0x1000, scoped, tag = 'scratch operand']
  %s0 = inlined_call_operand.hbm [shape: f32[2,8], index: 0, kind: input, shape index: {}]
  %s1 = inlined_call_operand.hbm [shape: f32[2,16,128], index: 1, kind: input, shape index: {}]
  %s2 = inlined_call_operand.hbm [shape: f32[2,16,128], index: 2, kind: input, shape index: {}]
  %s3 = inlined_call_operand.hbm [shape: f32[2,16,128], index: 3, kind: input, shape index: {}]
  %s4 = inlined_call_operand.hbm [shape: f32[2,16,128], index: 4, kind: output, shape index: {}]
  %s5 = sld [smem:[#allocation0]]
  $region73: #{tpu_custom_call.1} parent=0
    _
  %s7 = ssub.s32 1, %s5
  %s8 = scalar_select 0, %s7, %s5
  $region1: #{tpu_custom_call.1} parent=0
    #allocation5 [shape = 'u8[1024]{0}', space=smem, size = 0x400, scoped, tag = 'input window, operand 0, single buffered']
    #allocation6 [shape = 's32[2]{0}', space=sflag, size = 0x8, scoped, tag = 'scoped memory for tpu_custom_call.1']
    #allocation7 [shape = 's32[2]{0}', space=sflag, size = 0x8, scoped, tag = 'scoped memory for tpu_custom_call.1']
    #allocation8 [shape = 's32[2]{0}', space=sflag, size = 0x8, scoped, tag = 'scoped memory for tpu_custom_call.1']
    #allocation9 [shape = 'u8[8192]{0}', space=vmem, size = 0x2000, scoped, tag = 'input window, operand 1']
    #allocation10 [shape = 'u8[8192]{0}', space=vmem, size = 0x2000, scoped, tag = 'input window, operand 2']
    #allocation11 [shape = 's32[2]{0}', space=sflag, size = 0x8, scoped, tag = 'scoped memory for tpu_custom_call.1']
    #allocation12 [shape = 'u8[8192]{0}', space=vmem, size = 0x2000, scoped, tag = 'input window, operand 3']
    #allocation13 [shape = 'u8[8192]{0}', space=vmem, size = 0x2000, scoped, tag = 'output window, operand 0']
    %9 = vsyncpa [#allocation8], 0
    %10 = vsyncpa [#allocation6], 0
    %s11 = scalar_lea.sflag [#allocation6], 1
    %12 = vsyncpa %s11, 0
    %13 = vsyncpa [#allocation11], 0
    %s14 = scalar_lea.sflag [#allocation11], 1
    %15 = vsyncpa %s14, 0
    %16 = vsyncpa [#allocation7], 0
    %s17 = scalar_lea.sflag [#allocation7], 1
    %18 = vsyncpa %s17, 0
    loop: start=0, step=1, limit=10
    $region2: #{tpu_custom_call.1} parent=1 // loop_pre_header
      _
    $region3: #{tpu_custom_call.1} parent=1 // loop_header
      %s20 = sphi 0, %s24
      %p21 = scmp.ge.s32.totalorder %s20, 10
      %s27 = sphi 0, %s46
      %s28 = sphi 0, %s42
      %s29 = sphi 0, %s38
      %s30 = sphi 0, %s27
      %s31 = sphi 0, %s28
      %s32 = sphi 0, %s29
      %s33 = sphi 0, %s30
      %s34 = sphi 0, %s31
      %s35 = sphi 0, %s32
      %s47 = sphi 0, %s47
      %s49 = sphi 0, %s47
      %s50 = sphi 0, %s49
      %s64 = sphi 0, %s50
      %s72 = sphi 0, %s74
      %s75 = sphi 0, %s72
      %s76 = sphi 0, %s75
      %s92 = sphi 0, %s76
      %s100 = sphi 0, %s102
      %s103 = sphi 0, %s100
      %s104 = sphi 0, %s103
      %s120 = sphi 0, %s104
      %s128 = sphi 0, %s130
      %s131 = sphi 0, %s128
      %s132 = sphi 0, %s131
      %s148 = sphi 0, %s132
      %s156 = sphi 0, %s158
      %s159 = sphi 0, %s156
      %s160 = sphi 0, %s159
      %s176 = sphi 0, %s160
    $region4: #{tpu_custom_call.1} parent=1 // loop_header_branch
      %23 = sbr.rel (%p21) target = $region8
    $region5: #{tpu_custom_call.1} parent=1 // loop_body
      %s25 = ssub.s32 %s20, 1
      %s26 = ssub.s32 %s20, 2
      %s36 = sadd.s32 1, %s29
      %p37 = scmp.ge.s32.totalorder %s36, 2
      %s38 = scalar_select %p37, 0, %s36
      %s39 = sadd.s32 1, %s28
      %s40 = scalar_select %p37, %s39, %s28
      %p41 = scmp.ge.s32.totalorder %s40, 2
      %s42 = scalar_select %p41, 0, %s40
      %s43 = sadd.s32 1, %s27
      %s44 = scalar_select %p41, %s43, %s27
      %p45 = scmp.ge.s32.totalorder %s44, 2
      %s46 = scalar_select %p45, 0, %s44
      %s48 = sadd.s32 %s47, 1
      %p51 = scmp.eq.s32.totalorder %s20, 7
      %p52 = scmp.ne.s32.totalorder %s47, %s49
      %p53 = scmp.eq.s32.totalorder %s20, 0
      %p54 = por %p52, %p53
      %p55 = scmp.ne.s32.totalorder %s47, %s49
      %p56 = scmp.eq.s32.totalorder %s25, 7
      %p57 = por %p55, %p56
      %p58 = scmp.ne.s32.totalorder %s49, %s50
      %p59 = scmp.eq.s32.totalorder %s25, 0
      %p60 = por %p58, %p59
      %p61 = scmp.ne.s32.totalorder %s49, %s50
      %p62 = scmp.eq.s32.totalorder %s26, 7
      %p63 = por %p61, %p62
      %p65 = scmp.ne.s32.totalorder %s50, %s64
      %p66 = scmp.eq.s32.totalorder %s26, 0
      %p67 = por %p65, %p66
      %s68 = ssub.s32 %s27, %s46
      %s69 = ssub.s32 %s28, %s42
      %s70 = sor.u32 %s68, %s69
      %p71 = scmp.eq.s32.totalorder %s70, 0
      %s73 = sadd.s32 %s72, 1
      %s74 = scalar_select %p71, %s72, %s73
      %p77 = pneg %p71
      %p78 = scmp.eq.s32.totalorder %s20, 7
      %p79 = por %p77, %p78
      %p80 = scmp.ne.s32.totalorder %s72, %s75
      %p81 = scmp.eq.s32.totalorder %s20, 0
      %p82 = por %p80, %p81
      %p83 = scmp.ne.s32.totalorder %s72, %s75
      %p84 = scmp.eq.s32.totalorder %s25, 7
      %p85 = por %p83, %p84
      %p86 = scmp.ne.s32.totalorder %s75, %s76
      %p87 = scmp.eq.s32.totalorder %s25, 0
      %p88 = por %p86, %p87
      %p89 = scmp.ne.s32.totalorder %s75, %s76
      %p90 = scmp.eq.s32.totalorder %s26, 7
      %p91 = por %p89, %p90
      %p93 = scmp.ne.s32.totalorder %s76, %s92
      %p94 = scmp.eq.s32.totalorder %s26, 0
      %p95 = por %p93, %p94
      %s96 = ssub.s32 %s27, %s46
      %s97 = ssub.s32 %s29, %s38
      %s98 = sor.u32 %s96, %s97
      %p99 = scmp.eq.s32.totalorder %s98, 0
      %s101 = sadd.s32 %s100, 1
      %s102 = scalar_select %p99, %s100, %s101
      %p105 = pneg %p99
      %p106 = scmp.eq.s32.totalorder %s20, 7
      %p107 = por %p105, %p106
      %p108 = scmp.ne.s32.totalorder %s100, %s103
      %p109 = scmp.eq.s32.totalorder %s20, 0
      %p110 = por %p108, %p109
      %p111 = scmp.ne.s32.totalorder %s100, %s103
      %p112 = scmp.eq.s32.totalorder %s25, 7
      %p113 = por %p111, %p112
      %p114 = scmp.ne.s32.totalorder %s103, %s104
      %p115 = scmp.eq.s32.totalorder %s25, 0
      %p116 = por %p114, %p115
      %p117 = scmp.ne.s32.totalorder %s103, %s104
      %p118 = scmp.eq.s32.totalorder %s26, 7
      %p119 = por %p117, %p118
      %p121 = scmp.ne.s32.totalorder %s104, %s120
      %p122 = scmp.eq.s32.totalorder %s26, 0
      %p123 = por %p121, %p122
      %s124 = ssub.s32 %s27, %s46
      %s125 = ssub.s32 %s29, %s38
      %s126 = sor.u32 %s124, %s125
      %p127 = scmp.eq.s32.totalorder %s126, 0
      %s129 = sadd.s32 %s128, 1
      %s130 = scalar_select %p127, %s128, %s129
      %p133 = pneg %p127
      %p134 = scmp.eq.s32.totalorder %s20, 7
      %p135 = por %p133, %p134
      %p136 = scmp.ne.s32.totalorder %s128, %s131
      %p137 = scmp.eq.s32.totalorder %s20, 0
      %p138 = por %p136, %p137
      %p139 = scmp.ne.s32.totalorder %s128, %s131
      %p140 = scmp.eq.s32.totalorder %s25, 7
      %p141 = por %p139, %p140
      %p142 = scmp.ne.s32.totalorder %s131, %s132
      %p143 = scmp.eq.s32.totalorder %s25, 0
      %p144 = por %p142, %p143
      %p145 = scmp.ne.s32.totalorder %s131, %s132
      %p146 = scmp.eq.s32.totalorder %s26, 7
      %p147 = por %p145, %p146
      %p149 = scmp.ne.s32.totalorder %s132, %s148
      %p150 = scmp.eq.s32.totalorder %s26, 0
      %p151 = por %p149, %p150
      %s152 = ssub.s32 %s27, %s46
      %s153 = ssub.s32 %s28, %s42
      %s154 = sor.u32 %s152, %s153
      %p155 = scmp.eq.s32.totalorder %s154, 0
      %s157 = sadd.s32 %s156, 1
      %s158 = scalar_select %p155, %s156, %s157
      %p161 = pneg %p155
      %p162 = scmp.eq.s32.totalorder %s20, 7
      %p163 = por %p161, %p162
      %p164 = scmp.ne.s32.totalorder %s156, %s159
      %p165 = scmp.eq.s32.totalorder %s20, 0
      %p166 = por %p164, %p165
      %p167 = scmp.ne.s32.totalorder %s156, %s159
      %p168 = scmp.eq.s32.totalorder %s25, 7
      %p169 = por %p167, %p168
      %p170 = scmp.ne.s32.totalorder %s159, %s160
      %p171 = scmp.eq.s32.totalorder %s25, 0
      %p172 = por %p170, %p171
      %p173 = scmp.ne.s32.totalorder %s159, %s160
      %p174 = scmp.eq.s32.totalorder %s26, 7
      %p175 = por %p173, %p174
      %p177 = scmp.ne.s32.totalorder %s160, %s176
      %p178 = scmp.eq.s32.totalorder %s26, 0
      %p179 = por %p177, %p178
      %p180 = scmp.le.s32.totalorder 1, %s20
      %p181 = scmp.lt.s32.totalorder %s20, 9
      %p182 = pnand %p180, %p181
      %p183 = pneg %p182
      // Predicated region
      $region9: #{tpu_custom_call.1} parent=5 // pred_check
        _
      $region10: #{tpu_custom_call.1} parent=5 // pred_check_branch
        %185 = sbr.rel (%p182) target = $region12
      $region11: #{tpu_custom_call.1} parent=5 // pred_region
        %s186 = ssub.s32 %s20, 1
        // Predicated region
        $region13: #{tpu_custom_call.1} parent=11 // pred_check
          %p187 = pneg %p60
        $region14: #{tpu_custom_call.1} parent=11 // pred_check_branch
          %189 = sbr.rel (%p187) target = $region16
        $region15: #{tpu_custom_call.1} parent=11 // pred_region
          %s191 = ssub.s32 32, 32
          %192 = vsyncadd [#allocation8], %s191
          %195 = dma.hbm_to_smem %s0, 32, [#allocation5], [#allocation8]
        $region16: #{tpu_custom_call.1} parent=11 // pred_fallthru
          _
      $region12: #{tpu_custom_call.1} parent=5 // pred_fallthru
        _
      %p196 = scmp.lt.s32.totalorder %s20, 8
      // Predicated region
      $region17: #{tpu_custom_call.1} parent=5 // pred_check
        %p197 = pneg %p196
      $region18: #{tpu_custom_call.1} parent=5 // pred_check_branch
        %199 = sbr.rel (%p197) target = $region20
      $region19: #{tpu_custom_call.1} parent=5 // pred_region
        // Predicated region
        $region21: #{tpu_custom_call.1} parent=19 // pred_check
          %p200 = pneg %p82
        $region22: #{tpu_custom_call.1} parent=19 // pred_check_branch
          %202 = sbr.rel (%p200) target = $region24
        $region23: #{tpu_custom_call.1} parent=19 // pred_region
          %s203 = sand.u32 %s72, 1
          %s204 = scalar_lea.sflag [#allocation6], %s203
          %s205 = sand.u32 %s72, 1
          %s206 = smul.addr %s205, 8
          %s207 = scalar_lea.vmem [#allocation9], %s206
          %s209 = ssub.s32 128, 128
          %210 = vsyncadd %s204, %s209
          %s211 = smul.addr %s27, 2
          %s212 = sadd.s32 %s28, %s211
          %s213 = smul.addr %s212, 128
          %s214 = scalar_lea.hbm %s1, %s213
          %s216 = sshll.u32 %s207, 4
          %s217 = int_to_ptr.vmem [resolvable:$true] %s216
          %219 = dma.hbm_to_vmem [thread:$0]  %s214, 128, %s217, %s204
        $region24: #{tpu_custom_call.1} parent=19 // pred_fallthru
          _
        // Predicated region
        $region25: #{tpu_custom_call.1} parent=19 // pred_check
          %p220 = pneg %p110
        $region26: #{tpu_custom_call.1} parent=19 // pred_check_branch
          %222 = sbr.rel (%p220) target = $region28
        $region27: #{tpu_custom_call.1} parent=19 // pred_region
          %s223 = sand.u32 %s20, 1
          %s224 = scalar_lea.sflag [#allocation11], %s223
          %s225 = sand.u32 %s100, 1
          %s226 = smul.addr %s225, 8
          %s227 = scalar_lea.vmem [#allocation10], %s226
          %s229 = ssub.s32 128, 128
          %230 = vsyncadd %s224, %s229
          %s231 = smul.addr %s27, 2
          %s232 = sadd.s32 %s29, %s231
          %s233 = smul.addr %s232, 128
          %s234 = scalar_lea.hbm %s2, %s233
          %s236 = sshll.u32 %s227, 4
          %s237 = int_to_ptr.vmem [resolvable:$true] %s236
          %239 = dma.hbm_to_vmem [thread:$0]  %s234, 128, %s237, %s224
        $region28: #{tpu_custom_call.1} parent=19 // pred_fallthru
          _
        // Predicated region
        $region29: #{tpu_custom_call.1} parent=19 // pred_check
          %p240 = pneg %p138
        $region30: #{tpu_custom_call.1} parent=19 // pred_check_branch
          %242 = sbr.rel (%p240) target = $region32
        $region31: #{tpu_custom_call.1} parent=19 // pred_region
          %s243 = sand.u32 %s20, 1
          %s244 = scalar_lea.sflag [#allocation11], %s243
          %s245 = sand.u32 %s128, 1
          %s246 = smul.addr %s245, 8
          %s247 = scalar_lea.vmem [#allocation12], %s246
          %s249 = ssub.s32 128, 128
          %250 = vsyncadd %s244, %s249
          %s251 = smul.addr %s27, 2
          %s252 = sadd.s32 %s29, %s251
          %s253 = smul.addr %s252, 128
          %s254 = scalar_lea.hbm %s3, %s253
          %s256 = sshll.u32 %s247, 4
          %s257 = int_to_ptr.vmem [resolvable:$true] %s256
          %259 = dma.hbm_to_vmem [thread:$0]  %s254, 128, %s257, %s244
        $region32: #{tpu_custom_call.1} parent=19 // pred_fallthru
          _
      $region20: #{tpu_custom_call.1} parent=5 // pred_fallthru
        _
      %p260 = scmp.le.s32.totalorder 1, %s20
      %p261 = scmp.lt.s32.totalorder %s20, 9
      %p262 = pnand %p260, %p261
      %p263 = pneg %p262
      // Predicated region
      $region33: #{tpu_custom_call.1} parent=5 // pred_check
        _
      $region34: #{tpu_custom_call.1} parent=5 // pred_check_branch
        %265 = sbr.rel (%p262) target = $region36
      $region35: #{tpu_custom_call.1} parent=5 // pred_region
        %s266 = ssub.s32 %s20, 1
        // Predicated region
        $region37: #{tpu_custom_call.1} parent=35 // pred_check
          %p267 = pneg %p60
        $region38: #{tpu_custom_call.1} parent=35 // pred_check_branch
          %269 = sbr.rel (%p267) target = $region40
        $region39: #{tpu_custom_call.1} parent=35 // pred_region
          %270 = dma.done [#allocation8], 32
        $region40: #{tpu_custom_call.1} parent=35 // pred_fallthru
          _
        %s271 = sand.u32 %s75, 1
        %s272 = scalar_lea.sflag [#allocation6], %s271
        %s273 = sand.u32 %s75, 1
        %s274 = smul.addr %s273, 8
        %s275 = scalar_lea.vmem [#allocation9], %s274
        // Predicated region
        $region41: #{tpu_custom_call.1} parent=35 // pred_check
          %p276 = pneg %p88
        $region42: #{tpu_custom_call.1} parent=35 // pred_check_branch
          %278 = sbr.rel (%p276) target = $region44
        $region43: #{tpu_custom_call.1} parent=35 // pred_region
          %279 = dma.done %s272, 128
        $region44: #{tpu_custom_call.1} parent=35 // pred_fallthru
          _
        %s280 = sand.u32 %s25, 1
        %s281 = scalar_lea.sflag [#allocation11], %s280
        %s282 = sand.u32 %s103, 1
        %s283 = smul.addr %s282, 8
        %s284 = scalar_lea.vmem [#allocation10], %s283
        // Predicated region
        $region45: #{tpu_custom_call.1} parent=35 // pred_check
          %p285 = pneg %p116
        $region46: #{tpu_custom_call.1} parent=35 // pred_check_branch
          %287 = sbr.rel (%p285) target = $region48
        $region47: #{tpu_custom_call.1} parent=35 // pred_region
          %288 = dma.done %s281, 128
        $region48: #{tpu_custom_call.1} parent=35 // pred_fallthru
          _
        %s289 = sand.u32 %s25, 1
        %s290 = scalar_lea.sflag [#allocation11], %s289
        %s291 = sand.u32 %s131, 1
        %s292 = smul.addr %s291, 8
        %s293 = scalar_lea.vmem [#allocation12], %s292
        // Predicated region
        $region49: #{tpu_custom_call.1} parent=35 // pred_check
          %p294 = pneg %p144
        $region50: #{tpu_custom_call.1} parent=35 // pred_check_branch
          %296 = sbr.rel (%p294) target = $region52
        $region51: #{tpu_custom_call.1} parent=35 // pred_region
          %297 = dma.done %s290, 128
        $region52: #{tpu_custom_call.1} parent=35 // pred_fallthru
          _
        %298 = sfence
        %p299 = pneg %p60
        %p300 = pneg %p57
        %s301 = sand.u32 %s75, 1
        %s302 = scalar_lea.sflag [#allocation6], %s301
        %s303 = sand.u32 %s75, 1
        %s304 = smul.addr %s303, 8
        %s305 = scalar_lea.vmem [#allocation9], %s304
        %p306 = pneg %p88
        %p307 = pneg %p85
        %s308 = sand.u32 %s25, 1
        %s309 = scalar_lea.sflag [#allocation11], %s308
        %s310 = sand.u32 %s103, 1
        %s311 = smul.addr %s310, 8
        %s312 = scalar_lea.vmem [#allocation10], %s311
        %p313 = pneg %p116
        %p314 = pneg %p113
        %s315 = sand.u32 %s25, 1
        %s316 = scalar_lea.sflag [#allocation11], %s315
        %s317 = sand.u32 %s131, 1
        %s318 = smul.addr %s317, 8
        %s319 = scalar_lea.vmem [#allocation12], %s318
        %p320 = pneg %p144
        %p321 = pneg %p141
        %p322 = pneg %p172
        %p323 = pneg %p169
        %s324 = sand.u32 %s159, 1
        %s325 = scalar_lea.sflag [#allocation7], %s324
        %s326 = sand.u32 %s159, 1
        %s327 = smul.addr %s326, 8
        %s328 = scalar_lea.vmem [#allocation13], %s327
        %p329 = scmp.eq.s32.totalorder %s32, 0
        // Predicated region
        $region53: #{tpu_custom_call.1} parent=35 // pred_check
          %p330 = pneg %p329
        $region54: #{tpu_custom_call.1} parent=35 // pred_check_branch
          %332 = sbr.rel (%p330) target = $region56
        $region55: #{tpu_custom_call.1} parent=35 // pred_region
          %vm333 = vcmask 64512
          %334 = vst.msk [vmem:[#allocation2] sm:$0xff] %vm333, -1e+30
          %335 = vst.msk [vmem:[#allocation3] sm:$0xff] %vm333, 0.0
          %336 = vst [vmem:[#allocation4] sm:$0xff] 0.0
        $region56: #{tpu_custom_call.1} parent=35 // pred_fallthru
          _
        %s337 = smul.u32 %s31, 8
        %v338 = vlaneseq
        %v339 = vshrl.u32 %v338, 7
        %v340 = vstv %s337
        %v341 = vadd.s32 %v340, %v339
        %s342 = smul.u32 %s32, 8
        %v343 = vlaneseq
        %v344 = vand.u32 %v343, 127
        %v345 = vstv %s342
        %v346 = vadd.s32 %v345, %v344
        %v347 = vcvt.s32.f32 %v341
        %v348 = vrcp.pop 8.0
        %v349 = vmul.f32 %v347, %v348
        %v350 = vfloor.f32 %v349
        %v351 = vcvt.f32.s32.to.zero.pseudo %v350
        %v352 = vcvt.s32.f32 %v346
        %v353 = vmul.f32 %v352, %v348
        %v354 = vfloor.f32 %v353
        %v355 = vcvt.f32.s32.to.zero.pseudo %v354
        %v356 = vmul.u32 %v351, 8
        %v357 = vsub.s32 %v341, %v356
        %v358 = vmul.u32 %v355, 8
        %v359 = vsub.s32 %v346, %v358
        %vm360 = vcmp.eq.s32.totalorder %v351, %v355
        %v361 = vsel %vm360, 1, 0
        %v362 = vcvt.s32.f32 %v361
        %vm363 = vcmp.gt.s32.totalorder %v359, %v357
        %v364 = vld [vmem:[%s275] sm:$0xff]
        %v365 = vld [vmem:[%s284] sm:$0xff]
        %s366 = sld [smem:[#allocation5]]
        %s367 = sld [smem:[#allocation5 + $0x80]]
        %s368 = ssub.f32 %s367, %s366
        %v369 = vstv %s368
        %v370 = vmul.f32 %v369, %v362
        %v371 = vstv %s366
        %v372 = vadd.f32 %v370, %v371
        %vm373 = vcmask 130048
        %v375 = vsel %vm373, %v364, 0
        %v378 = vsel %vm373, %v365, 0
        %380 = vmatprep.subr.mxu0 0.0
        %381 = vmatpush1.xpose.msra.mxu0 0.0
        %382 = vmatprep.subr.mxu0 0.0
        %383 = vmatpush1.xpose.msra.mxu0 0.0
        %384 = vmatprep.subr.mxu0 0.0
        %385 = vmatpush1.xpose.msra.mxu0 0.0
        %386 = vmatprep.subr.mxu0 0.0
        %387 = vmatpush1.xpose.msra.mxu0 0.0
        %388 = vmatprep.subr.mxu0 0.0
        %389 = vmatpush1.xpose.msra.mxu0 0.0
        %390 = vmatprep.subr.mxu0 0.0
        %391 = vmatpush1.xpose.msra.mxu0 0.0
        %392 = vmatprep.subr.mxu0 0.0
        %393 = vmatpush1.xpose.msra.mxu0 0.0
        %394 = vmatprep.subr.mxu0 0.0
        %395 = vmatpush1.xpose.msra.mxu0 0.0
        %396 = vmatprep.subr.mxu0 0.0
        %397 = vmatpush1.xpose.msra.mxu0 0.0
        %398 = vmatprep.subr.mxu0 0.0
        %399 = vmatpush1.xpose.msra.mxu0 0.0
        %400 = vmatprep.subr.mxu0 0.0
        %401 = vmatpush1.xpose.msra.mxu0 0.0
        %402 = vmatprep.subr.mxu0 0.0
        %403 = vmatpush1.xpose.msra.mxu0 0.0
        %404 = vmatprep.subr.mxu0 0.0
        %405 = vmatpush1.xpose.msra.mxu0 0.0
        %406 = vmatprep.subr.mxu0 0.0
        %407 = vmatpush1.xpose.msra.mxu0 0.0
        %408 = vmatprep.subr.mxu0 0.0
        %409 = vmatpush1.xpose.msra.mxu0 0.0
        %410 = vmatprep.subr.mxu0 0.0
        %411 = vmatpush1.xpose.msra.mxu0 %v378
        %412 = vmatprep.subr.mxu0 0.0
        %413 = vmatpush2.xpose.msra.mxu0 0.0
        %414 = vmatprep.subr.mxu0 0.0
        %415 = vmatpush2.xpose.msra.mxu0 0.0
        %416 = vmatprep.subr.mxu0 0.0
        %417 = vmatpush2.xpose.msra.mxu0 0.0
        %418 = vmatprep.subr.mxu0 0.0
        %419 = vmatpush2.xpose.msra.mxu0 0.0
        %420 = vmatprep.subr.mxu0 0.0
        %421 = vmatpush2.xpose.msra.mxu0 0.0
        %422 = vmatprep.subr.mxu0 0.0
        %423 = vmatpush2.xpose.msra.mxu0 0.0
        %424 = vmatprep.subr.mxu0 0.0
        %425 = vmatpush2.xpose.msra.mxu0 0.0
        %426 = vmatprep.subr.mxu0 0.0
        %427 = vmatpush2.xpose.msra.mxu0 0.0
        %428 = vmatprep.subr.mxu0 0.0
        %429 = vmatpush2.xpose.msra.mxu0 0.0
        %430 = vmatprep.subr.mxu0 0.0
        %431 = vmatpush2.xpose.msra.mxu0 0.0
        %432 = vmatprep.subr.mxu0 0.0
        %433 = vmatpush2.xpose.msra.mxu0 0.0
        %434 = vmatprep.subr.mxu0 0.0
        %435 = vmatpush2.xpose.msra.mxu0 0.0
        %436 = vmatprep.subr.mxu0 0.0
        %437 = vmatpush2.xpose.msra.mxu0 0.0
        %438 = vmatprep.subr.mxu0 0.0
        %439 = vmatpush2.xpose.msra.mxu0 0.0
        %440 = vmatprep.subr.mxu0 0.0
        %441 = vmatpush2.xpose.msra.mxu0 0.0
        %442 = vmatprep.subr.mxu0 0.0
        %443 = vmatpush2.xpose.msra.mxu0 0.0
        %444 = vmatprep.mubr.f32.mxu0 0.0
        %445 = vmatmul.mubr.f32.gmra.mxu0 %v375
        %v446 = vpop.f32.mrf.mxu0
        %v447 = vadd.f32 %v372, %v446
        %v448 = vpop.f32.mrf.mxu0
        %449 = vdwg.mxu0
        %v450 = vsel %vm363, -1e+30, %v447
        %v451 = vld [vmem:[#allocation2] sm:$0xff]
        %vm452 = vcmask 64512
        %v453 = vsel %vm452, %v450, -inf
        %454 = vmax.xlane.f32.xlu0 %v453
        %v455 = vpop.xlane.xlu0 %454
        %v456 = vmax.f32 %v451, %v455
        %v457 = vsub.f32 %v451, %v456
        %v458 = vmul.f32 %v457, 1.442695
        %v459 = vpow.pop %v458
        %461 = vset.pattern.permute.xlu0 0
        %462 = vperm.xlu0 %461, %v456
        %v463 = vpop.permute.xlu0 %462
        %v465 = vsub.f32 %v450, %v463
        %v466 = vmul.f32 %v465, 1.442695
        %v467 = vpow.pop %v466
        %v468 = vld [vmem:[#allocation3] sm:$0xff]
        %v469 = vmul.f32 %v459, %v468
        %v470 = vsel %vm452, %v467, 0.0
        %471 = vadd.xlane.f32.xlu0 %v470
        %v472 = vpop.xlane.xlu0 %471
        %v473 = vadd.f32 %v469, %v472
        %vm474 = vcmask 7168
        %475 = vst.msk [vmem:[#allocation3] sm:$0xff] %vm474, %v473
        %476 = vst.msk [vmem:[#allocation2] sm:$0xff] %vm474, %v456
        %v477 = vld [vmem:[%s293] sm:$0xff]
        %v479 = vsel %vm452, %v467, 0
        %481 = vmatprep.subr.mxu0 0.0
        %482 = vmatpush1.msra.mxu0 0.0
        %483 = vmatprep.subr.mxu0 0.0
        %484 = vmatpush1.msra.mxu0 0.0
        %485 = vmatprep.subr.mxu0 0.0
        %486 = vmatpush1.msra.mxu0 0.0
        %487 = vmatprep.subr.mxu0 0.0
        %488 = vmatpush1.msra.mxu0 0.0
        %489 = vmatprep.subr.mxu0 0.0
        %490 = vmatpush1.msra.mxu0 0.0
        %491 = vmatprep.subr.mxu0 0.0
        %492 = vmatpush1.msra.mxu0 0.0
        %493 = vmatprep.subr.mxu0 0.0
        %494 = vmatpush1.msra.mxu0 0.0
        %495 = vmatprep.subr.mxu0 0.0
        %496 = vmatpush1.msra.mxu0 0.0
        %497 = vmatprep.subr.mxu0 0.0
        %498 = vmatpush1.msra.mxu0 0.0
        %499 = vmatprep.subr.mxu0 0.0
        %500 = vmatpush1.msra.mxu0 0.0
        %501 = vmatprep.subr.mxu0 0.0
        %502 = vmatpush1.msra.mxu0 0.0
        %503 = vmatprep.subr.mxu0 0.0
        %504 = vmatpush1.msra.mxu0 0.0
        %505 = vmatprep.subr.mxu0 0.0
        %506 = vmatpush1.msra.mxu0 0.0
        %507 = vmatprep.subr.mxu0 0.0
        %508 = vmatpush1.msra.mxu0 0.0
        %509 = vmatprep.subr.mxu0 0.0
        %510 = vmatpush1.msra.mxu0 0.0
        %511 = vmatprep.subr.mxu0 0.0
        %512 = vmatpush1.msra.mxu0 %v477
        %513 = vmatprep.subr.mxu0 0.0
        %514 = vmatpush2.msra.mxu0 0.0
        %515 = vmatprep.subr.mxu0 0.0
        %516 = vmatpush2.msra.mxu0 0.0
        %517 = vmatprep.subr.mxu0 0.0
        %518 = vmatpush2.msra.mxu0 0.0
        %519 = vmatprep.subr.mxu0 0.0
        %520 = vmatpush2.msra.mxu0 0.0
        %521 = vmatprep.subr.mxu0 0.0
        %522 = vmatpush2.msra.mxu0 0.0
        %523 = vmatprep.subr.mxu0 0.0
        %524 = vmatpush2.msra.mxu0 0.0
        %525 = vmatprep.subr.mxu0 0.0
        %526 = vmatpush2.msra.mxu0 0.0
        %527 = vmatprep.subr.mxu0 0.0
        %528 = vmatpush2.msra.mxu0 0.0
        %529 = vmatprep.subr.mxu0 0.0
        %530 = vmatpush2.msra.mxu0 0.0
        %531 = vmatprep.subr.mxu0 0.0
        %532 = vmatpush2.msra.mxu0 0.0
        %533 = vmatprep.subr.mxu0 0.0
        %534 = vmatpush2.msra.mxu0 0.0
        %535 = vmatprep.subr.mxu0 0.0
        %536 = vmatpush2.msra.mxu0 0.0
        %537 = vmatprep.subr.mxu0 0.0
        %538 = vmatpush2.msra.mxu0 0.0
        %539 = vmatprep.subr.mxu0 0.0
        %540 = vmatpush2.msra.mxu0 0.0
        %541 = vmatprep.subr.mxu0 0.0
        %542 = vmatpush2.msra.mxu0 0.0
        %543 = vmatprep.subr.mxu0 0.0
        %544 = vmatpush2.msra.mxu0 0.0
        %545 = vmatprep.mubr.f32.mxu0 0.0
        %546 = vmatmul.mubr.f32.gmra.mxu0 %v479
        %v547 = vpop.f32.mrf.mxu0
        %v548 = vadd.f32 0.0, %v547
        %v549 = vpop.f32.mrf.mxu0
        %550 = vdwg.mxu0
        %v551 = vld [vmem:[#allocation4] sm:$0xff]
        %553 = vset.pattern.permute.xlu0 0
        %554 = vperm.xlu0 %553, %v459
        %v555 = vpop.permute.xlu0 %554
        %v557 = vmul.f32 %v555, %v551
        %v558 = vadd.f32 %v557, %v548
        %559 = vst.msk [vmem:[#allocation4] sm:$0xff] %vm373, %v558
        %v560 = vld [vmem:[%s275] sm:$0xff]
        %v561 = vld [vmem:[%s284] sm:$0xff]
        %s562 = sld [smem:[#allocation5 + $0x1]]
        %s563 = sld [smem:[#allocation5 + $0x81]]
        %s564 = ssub.f32 %s563, %s562
        %v565 = vstv %s564
        %v566 = vmul.f32 %v565, %v362
        %v567 = vstv %s562
        %v568 = vadd.f32 %v566, %v567
        %570 = vrot.lane.b32.xlu0 %v560, 112
        %v571 = vpop.permute.xlu0 %570
        %573 = vrot.lane.b32.xlu0 %v561, 112
        %v574 = vpop.permute.xlu0 %573
        %v575 = vsel %vm373, %v571, 0
        %v577 = vsel %vm373, %v574, 0
        %579 = vmatprep.subr.mxu0 0.0
        %580 = vmatpush1.xpose.msra.mxu0 0.0
        %581 = vmatprep.subr.mxu0 0.0
        %582 = vmatpush1.xpose.msra.mxu0 0.0
        %583 = vmatprep.subr.mxu0 0.0
        %584 = vmatpush1.xpose.msra.mxu0 0.0
        %585 = vmatprep.subr.mxu0 0.0
        %586 = vmatpush1.xpose.msra.mxu0 0.0
        %587 = vmatprep.subr.mxu0 0.0
        %588 = vmatpush1.xpose.msra.mxu0 0.0
        %589 = vmatprep.subr.mxu0 0.0
        %590 = vmatpush1.xpose.msra.mxu0 0.0
        %591 = vmatprep.subr.mxu0 0.0
        %592 = vmatpush1.xpose.msra.mxu0 0.0
        %593 = vmatprep.subr.mxu0 0.0
        %594 = vmatpush1.xpose.msra.mxu0 0.0
        %595 = vmatprep.subr.mxu0 0.0
        %596 = vmatpush1.xpose.msra.mxu0 0.0
        %597 = vmatprep.subr.mxu0 0.0
        %598 = vmatpush1.xpose.msra.mxu0 0.0
        %599 = vmatprep.subr.mxu0 0.0
        %600 = vmatpush1.xpose.msra.mxu0 0.0
        %601 = vmatprep.subr.mxu0 0.0
        %602 = vmatpush1.xpose.msra.mxu0 0.0
        %603 = vmatprep.subr.mxu0 0.0
        %604 = vmatpush1.xpose.msra.mxu0 0.0
        %605 = vmatprep.subr.mxu0 0.0
        %606 = vmatpush1.xpose.msra.mxu0 0.0
        %607 = vmatprep.subr.mxu0 0.0
        %608 = vmatpush1.xpose.msra.mxu0 0.0
        %609 = vmatprep.subr.mxu0 0.0
        %610 = vmatpush1.xpose.msra.mxu0 %v577
        %611 = vmatprep.subr.mxu0 0.0
        %612 = vmatpush2.xpose.msra.mxu0 0.0
        %613 = vmatprep.subr.mxu0 0.0
        %614 = vmatpush2.xpose.msra.mxu0 0.0
        %615 = vmatprep.subr.mxu0 0.0
        %616 = vmatpush2.xpose.msra.mxu0 0.0
        %617 = vmatprep.subr.mxu0 0.0
        %618 = vmatpush2.xpose.msra.mxu0 0.0
        %619 = vmatprep.subr.mxu0 0.0
        %620 = vmatpush2.xpose.msra.mxu0 0.0
        %621 = vmatprep.subr.mxu0 0.0
        %622 = vmatpush2.xpose.msra.mxu0 0.0
        %623 = vmatprep.subr.mxu0 0.0
        %624 = vmatpush2.xpose.msra.mxu0 0.0
        %625 = vmatprep.subr.mxu0 0.0
        %626 = vmatpush2.xpose.msra.mxu0 0.0
        %627 = vmatprep.subr.mxu0 0.0
        %628 = vmatpush2.xpose.msra.mxu0 0.0
        %629 = vmatprep.subr.mxu0 0.0
        %630 = vmatpush2.xpose.msra.mxu0 0.0
        %631 = vmatprep.subr.mxu0 0.0
        %632 = vmatpush2.xpose.msra.mxu0 0.0
        %633 = vmatprep.subr.mxu0 0.0
        %634 = vmatpush2.xpose.msra.mxu0 0.0
        %635 = vmatprep.subr.mxu0 0.0
        %636 = vmatpush2.xpose.msra.mxu0 0.0
        %637 = vmatprep.subr.mxu0 0.0
        %638 = vmatpush2.xpose.msra.mxu0 0.0
        %639 = vmatprep.subr.mxu0 0.0
        %640 = vmatpush2.xpose.msra.mxu0 0.0
        %641 = vmatprep.subr.mxu0 0.0
        %642 = vmatpush2.xpose.msra.mxu0 0.0
        %643 = vmatprep.mubr.f32.mxu0 0.0
        %644 = vmatmul.mubr.f32.gmra.mxu0 %v575
        %v645 = vpop.f32.mrf.mxu0
        %v646 = vadd.f32 %v568, %v645
        %v647 = vpop.f32.mrf.mxu0
        %648 = vdwg.mxu0
        %v649 = vsel %vm363, -1e+30, %v646
        %v650 = vld [vmem:[#allocation2] sm:$0xff]
        %v651 = vsel %vm452, %v649, -inf
        %652 = vmax.xlane.f32.xlu0 %v651
        %v653 = vpop.xlane.xlu0 %652
        %v654 = vmax.f32 %v650, %v653
        %v655 = vsub.f32 %v650, %v654
        %v656 = vmul.f32 %v655, 1.442695
        %v657 = vpow.pop %v656
        %659 = vset.pattern.permute.xlu0 1
        %660 = vperm.xlu0 %659, %v654
        %v661 = vpop.permute.xlu0 %660
        %v663 = vsub.f32 %v649, %v661
        %v664 = vmul.f32 %v663, 1.442695
        %v665 = vpow.pop %v664
        %v666 = vld [vmem:[#allocation3] sm:$0xff]
        %v667 = vmul.f32 %v657, %v666
        %v668 = vsel %vm452, %v665, 0.0
        %669 = vadd.xlane.f32.xlu0 %v668
        %v670 = vpop.xlane.xlu0 %669
        %v671 = vadd.f32 %v667, %v670
        %vm672 = vcmask 15368
        %673 = vst.msk [vmem:[#allocation3] sm:$0xff] %vm672, %v671
        %674 = vst.msk [vmem:[#allocation2] sm:$0xff] %vm672, %v654
        %v675 = vld [vmem:[%s293] sm:$0xff]
        %677 = vrot.lane.b32.xlu0 %v675, 112
        %v678 = vpop.permute.xlu0 %677
        %v681 = vsel %vm452, %v665, 0
        %683 = vmatprep.subr.mxu0 0.0
        %684 = vmatpush1.msra.mxu0 0.0
        %685 = vmatprep.subr.mxu0 0.0
        %686 = vmatpush1.msra.mxu0 0.0
        %687 = vmatprep.subr.mxu0 0.0
        %688 = vmatpush1.msra.mxu0 0.0
        %689 = vmatprep.subr.mxu0 0.0
        %690 = vmatpush1.msra.mxu0 0.0
        %691 = vmatprep.subr.mxu0 0.0
        %692 = vmatpush1.msra.mxu0 0.0
        %693 = vmatprep.subr.mxu0 0.0
        %694 = vmatpush1.msra.mxu0 0.0
        %695 = vmatprep.subr.mxu0 0.0
        %696 = vmatpush1.msra.mxu0 0.0
        %697 = vmatprep.subr.mxu0 0.0
        %698 = vmatpush1.msra.mxu0 0.0
        %699 = vmatprep.subr.mxu0 0.0
        %700 = vmatpush1.msra.mxu0 0.0
        %701 = vmatprep.subr.mxu0 0.0
        %702 = vmatpush1.msra.mxu0 0.0
        %703 = vmatprep.subr.mxu0 0.0
        %704 = vmatpush1.msra.mxu0 0.0
        %705 = vmatprep.subr.mxu0 0.0
        %706 = vmatpush1.msra.mxu0 0.0
        %707 = vmatprep.subr.mxu0 0.0
        %708 = vmatpush1.msra.mxu0 0.0
        %709 = vmatprep.subr.mxu0 0.0
        %710 = vmatpush1.msra.mxu0 0.0
        %711 = vmatprep.subr.mxu0 0.0
        %712 = vmatpush1.msra.mxu0 0.0
        %713 = vmatprep.subr.mxu0 0.0
        %714 = vmatpush1.msra.mxu0 %v678
        %715 = vmatprep.subr.mxu0 0.0
        %716 = vmatpush2.msra.mxu0 0.0
        %717 = vmatprep.subr.mxu0 0.0
        %718 = vmatpush2.msra.mxu0 0.0
        %719 = vmatprep.subr.mxu0 0.0
        %720 = vmatpush2.msra.mxu0 0.0
        %721 = vmatprep.subr.mxu0 0.0
        %722 = vmatpush2.msra.mxu0 0.0
        %723 = vmatprep.subr.mxu0 0.0
        %724 = vmatpush2.msra.mxu0 0.0
        %725 = vmatprep.subr.mxu0 0.0
        %726 = vmatpush2.msra.mxu0 0.0
        %727 = vmatprep.subr.mxu0 0.0
        %728 = vmatpush2.msra.mxu0 0.0
        %729 = vmatprep.subr.mxu0 0.0
        %730 = vmatpush2.msra.mxu0 0.0
        %731 = vmatprep.subr.mxu0 0.0
        %732 = vmatpush2.msra.mxu0 0.0
        %733 = vmatprep.subr.mxu0 0.0
        %734 = vmatpush2.msra.mxu0 0.0
        %735 = vmatprep.subr.mxu0 0.0
        %736 = vmatpush2.msra.mxu0 0.0
        %737 = vmatprep.subr.mxu0 0.0
        %738 = vmatpush2.msra.mxu0 0.0
        %739 = vmatprep.subr.mxu0 0.0
        %740 = vmatpush2.msra.mxu0 0.0
        %741 = vmatprep.subr.mxu0 0.0
        %742 = vmatpush2.msra.mxu0 0.0
        %743 = vmatprep.subr.mxu0 0.0
        %744 = vmatpush2.msra.mxu0 0.0
        %745 = vmatprep.subr.mxu0 0.0
        %746 = vmatpush2.msra.mxu0 0.0
        %747 = vmatprep.mubr.f32.mxu0 0.0
        %748 = vmatmul.mubr.f32.gmra.mxu0 %v681
        %v749 = vpop.f32.mrf.mxu0
        %v750 = vadd.f32 0.0, %v749
        %v751 = vpop.f32.mrf.mxu0
        %752 = vdwg.mxu0
        %v753 = vld [vmem:[#allocation4] sm:$0xff]
        %755 = vset.pattern.permute.xlu0 1
        %756 = vperm.xlu0 %755, %v657
        %v757 = vpop.permute.xlu0 %756
        %v759 = vmul.f32 %v757, %v753
        %761 = vrot.lane.b32.xlu0 %v750, 16
        %v762 = vpop.permute.xlu0 %761
        %v764 = vadd.f32 %v759, %v762
        %vm765 = vcmask 261248
        %766 = vst.msk [vmem:[#allocation4] sm:$0xff] %vm765, %v764
        %v767 = vld [vmem:[%s275] sm:$0xff]
        %v768 = vld [vmem:[%s284] sm:$0xff]
        %s769 = sld [smem:[#allocation5 + $0x2]]
        %s770 = sld [smem:[#allocation5 + $0x82]]
        %s771 = ssub.f32 %s770, %s769
        %v772 = vstv %s771
        %v773 = vmul.f32 %v772, %v362
        %v774 = vstv %s769
        %v775 = vadd.f32 %v773, %v774
        %777 = vrot.lane.b32.xlu0 %v767, 96
        %v778 = vpop.permute.xlu0 %777
        %780 = vrot.lane.b32.xlu0 %v768, 96
        %v781 = vpop.permute.xlu0 %780
        %v782 = vsel %vm373, %v778, 0
        %v784 = vsel %vm373, %v781, 0
        %786 = vmatprep.subr.mxu0 0.0
        %787 = vmatpush1.xpose.msra.mxu0 0.0
        %788 = vmatprep.subr.mxu0 0.0
        %789 = vmatpush1.xpose.msra.mxu0 0.0
        %790 = vmatprep.subr.mxu0 0.0
        %791 = vmatpush1.xpose.msra.mxu0 0.0
        %792 = vmatprep.subr.mxu0 0.0
        %793 = vmatpush1.xpose.msra.mxu0 0.0
        %794 = vmatprep.subr.mxu0 0.0
        %795 = vmatpush1.xpose.msra.mxu0 0.0
        %796 = vmatprep.subr.mxu0 0.0
        %797 = vmatpush1.xpose.msra.mxu0 0.0
        %798 = vmatprep.subr.mxu0 0.0
        %799 = vmatpush1.xpose.msra.mxu0 0.0
        %800 = vmatprep.subr.mxu0 0.0
        %801 = vmatpush1.xpose.msra.mxu0 0.0
        %802 = vmatprep.subr.mxu0 0.0
        %803 = vmatpush1.xpose.msra.mxu0 0.0
        %804 = vmatprep.subr.mxu0 0.0
        %805 = vmatpush1.xpose.msra.mxu0 0.0
        %806 = vmatprep.subr.mxu0 0.0
        %807 = vmatpush1.xpose.msra.mxu0 0.0
        %808 = vmatprep.subr.mxu0 0.0
        %809 = vmatpush1.xpose.msra.mxu0 0.0
        %810 = vmatprep.subr.mxu0 0.0
        %811 = vmatpush1.xpose.msra.mxu0 0.0
        %812 = vmatprep.subr.mxu0 0.0
        %813 = vmatpush1.xpose.msra.mxu0 0.0
        %814 = vmatprep.subr.mxu0 0.0
        %815 = vmatpush1.xpose.msra.mxu0 0.0
        %816 = vmatprep.subr.mxu0 0.0
        %817 = vmatpush1.xpose.msra.mxu0 %v784
        %818 = vmatprep.subr.mxu0 0.0
        %819 = vmatpush2.xpose.msra.mxu0 0.0
        %820 = vmatprep.subr.mxu0 0.0
        %821 = vmatpush2.xpose.msra.mxu0 0.0
        %822 = vmatprep.subr.mxu0 0.0
        %823 = vmatpush2.xpose.msra.mxu0 0.0
        %824 = vmatprep.subr.mxu0 0.0
        %825 = vmatpush2.xpose.msra.mxu0 0.0
        %826 = vmatprep.subr.mxu0 0.0
        %827 = vmatpush2.xpose.msra.mxu0 0.0
        %828 = vmatprep.subr.mxu0 0.0
        %829 = vmatpush2.xpose.msra.mxu0 0.0
        %830 = vmatprep.subr.mxu0 0.0
        %831 = vmatpush2.xpose.msra.mxu0 0.0
        %832 = vmatprep.subr.mxu0 0.0
        %833 = vmatpush2.xpose.msra.mxu0 0.0
        %834 = vmatprep.subr.mxu0 0.0
        %835 = vmatpush2.xpose.msra.mxu0 0.0
        %836 = vmatprep.subr.mxu0 0.0
        %837 = vmatpush2.xpose.msra.mxu0 0.0
        %838 = vmatprep.subr.mxu0 0.0
        %839 = vmatpush2.xpose.msra.mxu0 0.0
        %840 = vmatprep.subr.mxu0 0.0
        %841 = vmatpush2.xpose.msra.mxu0 0.0
        %842 = vmatprep.subr.mxu0 0.0
        %843 = vmatpush2.xpose.msra.mxu0 0.0
        %844 = vmatprep.subr.mxu0 0.0
        %845 = vmatpush2.xpose.msra.mxu0 0.0
        %846 = vmatprep.subr.mxu0 0.0
        %847 = vmatpush2.xpose.msra.mxu0 0.0
        %848 = vmatprep.subr.mxu0 0.0
        %849 = vmatpush2.xpose.msra.mxu0 0.0
        %850 = vmatprep.mubr.f32.mxu0 0.0
        %851 = vmatmul.mubr.f32.gmra.mxu0 %v782
        %v852 = vpop.f32.mrf.mxu0
        %v853 = vadd.f32 %v775, %v852
        %v854 = vpop.f32.mrf.mxu0
        %855 = vdwg.mxu0
        %v856 = vsel %vm363, -1e+30, %v853
        %v857 = vld [vmem:[#allocation2] sm:$0xff]
        %v858 = vsel %vm452, %v856, -inf
        %859 = vmax.xlane.f32.xlu0 %v858
        %v860 = vpop.xlane.xlu0 %859
        %v861 = vmax.f32 %v857, %v860
        %v862 = vsub.f32 %v857, %v861
        %v863 = vmul.f32 %v862, 1.442695
        %v864 = vpow.pop %v863
        %866 = vset.pattern.permute.xlu0 2
        %867 = vperm.xlu0 %866, %v861
        %v868 = vpop.permute.xlu0 %867
        %v870 = vsub.f32 %v856, %v868
        %v871 = vmul.f32 %v870, 1.442695
        %v872 = vpow.pop %v871
        %v873 = vld [vmem:[#allocation3] sm:$0xff]
        %v874 = vmul.f32 %v864, %v873
        %v875 = vsel %vm452, %v872, 0.0
        %876 = vadd.xlane.f32.xlu0 %v875
        %v877 = vpop.xlane.xlu0 %876
        %v878 = vadd.f32 %v874, %v877
        %vm879 = vcmask 23568
        %880 = vst.msk [vmem:[#allocation3] sm:$0xff] %vm879, %v878
        %881 = vst.msk [vmem:[#allocation2] sm:$0xff] %vm879, %v861
        %v882 = vld [vmem:[%s293] sm:$0xff]
        %884 = vrot.lane.b32.xlu0 %v882, 96
        %v885 = vpop.permute.xlu0 %884
        %v888 = vsel %vm452, %v872, 0
        %890 = vmatprep.subr.mxu0 0.0
        %891 = vmatpush1.msra.mxu0 0.0
        %892 = vmatprep.subr.mxu0 0.0
        %893 = vmatpush1.msra.mxu0 0.0
        %894 = vmatprep.subr.mxu0 0.0
        %895 = vmatpush1.msra.mxu0 0.0
        %896 = vmatprep.subr.mxu0 0.0
        %897 = vmatpush1.msra.mxu0 0.0
        %898 = vmatprep.subr.mxu0 0.0
        %899 = vmatpush1.msra.mxu0 0.0
        %900 = vmatprep.subr.mxu0 0.0
        %901 = vmatpush1.msra.mxu0 0.0
        %902 = vmatprep.subr.mxu0 0.0
        %903 = vmatpush1.msra.mxu0 0.0
        %904 = vmatprep.subr.mxu0 0.0
        %905 = vmatpush1.msra.mxu0 0.0
        %906 = vmatprep.subr.mxu0 0.0
        %907 = vmatpush1.msra.mxu0 0.0
        %908 = vmatprep.subr.mxu0 0.0
        %909 = vmatpush1.msra.mxu0 0.0
        %910 = vmatprep.subr.mxu0 0.0
        %911 = vmatpush1.msra.mxu0 0.0
        %912 = vmatprep.subr.mxu0 0.0
        %913 = vmatpush1.msra.mxu0 0.0
        %914 = vmatprep.subr.mxu0 0.0
        %915 = vmatpush1.msra.mxu0 0.0
        %916 = vmatprep.subr.mxu0 0.0
        %917 = vmatpush1.msra.mxu0 0.0
        %918 = vmatprep.subr.mxu0 0.0
        %919 = vmatpush1.msra.mxu0 0.0
        %920 = vmatprep.subr.mxu0 0.0
        %921 = vmatpush1.msra.mxu0 %v885
        %922 = vmatprep.subr.mxu0 0.0
        %923 = vmatpush2.msra.mxu0 0.0
        %924 = vmatprep.subr.mxu0 0.0
        %925 = vmatpush2.msra.mxu0 0.0
        %926 = vmatprep.subr.mxu0 0.0
        %927 = vmatpush2.msra.mxu0 0.0
        %928 = vmatprep.subr.mxu0 0.0
        %929 = vmatpush2.msra.mxu0 0.0
        %930 = vmatprep.subr.mxu0 0.0
        %931 = vmatpush2.msra.mxu0 0.0
        %932 = vmatprep.subr.mxu0 0.0
        %933 = vmatpush2.msra.mxu0 0.0
        %934 = vmatprep.subr.mxu0 0.0
        %935 = vmatpush2.msra.mxu0 0.0
        %936 = vmatprep.subr.mxu0 0.0
        %937 = vmatpush2.msra.mxu0 0.0
        %938 = vmatprep.subr.mxu0 0.0
        %939 = vmatpush2.msra.mxu0 0.0
        %940 = vmatprep.subr.mxu0 0.0
        %941 = vmatpush2.msra.mxu0 0.0
        %942 = vmatprep.subr.mxu0 0.0
        %943 = vmatpush2.msra.mxu0 0.0
        %944 = vmatprep.subr.mxu0 0.0
        %945 = vmatpush2.msra.mxu0 0.0
        %946 = vmatprep.subr.mxu0 0.0
        %947 = vmatpush2.msra.mxu0 0.0
        %948 = vmatprep.subr.mxu0 0.0
        %949 = vmatpush2.msra.mxu0 0.0
        %950 = vmatprep.subr.mxu0 0.0
        %951 = vmatpush2.msra.mxu0 0.0
        %952 = vmatprep.subr.mxu0 0.0
        %953 = vmatpush2.msra.mxu0 0.0
        %954 = vmatprep.mubr.f32.mxu0 0.0
        %955 = vmatmul.mubr.f32.gmra.mxu0 %v888
        %v956 = vpop.f32.mrf.mxu0
        %v957 = vadd.f32 0.0, %v956
        %v958 = vpop.f32.mrf.mxu0
        %959 = vdwg.mxu0
        %v960 = vld [vmem:[#allocation4] sm:$0xff]
        %962 = vset.pattern.permute.xlu0 2
        %963 = vperm.xlu0 %962, %v864
        %v964 = vpop.permute.xlu0 %963
        %v966 = vmul.f32 %v964, %v960
        %968 = vrot.lane.b32.xlu0 %v957, 32
        %v969 = vpop.permute.xlu0 %968
        %v971 = vadd.f32 %v966, %v969
        %vm972 = vcmask 392448
        %973 = vst.msk [vmem:[#allocation4] sm:$0xff] %vm972, %v971
        %v974 = vld [vmem:[%s275] sm:$0xff]
        %v975 = vld [vmem:[%s284] sm:$0xff]
        %s976 = sld [smem:[#allocation5 + $0x3]]
        %s977 = sld [smem:[#allocation5 + $0x83]]
        %s978 = ssub.f32 %s977, %s976
        %v979 = vstv %s978
        %v980 = vmul.f32 %v979, %v362
        %v981 = vstv %s976
        %v982 = vadd.f32 %v980, %v981
        %984 = vrot.lane.b32.xlu0 %v974, 80
        %v985 = vpop.permute.xlu0 %984
        %987 = vrot.lane.b32.xlu0 %v975, 80
        %v988 = vpop.permute.xlu0 %987
        %v989 = vsel %vm373, %v985, 0
        %v991 = vsel %vm373, %v988, 0
        %993 = vmatprep.subr.mxu0 0.0
        %994 = vmatpush1.xpose.msra.mxu0 0.0
        %995 = vmatprep.subr.mxu0 0.0
        %996 = vmatpush1.xpose.msra.mxu0 0.0
        %997 = vmatprep.subr.mxu0 0.0
        %998 = vmatpush1.xpose.msra.mxu0 0.0
        %999 = vmatprep.subr.mxu0 0.0
        %1000 = vmatpush1.xpose.msra.mxu0 0.0
        %1001 = vmatprep.subr.mxu0 0.0
        %1002 = vmatpush1.xpose.msra.mxu0 0.0
        %1003 = vmatprep.subr.mxu0 0.0
        %1004 = vmatpush1.xpose.msra.mxu0 0.0
        %1005 = vmatprep.subr.mxu0 0.0
        %1006 = vmatpush1.xpose.msra.mxu0 0.0
        %1007 = vmatprep.subr.mxu0 0.0
        %1008 = vmatpush1.xpose.msra.mxu0 0.0
        %1009 = vmatprep.subr.mxu0 0.0
        %1010 = vmatpush1.xpose.msra.mxu0 0.0
        %1011 = vmatprep.subr.mxu0 0.0
        %1012 = vmatpush1.xpose.msra.mxu0 0.0
        %1013 = vmatprep.subr.mxu0 0.0
        %1014 = vmatpush1.xpose.msra.mxu0 0.0
        %1015 = vmatprep.subr.mxu0 0.0
        %1016 = vmatpush1.xpose.msra.mxu0 0.0
        %1017 = vmatprep.subr.mxu0 0.0
        %1018 = vmatpush1.xpose.msra.mxu0 0.0
        %1019 = vmatprep.subr.mxu0 0.0
        %1020 = vmatpush1.xpose.msra.mxu0 0.0
        %1021 = vmatprep.subr.mxu0 0.0
        %1022 = vmatpush1.xpose.msra.mxu0 0.0
        %1023 = vmatprep.subr.mxu0 0.0
        %1024 = vmatpush1.xpose.msra.mxu0 %v991
        %1025 = vmatprep.subr.mxu0 0.0
        %1026 = vmatpush2.xpose.msra.mxu0 0.0
        %1027 = vmatprep.subr.mxu0 0.0
        %1028 = vmatpush2.xpose.msra.mxu0 0.0
        %1029 = vmatprep.subr.mxu0 0.0
        %1030 = vmatpush2.xpose.msra.mxu0 0.0
        %1031 = vmatprep.subr.mxu0 0.0
        %1032 = vmatpush2.xpose.msra.mxu0 0.0
        %1033 = vmatprep.subr.mxu0 0.0
        %1034 = vmatpush2.xpose.msra.mxu0 0.0
        %1035 = vmatprep.subr.mxu0 0.0
        %1036 = vmatpush2.xpose.msra.mxu0 0.0
        %1037 = vmatprep.subr.mxu0 0.0
        %1038 = vmatpush2.xpose.msra.mxu0 0.0
        %1039 = vmatprep.subr.mxu0 0.0
        %1040 = vmatpush2.xpose.msra.mxu0 0.0
        %1041 = vmatprep.subr.mxu0 0.0
        %1042 = vmatpush2.xpose.msra.mxu0 0.0
        %1043 = vmatprep.subr.mxu0 0.0
        %1044 = vmatpush2.xpose.msra.mxu0 0.0
        %1045 = vmatprep.subr.mxu0 0.0
        %1046 = vmatpush2.xpose.msra.mxu0 0.0
        %1047 = vmatprep.subr.mxu0 0.0
        %1048 = vmatpush2.xpose.msra.mxu0 0.0
        %1049 = vmatprep.subr.mxu0 0.0
        %1050 = vmatpush2.xpose.msra.mxu0 0.0
        %1051 = vmatprep.subr.mxu0 0.0
        %1052 = vmatpush2.xpose.msra.mxu0 0.0
        %1053 = vmatprep.subr.mxu0 0.0
        %1054 = vmatpush2.xpose.msra.mxu0 0.0
        %1055 = vmatprep.subr.mxu0 0.0
        %1056 = vmatpush2.xpose.msra.mxu0 0.0
        %1057 = vmatprep.mubr.f32.mxu0 0.0
        %1058 = vmatmul.mubr.f32.gmra.mxu0 %v989
        %v1059 = vpop.f32.mrf.mxu0
        %v1060 = vadd.f32 %v982, %v1059
        %v1061 = vpop.f32.mrf.mxu0
        %1062 = vdwg.mxu0
        %v1063 = vsel %vm363, -1e+30, %v1060
        %v1064 = vld [vmem:[#allocation2] sm:$0xff]
        %v1065 = vsel %vm452, %v1063, -inf
        %1066 = vmax.xlane.f32.xlu0 %v1065
        %v1067 = vpop.xlane.xlu0 %1066
        %v1068 = vmax.f32 %v1064, %v1067
        %v1069 = vsub.f32 %v1064, %v1068
        %v1070 = vmul.f32 %v1069, 1.442695
        %v1071 = vpow.pop %v1070
        %1073 = vset.pattern.permute.xlu0 3
        %1074 = vperm.xlu0 %1073, %v1068
        %v1075 = vpop.permute.xlu0 %1074
        %v1077 = vsub.f32 %v1063, %v1075
        %v1078 = vmul.f32 %v1077, 1.442695
        %v1079 = vpow.pop %v1078
        %v1080 = vld [vmem:[#allocation3] sm:$0xff]
        %v1081 = vmul.f32 %v1071, %v1080
        %v1082 = vsel %vm452, %v1079, 0.0
        %1083 = vadd.xlane.f32.xlu0 %v1082
        %v1084 = vpop.xlane.xlu0 %1083
        %v1085 = vadd.f32 %v1081, %v1084
        %vm1086 = vcmask 31768
        %1087 = vst.msk [vmem:[#allocation3] sm:$0xff] %vm1086, %v1085
        %1088 = vst.msk [vmem:[#allocation2] sm:$0xff] %vm1086, %v1068
        %v1089 = vld [vmem:[%s293] sm:$0xff]
        %1091 = vrot.lane.b32.xlu0 %v1089, 80
        %v1092 = vpop.permute.xlu0 %1091
        %v1095 = vsel %vm452, %v1079, 0
        %1097 = vmatprep.subr.mxu0 0.0
        %1098 = vmatpush1.msra.mxu0 0.0
        %1099 = vmatprep.subr.mxu0 0.0
        %1100 = vmatpush1.msra.mxu0 0.0
        %1101 = vmatprep.subr.mxu0 0.0
        %1102 = vmatpush1.msra.mxu0 0.0
        %1103 = vmatprep.subr.mxu0 0.0
        %1104 = vmatpush1.msra.mxu0 0.0
        %1105 = vmatprep.subr.mxu0 0.0
        %1106 = vmatpush1.msra.mxu0 0.0
        %1107 = vmatprep.subr.mxu0 0.0
        %1108 = vmatpush1.msra.mxu0 0.0
        %1109 = vmatprep.subr.mxu0 0.0
        %1110 = vmatpush1.msra.mxu0 0.0
        %1111 = vmatprep.subr.mxu0 0.0
        %1112 = vmatpush1.msra.mxu0 0.0
        %1113 = vmatprep.subr.mxu0 0.0
        %1114 = vmatpush1.msra.mxu0 0.0
        %1115 = vmatprep.subr.mxu0 0.0
        %1116 = vmatpush1.msra.mxu0 0.0
        %1117 = vmatprep.subr.mxu0 0.0
        %1118 = vmatpush1.msra.mxu0 0.0
        %1119 = vmatprep.subr.mxu0 0.0
        %1120 = vmatpush1.msra.mxu0 0.0
        %1121 = vmatprep.subr.mxu0 0.0
        %1122 = vmatpush1.msra.mxu0 0.0
        %1123 = vmatprep.subr.mxu0 0.0
        %1124 = vmatpush1.msra.mxu0 0.0
        %1125 = vmatprep.subr.mxu0 0.0
        %1126 = vmatpush1.msra.mxu0 0.0
        %1127 = vmatprep.subr.mxu0 0.0
        %1128 = vmatpush1.msra.mxu0 %v1092
        %1129 = vmatprep.subr.mxu0 0.0
        %1130 = vmatpush2.msra.mxu0 0.0
        %1131 = vmatprep.subr.mxu0 0.0
        %1132 = vmatpush2.msra.mxu0 0.0
        %1133 = vmatprep.subr.mxu0 0.0
        %1134 = vmatpush2.msra.mxu0 0.0
        %1135 = vmatprep.subr.mxu0 0.0
        %1136 = vmatpush2.msra.mxu0 0.0
        %1137 = vmatprep.subr.mxu0 0.0
        %1138 = vmatpush2.msra.mxu0 0.0
        %1139 = vmatprep.subr.mxu0 0.0
        %1140 = vmatpush2.msra.mxu0 0.0
        %1141 = vmatprep.subr.mxu0 0.0
        %1142 = vmatpush2.msra.mxu0 0.0
        %1143 = vmatprep.subr.mxu0 0.0
        %1144 = vmatpush2.msra.mxu0 0.0
        %1145 = vmatprep.subr.mxu0 0.0
        %1146 = vmatpush2.msra.mxu0 0.0
        %1147 = vmatprep.subr.mxu0 0.0
        %1148 = vmatpush2.msra.mxu0 0.0
        %1149 = vmatprep.subr.mxu0 0.0
        %1150 = vmatpush2.msra.mxu0 0.0
        %1151 = vmatprep.subr.mxu0 0.0
        %1152 = vmatpush2.msra.mxu0 0.0
        %1153 = vmatprep.subr.mxu0 0.0
        %1154 = vmatpush2.msra.mxu0 0.0
        %1155 = vmatprep.subr.mxu0 0.0
        %1156 = vmatpush2.msra.mxu0 0.0
        %1157 = vmatprep.subr.mxu0 0.0
        %1158 = vmatpush2.msra.mxu0 0.0
        %1159 = vmatprep.subr.mxu0 0.0
        %1160 = vmatpush2.msra.mxu0 0.0
        %1161 = vmatprep.mubr.f32.mxu0 0.0
        %1162 = vmatmul.mubr.f32.gmra.mxu0 %v1095
        %v1163 = vpop.f32.mrf.mxu0
        %v1164 = vadd.f32 0.0, %v1163
        %v1165 = vpop.f32.mrf.mxu0
        %1166 = vdwg.mxu0
        %v1167 = vld [vmem:[#allocation4] sm:$0xff]
        %1169 = vset.pattern.permute.xlu0 3
        %1170 = vperm.xlu0 %1169, %v1071
        %v1171 = vpop.permute.xlu0 %1170
        %v1173 = vmul.f32 %v1171, %v1167
        %1175 = vrot.lane.b32.xlu0 %v1164, 48
        %v1176 = vpop.permute.xlu0 %1175
        %v1178 = vadd.f32 %v1173, %v1176
        %vm1179 = vcmask 523648
        %1180 = vst.msk [vmem:[#allocation4] sm:$0xff] %vm1179, %v1178
        %v1181 = vld [vmem:[%s275] sm:$0xff]
        %v1182 = vld [vmem:[%s284] sm:$0xff]
        %s1183 = sld [smem:[#allocation5 + $0x4]]
        %s1184 = sld [smem:[#allocation5 + $0x84]]
        %s1185 = ssub.f32 %s1184, %s1183
        %v1186 = vstv %s1185
        %v1187 = vmul.f32 %v1186, %v362
        %v1188 = vstv %s1183
        %v1189 = vadd.f32 %v1187, %v1188
        %1191 = vrot.lane.b32.xlu0 %v1181, 64
        %v1192 = vpop.permute.xlu0 %1191
        %1194 = vrot.lane.b32.xlu0 %v1182, 64
        %v1195 = vpop.permute.xlu0 %1194
        %v1196 = vsel %vm373, %v1192, 0
        %v1198 = vsel %vm373, %v1195, 0
        %1200 = vmatprep.subr.mxu0 0.0
        %1201 = vmatpush1.xpose.msra.mxu0 0.0
        %1202 = vmatprep.subr.mxu0 0.0
        %1203 = vmatpush1.xpose.msra.mxu0 0.0
        %1204 = vmatprep.subr.mxu0 0.0
        %1205 = vmatpush1.xpose.msra.mxu0 0.0
        %1206 = vmatprep.subr.mxu0 0.0
        %1207 = vmatpush1.xpose.msra.mxu0 0.0
        %1208 = vmatprep.subr.mxu0 0.0
        %1209 = vmatpush1.xpose.msra.mxu0 0.0
        %1210 = vmatprep.subr.mxu0 0.0
        %1211 = vmatpush1.xpose.msra.mxu0 0.0
        %1212 = vmatprep.subr.mxu0 0.0
        %1213 = vmatpush1.xpose.msra.mxu0 0.0
        %1214 = vmatprep.subr.mxu0 0.0
        %1215 = vmatpush1.xpose.msra.mxu0 0.0
        %1216 = vmatprep.subr.mxu0 0.0
        %1217 = vmatpush1.xpose.msra.mxu0 0.0
        %1218 = vmatprep.subr.mxu0 0.0
        %1219 = vmatpush1.xpose.msra.mxu0 0.0
        %1220 = vmatprep.subr.mxu0 0.0
        %1221 = vmatpush1.xpose.msra.mxu0 0.0
        %1222 = vmatprep.subr.mxu0 0.0
        %1223 = vmatpush1.xpose.msra.mxu0 0.0
        %1224 = vmatprep.subr.mxu0 0.0
        %1225 = vmatpush1.xpose.msra.mxu0 0.0
        %1226 = vmatprep.subr.mxu0 0.0
        %1227 = vmatpush1.xpose.msra.mxu0 0.0
        %1228 = vmatprep.subr.mxu0 0.0
        %1229 = vmatpush1.xpose.msra.mxu0 0.0
        %1230 = vmatprep.subr.mxu0 0.0
        %1231 = vmatpush1.xpose.msra.mxu0 %v1198
        %1232 = vmatprep.subr.mxu0 0.0
        %1233 = vmatpush2.xpose.msra.mxu0 0.0
        %1234 = vmatprep.subr.mxu0 0.0
        %1235 = vmatpush2.xpose.msra.mxu0 0.0
        %1236 = vmatprep.subr.mxu0 0.0
        %1237 = vmatpush2.xpose.msra.mxu0 0.0
        %1238 = vmatprep.subr.mxu0 0.0
        %1239 = vmatpush2.xpose.msra.mxu0 0.0
        %1240 = vmatprep.subr.mxu0 0.0
        %1241 = vmatpush2.xpose.msra.mxu0 0.0
        %1242 = vmatprep.subr.mxu0 0.0
        %1243 = vmatpush2.xpose.msra.mxu0 0.0
        %1244 = vmatprep.subr.mxu0 0.0
        %1245 = vmatpush2.xpose.msra.mxu0 0.0
        %1246 = vmatprep.subr.mxu0 0.0
        %1247 = vmatpush2.xpose.msra.mxu0 0.0
        %1248 = vmatprep.subr.mxu0 0.0
        %1249 = vmatpush2.xpose.msra.mxu0 0.0
        %1250 = vmatprep.subr.mxu0 0.0
        %1251 = vmatpush2.xpose.msra.mxu0 0.0
        %1252 = vmatprep.subr.mxu0 0.0
        %1253 = vmatpush2.xpose.msra.mxu0 0.0
        %1254 = vmatprep.subr.mxu0 0.0
        %1255 = vmatpush2.xpose.msra.mxu0 0.0
        %1256 = vmatprep.subr.mxu0 0.0
        %1257 = vmatpush2.xpose.msra.mxu0 0.0
        %1258 = vmatprep.subr.mxu0 0.0
        %1259 = vmatpush2.xpose.msra.mxu0 0.0
        %1260 = vmatprep.subr.mxu0 0.0
        %1261 = vmatpush2.xpose.msra.mxu0 0.0
        %1262 = vmatprep.subr.mxu0 0.0
        %1263 = vmatpush2.xpose.msra.mxu0 0.0
        %1264 = vmatprep.mubr.f32.mxu0 0.0
        %1265 = vmatmul.mubr.f32.gmra.mxu0 %v1196
        %v1266 = vpop.f32.mrf.mxu0
        %v1267 = vadd.f32 %v1189, %v1266
        %v1268 = vpop.f32.mrf.mxu0
        %1269 = vdwg.mxu0
        %v1270 = vsel %vm363, -1e+30, %v1267
        %v1271 = vld [vmem:[#allocation2] sm:$0xff]
        %v1272 = vsel %vm452, %v1270, -inf
        %1273 = vmax.xlane.f32.xlu0 %v1272
        %v1274 = vpop.xlane.xlu0 %1273
        %v1275 = vmax.f32 %v1271, %v1274
        %v1276 = vsub.f32 %v1271, %v1275
        %v1277 = vmul.f32 %v1276, 1.442695
        %v1278 = vpow.pop %v1277
        %1280 = vset.pattern.permute.xlu0 4
        %1281 = vperm.xlu0 %1280, %v1275
        %v1282 = vpop.permute.xlu0 %1281
        %v1284 = vsub.f32 %v1270, %v1282
        %v1285 = vmul.f32 %v1284, 1.442695
        %v1286 = vpow.pop %v1285
        %v1287 = vld [vmem:[#allocation3] sm:$0xff]
        %v1288 = vmul.f32 %v1278, %v1287
        %v1289 = vsel %vm452, %v1286, 0.0
        %1290 = vadd.xlane.f32.xlu0 %v1289
        %v1291 = vpop.xlane.xlu0 %1290
        %v1292 = vadd.f32 %v1288, %v1291
        %vm1293 = vcmask 39968
        %1294 = vst.msk [vmem:[#allocation3] sm:$0xff] %vm1293, %v1292
        %1295 = vst.msk [vmem:[#allocation2] sm:$0xff] %vm1293, %v1275
        %v1296 = vld [vmem:[%s293] sm:$0xff]
        %1298 = vrot.lane.b32.xlu0 %v1296, 64
        %v1299 = vpop.permute.xlu0 %1298
        %v1302 = vsel %vm452, %v1286, 0
        %1304 = vmatprep.subr.mxu0 0.0
        %1305 = vmatpush1.msra.mxu0 0.0
        %1306 = vmatprep.subr.mxu0 0.0
        %1307 = vmatpush1.msra.mxu0 0.0
        %1308 = vmatprep.subr.mxu0 0.0
        %1309 = vmatpush1.msra.mxu0 0.0
        %1310 = vmatprep.subr.mxu0 0.0
        %1311 = vmatpush1.msra.mxu0 0.0
        %1312 = vmatprep.subr.mxu0 0.0
        %1313 = vmatpush1.msra.mxu0 0.0
        %1314 = vmatprep.subr.mxu0 0.0
        %1315 = vmatpush1.msra.mxu0 0.0
        %1316 = vmatprep.subr.mxu0 0.0
        %1317 = vmatpush1.msra.mxu0 0.0
        %1318 = vmatprep.subr.mxu0 0.0
        %1319 = vmatpush1.msra.mxu0 0.0
        %1320 = vmatprep.subr.mxu0 0.0
        %1321 = vmatpush1.msra.mxu0 0.0
        %1322 = vmatprep.subr.mxu0 0.0
        %1323 = vmatpush1.msra.mxu0 0.0
        %1324 = vmatprep.subr.mxu0 0.0
        %1325 = vmatpush1.msra.mxu0 0.0
        %1326 = vmatprep.subr.mxu0 0.0
        %1327 = vmatpush1.msra.mxu0 0.0
        %1328 = vmatprep.subr.mxu0 0.0
        %1329 = vmatpush1.msra.mxu0 0.0
        %1330 = vmatprep.subr.mxu0 0.0
        %1331 = vmatpush1.msra.mxu0 0.0
        %1332 = vmatprep.subr.mxu0 0.0
        %1333 = vmatpush1.msra.mxu0 0.0
        %1334 = vmatprep.subr.mxu0 0.0
        %1335 = vmatpush1.msra.mxu0 %v1299
        %1336 = vmatprep.subr.mxu0 0.0
        %1337 = vmatpush2.msra.mxu0 0.0
        %1338 = vmatprep.subr.mxu0 0.0
        %1339 = vmatpush2.msra.mxu0 0.0
        %1340 = vmatprep.subr.mxu0 0.0
        %1341 = vmatpush2.msra.mxu0 0.0
        %1342 = vmatprep.subr.mxu0 0.0
        %1343 = vmatpush2.msra.mxu0 0.0
        %1344 = vmatprep.subr.mxu0 0.0
        %1345 = vmatpush2.msra.mxu0 0.0
        %1346 = vmatprep.subr.mxu0 0.0
        %1347 = vmatpush2.msra.mxu0 0.0
        %1348 = vmatprep.subr.mxu0 0.0
        %1349 = vmatpush2.msra.mxu0 0.0
        %1350 = vmatprep.subr.mxu0 0.0
        %1351 = vmatpush2.msra.mxu0 0.0
        %1352 = vmatprep.subr.mxu0 0.0
        %1353 = vmatpush2.msra.mxu0 0.0
        %1354 = vmatprep.subr.mxu0 0.0
        %1355 = vmatpush2.msra.mxu0 0.0
        %1356 = vmatprep.subr.mxu0 0.0
        %1357 = vmatpush2.msra.mxu0 0.0
        %1358 = vmatprep.subr.mxu0 0.0
        %1359 = vmatpush2.msra.mxu0 0.0
        %1360 = vmatprep.subr.mxu0 0.0
        %1361 = vmatpush2.msra.mxu0 0.0
        %1362 = vmatprep.subr.mxu0 0.0
        %1363 = vmatpush2.msra.mxu0 0.0
        %1364 = vmatprep.subr.mxu0 0.0
        %1365 = vmatpush2.msra.mxu0 0.0
        %1366 = vmatprep.subr.mxu0 0.0
        %1367 = vmatpush2.msra.mxu0 0.0
        %1368 = vmatprep.mubr.f32.mxu0 0.0
        %1369 = vmatmul.mubr.f32.gmra.mxu0 %v1302
        %v1370 = vpop.f32.mrf.mxu0
        %v1371 = vadd.f32 0.0, %v1370
        %v1372 = vpop.f32.mrf.mxu0
        %1373 = vdwg.mxu0
        %v1374 = vld [vmem:[#allocation4] sm:$0xff]
        %1376 = vset.pattern.permute.xlu0 4
        %1377 = vperm.xlu0 %1376, %v1278
        %v1378 = vpop.permute.xlu0 %1377
        %v1380 = vmul.f32 %v1378, %v1374
        %1382 = vrot.lane.b32.xlu0 %v1371, 64
        %v1383 = vpop.permute.xlu0 %1382
        %v1385 = vadd.f32 %v1380, %v1383
        %vm1386 = vcmask 654848
        %1387 = vst.msk [vmem:[#allocation4] sm:$0xff] %vm1386, %v1385
        %v1388 = vld [vmem:[%s275] sm:$0xff]
        %v1389 = vld [vmem:[%s284] sm:$0xff]
        %s1390 = sld [smem:[#allocation5 + $0x5]]
        %s1391 = sld [smem:[#allocation5 + $0x85]]
        %s1392 = ssub.f32 %s1391, %s1390
        %v1393 = vstv %s1392
        %v1394 = vmul.f32 %v1393, %v362
        %v1395 = vstv %s1390
        %v1396 = vadd.f32 %v1394, %v1395
        %1398 = vrot.lane.b32.xlu0 %v1388, 48
        %v1399 = vpop.permute.xlu0 %1398
        %1401 = vrot.lane.b32.xlu0 %v1389, 48
        %v1402 = vpop.permute.xlu0 %1401
        %v1403 = vsel %vm373, %v1399, 0
        %v1405 = vsel %vm373, %v1402, 0
        %1407 = vmatprep.subr.mxu0 0.0
        %1408 = vmatpush1.xpose.msra.mxu0 0.0
        %1409 = vmatprep.subr.mxu0 0.0
        %1410 = vmatpush1.xpose.msra.mxu0 0.0
        %1411 = vmatprep.subr.mxu0 0.0
        %1412 = vmatpush1.xpose.msra.mxu0 0.0
        %1413 = vmatprep.subr.mxu0 0.0
        %1414 = vmatpush1.xpose.msra.mxu0 0.0
        %1415 = vmatprep.subr.mxu0 0.0
        %1416 = vmatpush1.xpose.msra.mxu0 0.0
        %1417 = vmatprep.subr.mxu0 0.0
        %1418 = vmatpush1.xpose.msra.mxu0 0.0
        %1419 = vmatprep.subr.mxu0 0.0
        %1420 = vmatpush1.xpose.msra.mxu0 0.0
        %1421 = vmatprep.subr.mxu0 0.0
        %1422 = vmatpush1.xpose.msra.mxu0 0.0
        %1423 = vmatprep.subr.mxu0 0.0
        %1424 = vmatpush1.xpose.msra.mxu0 0.0
        %1425 = vmatprep.subr.mxu0 0.0
        %1426 = vmatpush1.xpose.msra.mxu0 0.0
        %1427 = vmatprep.subr.mxu0 0.0
        %1428 = vmatpush1.xpose.msra.mxu0 0.0
        %1429 = vmatprep.subr.mxu0 0.0
        %1430 = vmatpush1.xpose.msra.mxu0 0.0
        %1431 = vmatprep.subr.mxu0 0.0
        %1432 = vmatpush1.xpose.msra.mxu0 0.0
        %1433 = vmatprep.subr.mxu0 0.0
        %1434 = vmatpush1.xpose.msra.mxu0 0.0
        %1435 = vmatprep.subr.mxu0 0.0
        %1436 = vmatpush1.xpose.msra.mxu0 0.0
        %1437 = vmatprep.subr.mxu0 0.0
        %1438 = vmatpush1.xpose.msra.mxu0 %v1405
        %1439 = vmatprep.subr.mxu0 0.0
        %1440 = vmatpush2.xpose.msra.mxu0 0.0
        %1441 = vmatprep.subr.mxu0 0.0
        %1442 = vmatpush2.xpose.msra.mxu0 0.0
        %1443 = vmatprep.subr.mxu0 0.0
        %1444 = vmatpush2.xpose.msra.mxu0 0.0
        %1445 = vmatprep.subr.mxu0 0.0
        %1446 = vmatpush2.xpose.msra.mxu0 0.0
        %1447 = vmatprep.subr.mxu0 0.0
        %1448 = vmatpush2.xpose.msra.mxu0 0.0
        %1449 = vmatprep.subr.mxu0 0.0
        %1450 = vmatpush2.xpose.msra.mxu0 0.0
        %1451 = vmatprep.subr.mxu0 0.0
        %1452 = vmatpush2.xpose.msra.mxu0 0.0
        %1453 = vmatprep.subr.mxu0 0.0
        %1454 = vmatpush2.xpose.msra.mxu0 0.0
        %1455 = vmatprep.subr.mxu0 0.0
        %1456 = vmatpush2.xpose.msra.mxu0 0.0
        %1457 = vmatprep.subr.mxu0 0.0
        %1458 = vmatpush2.xpose.msra.mxu0 0.0
        %1459 = vmatprep.subr.mxu0 0.0
        %1460 = vmatpush2.xpose.msra.mxu0 0.0
        %1461 = vmatprep.subr.mxu0 0.0
        %1462 = vmatpush2.xpose.msra.mxu0 0.0
        %1463 = vmatprep.subr.mxu0 0.0
        %1464 = vmatpush2.xpose.msra.mxu0 0.0
        %1465 = vmatprep.subr.mxu0 0.0
        %1466 = vmatpush2.xpose.msra.mxu0 0.0
        %1467 = vmatprep.subr.mxu0 0.0
        %1468 = vmatpush2.xpose.msra.mxu0 0.0
        %1469 = vmatprep.subr.mxu0 0.0
        %1470 = vmatpush2.xpose.msra.mxu0 0.0
        %1471 = vmatprep.mubr.f32.mxu0 0.0
        %1472 = vmatmul.mubr.f32.gmra.mxu0 %v1403
        %v1473 = vpop.f32.mrf.mxu0
        %v1474 = vadd.f32 %v1396, %v1473
        %v1475 = vpop.f32.mrf.mxu0
        %1476 = vdwg.mxu0
        %v1477 = vsel %vm363, -1e+30, %v1474
        %v1478 = vld [vmem:[#allocation2] sm:$0xff]
        %v1479 = vsel %vm452, %v1477, -inf
        %1480 = vmax.xlane.f32.xlu0 %v1479
        %v1481 = vpop.xlane.xlu0 %1480
        %v1482 = vmax.f32 %v1478, %v1481
        %v1483 = vsub.f32 %v1478, %v1482
        %v1484 = vmul.f32 %v1483, 1.442695
        %v1485 = vpow.pop %v1484
        %1487 = vset.pattern.permute.xlu0 5
        %1488 = vperm.xlu0 %1487, %v1482
        %v1489 = vpop.permute.xlu0 %1488
        %v1491 = vsub.f32 %v1477, %v1489
        %v1492 = vmul.f32 %v1491, 1.442695
        %v1493 = vpow.pop %v1492
        %v1494 = vld [vmem:[#allocation3] sm:$0xff]
        %v1495 = vmul.f32 %v1485, %v1494
        %v1496 = vsel %vm452, %v1493, 0.0
        %1497 = vadd.xlane.f32.xlu0 %v1496
        %v1498 = vpop.xlane.xlu0 %1497
        %v1499 = vadd.f32 %v1495, %v1498
        %vm1500 = vcmask 48168
        %1501 = vst.msk [vmem:[#allocation3] sm:$0xff] %vm1500, %v1499
        %1502 = vst.msk [vmem:[#allocation2] sm:$0xff] %vm1500, %v1482
        %v1503 = vld [vmem:[%s293] sm:$0xff]
        %1505 = vrot.lane.b32.xlu0 %v1503, 48
        %v1506 = vpop.permute.xlu0 %1505
        %v1509 = vsel %vm452, %v1493, 0
        %1511 = vmatprep.subr.mxu0 0.0
        %1512 = vmatpush1.msra.mxu0 0.0
        %1513 = vmatprep.subr.mxu0 0.0
        %1514 = vmatpush1.msra.mxu0 0.0
        %1515 = vmatprep.subr.mxu0 0.0
        %1516 = vmatpush1.msra.mxu0 0.0
        %1517 = vmatprep.subr.mxu0 0.0
        %1518 = vmatpush1.msra.mxu0 0.0
        %1519 = vmatprep.subr.mxu0 0.0
        %1520 = vmatpush1.msra.mxu0 0.0
        %1521 = vmatprep.subr.mxu0 0.0
        %1522 = vmatpush1.msra.mxu0 0.0
        %1523 = vmatprep.subr.mxu0 0.0
        %1524 = vmatpush1.msra.mxu0 0.0
        %1525 = vmatprep.subr.mxu0 0.0
        %1526 = vmatpush1.msra.mxu0 0.0
        %1527 = vmatprep.subr.mxu0 0.0
        %1528 = vmatpush1.msra.mxu0 0.0
        %1529 = vmatprep.subr.mxu0 0.0
        %1530 = vmatpush1.msra.mxu0 0.0
        %1531 = vmatprep.subr.mxu0 0.0
        %1532 = vmatpush1.msra.mxu0 0.0
        %1533 = vmatprep.subr.mxu0 0.0
        %1534 = vmatpush1.msra.mxu0 0.0
        %1535 = vmatprep.subr.mxu0 0.0
        %1536 = vmatpush1.msra.mxu0 0.0
        %1537 = vmatprep.subr.mxu0 0.0
        %1538 = vmatpush1.msra.mxu0 0.0
        %1539 = vmatprep.subr.mxu0 0.0
        %1540 = vmatpush1.msra.mxu0 0.0
        %1541 = vmatprep.subr.mxu0 0.0
        %1542 = vmatpush1.msra.mxu0 %v1506
        %1543 = vmatprep.subr.mxu0 0.0
        %1544 = vmatpush2.msra.mxu0 0.0
        %1545 = vmatprep.subr.mxu0 0.0
        %1546 = vmatpush2.msra.mxu0 0.0
        %1547 = vmatprep.subr.mxu0 0.0
        %1548 = vmatpush2.msra.mxu0 0.0
        %1549 = vmatprep.subr.mxu0 0.0
        %1550 = vmatpush2.msra.mxu0 0.0
        %1551 = vmatprep.subr.mxu0 0.0
        %1552 = vmatpush2.msra.mxu0 0.0
        %1553 = vmatprep.subr.mxu0 0.0
        %1554 = vmatpush2.msra.mxu0 0.0
        %1555 = vmatprep.subr.mxu0 0.0
        %1556 = vmatpush2.msra.mxu0 0.0
        %1557 = vmatprep.subr.mxu0 0.0
        %1558 = vmatpush2.msra.mxu0 0.0
        %1559 = vmatprep.subr.mxu0 0.0
        %1560 = vmatpush2.msra.mxu0 0.0
        %1561 = vmatprep.subr.mxu0 0.0
        %1562 = vmatpush2.msra.mxu0 0.0
        %1563 = vmatprep.subr.mxu0 0.0
        %1564 = vmatpush2.msra.mxu0 0.0
        %1565 = vmatprep.subr.mxu0 0.0
        %1566 = vmatpush2.msra.mxu0 0.0
        %1567 = vmatprep.subr.mxu0 0.0
        %1568 = vmatpush2.msra.mxu0 0.0
        %1569 = vmatprep.subr.mxu0 0.0
        %1570 = vmatpush2.msra.mxu0 0.0
        %1571 = vmatprep.subr.mxu0 0.0
        %1572 = vmatpush2.msra.mxu0 0.0
        %1573 = vmatprep.subr.mxu0 0.0
        %1574 = vmatpush2.msra.mxu0 0.0
        %1575 = vmatprep.mubr.f32.mxu0 0.0
        %1576 = vmatmul.mubr.f32.gmra.mxu0 %v1509
        %v1577 = vpop.f32.mrf.mxu0
        %v1578 = vadd.f32 0.0, %v1577
        %v1579 = vpop.f32.mrf.mxu0
        %1580 = vdwg.mxu0
        %v1581 = vld [vmem:[#allocation4] sm:$0xff]
        %1583 = vset.pattern.permute.xlu0 5
        %1584 = vperm.xlu0 %1583, %v1485
        %v1585 = vpop.permute.xlu0 %1584
        %v1587 = vmul.f32 %v1585, %v1581
        %1589 = vrot.lane.b32.xlu0 %v1578, 80
        %v1590 = vpop.permute.xlu0 %1589
        %v1592 = vadd.f32 %v1587, %v1590
        %vm1593 = vcmask 786048
        %1594 = vst.msk [vmem:[#allocation4] sm:$0xff] %vm1593, %v1592
        %v1595 = vld [vmem:[%s275] sm:$0xff]
        %v1596 = vld [vmem:[%s284] sm:$0xff]
        %s1597 = sld [smem:[#allocation5 + $0x6]]
        %s1598 = sld [smem:[#allocation5 + $0x86]]
        %s1599 = ssub.f32 %s1598, %s1597
        %v1600 = vstv %s1599
        %v1601 = vmul.f32 %v1600, %v362
        %v1602 = vstv %s1597
        %v1603 = vadd.f32 %v1601, %v1602
        %1605 = vrot.lane.b32.xlu0 %v1595, 32
        %v1606 = vpop.permute.xlu0 %1605
        %1608 = vrot.lane.b32.xlu0 %v1596, 32
        %v1609 = vpop.permute.xlu0 %1608
        %v1610 = vsel %vm373, %v1606, 0
        %v1612 = vsel %vm373, %v1609, 0
        %1614 = vmatprep.subr.mxu0 0.0
        %1615 = vmatpush1.xpose.msra.mxu0 0.0
        %1616 = vmatprep.subr.mxu0 0.0
        %1617 = vmatpush1.xpose.msra.mxu0 0.0
        %1618 = vmatprep.subr.mxu0 0.0
        %1619 = vmatpush1.xpose.msra.mxu0 0.0
        %1620 = vmatprep.subr.mxu0 0.0
        %1621 = vmatpush1.xpose.msra.mxu0 0.0
        %1622 = vmatprep.subr.mxu0 0.0
        %1623 = vmatpush1.xpose.msra.mxu0 0.0
        %1624 = vmatprep.subr.mxu0 0.0
        %1625 = vmatpush1.xpose.msra.mxu0 0.0
        %1626 = vmatprep.subr.mxu0 0.0
        %1627 = vmatpush1.xpose.msra.mxu0 0.0
        %1628 = vmatprep.subr.mxu0 0.0
        %1629 = vmatpush1.xpose.msra.mxu0 0.0
        %1630 = vmatprep.subr.mxu0 0.0
        %1631 = vmatpush1.xpose.msra.mxu0 0.0
        %1632 = vmatprep.subr.mxu0 0.0
        %1633 = vmatpush1.xpose.msra.mxu0 0.0
        %1634 = vmatprep.subr.mxu0 0.0
        %1635 = vmatpush1.xpose.msra.mxu0 0.0
        %1636 = vmatprep.subr.mxu0 0.0
        %1637 = vmatpush1.xpose.msra.mxu0 0.0
        %1638 = vmatprep.subr.mxu0 0.0
        %1639 = vmatpush1.xpose.msra.mxu0 0.0
        %1640 = vmatprep.subr.mxu0 0.0
        %1641 = vmatpush1.xpose.msra.mxu0 0.0
        %1642 = vmatprep.subr.mxu0 0.0
        %1643 = vmatpush1.xpose.msra.mxu0 0.0
        %1644 = vmatprep.subr.mxu0 0.0
        %1645 = vmatpush1.xpose.msra.mxu0 %v1612
        %1646 = vmatprep.subr.mxu0 0.0
        %1647 = vmatpush2.xpose.msra.mxu0 0.0
        %1648 = vmatprep.subr.mxu0 0.0
        %1649 = vmatpush2.xpose.msra.mxu0 0.0
        %1650 = vmatprep.subr.mxu0 0.0
        %1651 = vmatpush2.xpose.msra.mxu0 0.0
        %1652 = vmatprep.subr.mxu0 0.0
        %1653 = vmatpush2.xpose.msra.mxu0 0.0
        %1654 = vmatprep.subr.mxu0 0.0
        %1655 = vmatpush2.xpose.msra.mxu0 0.0
        %1656 = vmatprep.subr.mxu0 0.0
        %1657 = vmatpush2.xpose.msra.mxu0 0.0
        %1658 = vmatprep.subr.mxu0 0.0
        %1659 = vmatpush2.xpose.msra.mxu0 0.0
        %1660 = vmatprep.subr.mxu0 0.0
        %1661 = vmatpush2.xpose.msra.mxu0 0.0
        %1662 = vmatprep.subr.mxu0 0.0
        %1663 = vmatpush2.xpose.msra.mxu0 0.0
        %1664 = vmatprep.subr.mxu0 0.0
        %1665 = vmatpush2.xpose.msra.mxu0 0.0
        %1666 = vmatprep.subr.mxu0 0.0
        %1667 = vmatpush2.xpose.msra.mxu0 0.0
        %1668 = vmatprep.subr.mxu0 0.0
        %1669 = vmatpush2.xpose.msra.mxu0 0.0
        %1670 = vmatprep.subr.mxu0 0.0
        %1671 = vmatpush2.xpose.msra.mxu0 0.0
        %1672 = vmatprep.subr.mxu0 0.0
        %1673 = vmatpush2.xpose.msra.mxu0 0.0
        %1674 = vmatprep.subr.mxu0 0.0
        %1675 = vmatpush2.xpose.msra.mxu0 0.0
        %1676 = vmatprep.subr.mxu0 0.0
        %1677 = vmatpush2.xpose.msra.mxu0 0.0
        %1678 = vmatprep.mubr.f32.mxu0 0.0
        %1679 = vmatmul.mubr.f32.gmra.mxu0 %v1610
        %v1680 = vpop.f32.mrf.mxu0
        %v1681 = vadd.f32 %v1603, %v1680
        %v1682 = vpop.f32.mrf.mxu0
        %1683 = vdwg.mxu0
        %v1684 = vsel %vm363, -1e+30, %v1681
        %v1685 = vld [vmem:[#allocation2] sm:$0xff]
        %v1686 = vsel %vm452, %v1684, -inf
        %1687 = vmax.xlane.f32.xlu0 %v1686
        %v1688 = vpop.xlane.xlu0 %1687
        %v1689 = vmax.f32 %v1685, %v1688
        %v1690 = vsub.f32 %v1685, %v1689
        %v1691 = vmul.f32 %v1690, 1.442695
        %v1692 = vpow.pop %v1691
        %1694 = vset.pattern.permute.xlu0 6
        %1695 = vperm.xlu0 %1694, %v1689
        %v1696 = vpop.permute.xlu0 %1695
        %v1698 = vsub.f32 %v1684, %v1696
        %v1699 = vmul.f32 %v1698, 1.442695
        %v1700 = vpow.pop %v1699
        %v1701 = vld [vmem:[#allocation3] sm:$0xff]
        %v1702 = vmul.f32 %v1692, %v1701
        %v1703 = vsel %vm452, %v1700, 0.0
        %1704 = vadd.xlane.f32.xlu0 %v1703
        %v1705 = vpop.xlane.xlu0 %1704
        %v1706 = vadd.f32 %v1702, %v1705
        %vm1707 = vcmask 56368
        %1708 = vst.msk [vmem:[#allocation3] sm:$0xff] %vm1707, %v1706
        %1709 = vst.msk [vmem:[#allocation2] sm:$0xff] %vm1707, %v1689
        %v1710 = vld [vmem:[%s293] sm:$0xff]
        %1712 = vrot.lane.b32.xlu0 %v1710, 32
        %v1713 = vpop.permute.xlu0 %1712
        %v1716 = vsel %vm452, %v1700, 0
        %1718 = vmatprep.subr.mxu0 0.0
        %1719 = vmatpush1.msra.mxu0 0.0
        %1720 = vmatprep.subr.mxu0 0.0
        %1721 = vmatpush1.msra.mxu0 0.0
        %1722 = vmatprep.subr.mxu0 0.0
        %1723 = vmatpush1.msra.mxu0 0.0
        %1724 = vmatprep.subr.mxu0 0.0
        %1725 = vmatpush1.msra.mxu0 0.0
        %1726 = vmatprep.subr.mxu0 0.0
        %1727 = vmatpush1.msra.mxu0 0.0
        %1728 = vmatprep.subr.mxu0 0.0
        %1729 = vmatpush1.msra.mxu0 0.0
        %1730 = vmatprep.subr.mxu0 0.0
        %1731 = vmatpush1.msra.mxu0 0.0
        %1732 = vmatprep.subr.mxu0 0.0
        %1733 = vmatpush1.msra.mxu0 0.0
        %1734 = vmatprep.subr.mxu0 0.0
        %1735 = vmatpush1.msra.mxu0 0.0
        %1736 = vmatprep.subr.mxu0 0.0
        %1737 = vmatpush1.msra.mxu0 0.0
        %1738 = vmatprep.subr.mxu0 0.0
        %1739 = vmatpush1.msra.mxu0 0.0
        %1740 = vmatprep.subr.mxu0 0.0
        %1741 = vmatpush1.msra.mxu0 0.0
        %1742 = vmatprep.subr.mxu0 0.0
        %1743 = vmatpush1.msra.mxu0 0.0
        %1744 = vmatprep.subr.mxu0 0.0
        %1745 = vmatpush1.msra.mxu0 0.0
        %1746 = vmatprep.subr.mxu0 0.0
        %1747 = vmatpush1.msra.mxu0 0.0
        %1748 = vmatprep.subr.mxu0 0.0
        %1749 = vmatpush1.msra.mxu0 %v1713
        %1750 = vmatprep.subr.mxu0 0.0
        %1751 = vmatpush2.msra.mxu0 0.0
        %1752 = vmatprep.subr.mxu0 0.0
        %1753 = vmatpush2.msra.mxu0 0.0
        %1754 = vmatprep.subr.mxu0 0.0
        %1755 = vmatpush2.msra.mxu0 0.0
        %1756 = vmatprep.subr.mxu0 0.0
        %1757 = vmatpush2.msra.mxu0 0.0
        %1758 = vmatprep.subr.mxu0 0.0
        %1759 = vmatpush2.msra.mxu0 0.0
        %1760 = vmatprep.subr.mxu0 0.0
        %1761 = vmatpush2.msra.mxu0 0.0
        %1762 = vmatprep.subr.mxu0 0.0
        %1763 = vmatpush2.msra.mxu0 0.0
        %1764 = vmatprep.subr.mxu0 0.0
        %1765 = vmatpush2.msra.mxu0 0.0
        %1766 = vmatprep.subr.mxu0 0.0
        %1767 = vmatpush2.msra.mxu0 0.0
        %1768 = vmatprep.subr.mxu0 0.0
        %1769 = vmatpush2.msra.mxu0 0.0
        %1770 = vmatprep.subr.mxu0 0.0
        %1771 = vmatpush2.msra.mxu0 0.0
        %1772 = vmatprep.subr.mxu0 0.0
        %1773 = vmatpush2.msra.mxu0 0.0
        %1774 = vmatprep.subr.mxu0 0.0
        %1775 = vmatpush2.msra.mxu0 0.0
        %1776 = vmatprep.subr.mxu0 0.0
        %1777 = vmatpush2.msra.mxu0 0.0
        %1778 = vmatprep.subr.mxu0 0.0
        %1779 = vmatpush2.msra.mxu0 0.0
        %1780 = vmatprep.subr.mxu0 0.0
        %1781 = vmatpush2.msra.mxu0 0.0
        %1782 = vmatprep.mubr.f32.mxu0 0.0
        %1783 = vmatmul.mubr.f32.gmra.mxu0 %v1716
        %v1784 = vpop.f32.mrf.mxu0
        %v1785 = vadd.f32 0.0, %v1784
        %v1786 = vpop.f32.mrf.mxu0
        %1787 = vdwg.mxu0
        %v1788 = vld [vmem:[#allocation4] sm:$0xff]
        %1790 = vset.pattern.permute.xlu0 6
        %1791 = vperm.xlu0 %1790, %v1692
        %v1792 = vpop.permute.xlu0 %1791
        %v1794 = vmul.f32 %v1792, %v1788
        %1796 = vrot.lane.b32.xlu0 %v1785, 96
        %v1797 = vpop.permute.xlu0 %1796
        %v1799 = vadd.f32 %v1794, %v1797
        %vm1800 = vcmask 917248
        %1801 = vst.msk [vmem:[#allocation4] sm:$0xff] %vm1800, %v1799
        %v1802 = vld [vmem:[%s275] sm:$0xff]
        %v1803 = vld [vmem:[%s284] sm:$0xff]
        %s1804 = sld [smem:[#allocation5 + $0x7]]
        %s1805 = sld [smem:[#allocation5 + $0x87]]
        %s1806 = ssub.f32 %s1805, %s1804
        %v1807 = vstv %s1806
        %v1808 = vmul.f32 %v1807, %v362
        %v1809 = vstv %s1804
        %v1810 = vadd.f32 %v1808, %v1809
        %1812 = vrot.lane.b32.xlu0 %v1802, 16
        %v1813 = vpop.permute.xlu0 %1812
        %1815 = vrot.lane.b32.xlu0 %v1803, 16
        %v1816 = vpop.permute.xlu0 %1815
        %v1817 = vsel %vm373, %v1813, 0
        %v1819 = vsel %vm373, %v1816, 0
        %1821 = vmatprep.subr.mxu0 0.0
        %1822 = vmatpush1.xpose.msra.mxu0 0.0
        %1823 = vmatprep.subr.mxu0 0.0
        %1824 = vmatpush1.xpose.msra.mxu0 0.0
        %1825 = vmatprep.subr.mxu0 0.0
        %1826 = vmatpush1.xpose.msra.mxu0 0.0
        %1827 = vmatprep.subr.mxu0 0.0
        %1828 = vmatpush1.xpose.msra.mxu0 0.0
        %1829 = vmatprep.subr.mxu0 0.0
        %1830 = vmatpush1.xpose.msra.mxu0 0.0
        %1831 = vmatprep.subr.mxu0 0.0
        %1832 = vmatpush1.xpose.msra.mxu0 0.0
        %1833 = vmatprep.subr.mxu0 0.0
        %1834 = vmatpush1.xpose.msra.mxu0 0.0
        %1835 = vmatprep.subr.mxu0 0.0
        %1836 = vmatpush1.xpose.msra.mxu0 0.0
        %1837 = vmatprep.subr.mxu0 0.0
        %1838 = vmatpush1.xpose.msra.mxu0 0.0
        %1839 = vmatprep.subr.mxu0 0.0
        %1840 = vmatpush1.xpose.msra.mxu0 0.0
        %1841 = vmatprep.subr.mxu0 0.0
        %1842 = vmatpush1.xpose.msra.mxu0 0.0
        %1843 = vmatprep.subr.mxu0 0.0
        %1844 = vmatpush1.xpose.msra.mxu0 0.0
        %1845 = vmatprep.subr.mxu0 0.0
        %1846 = vmatpush1.xpose.msra.mxu0 0.0
        %1847 = vmatprep.subr.mxu0 0.0
        %1848 = vmatpush1.xpose.msra.mxu0 0.0
        %1849 = vmatprep.subr.mxu0 0.0
        %1850 = vmatpush1.xpose.msra.mxu0 0.0
        %1851 = vmatprep.subr.mxu0 0.0
        %1852 = vmatpush1.xpose.msra.mxu0 %v1819
        %1853 = vmatprep.subr.mxu0 0.0
        %1854 = vmatpush2.xpose.msra.mxu0 0.0
        %1855 = vmatprep.subr.mxu0 0.0
        %1856 = vmatpush2.xpose.msra.mxu0 0.0
        %1857 = vmatprep.subr.mxu0 0.0
        %1858 = vmatpush2.xpose.msra.mxu0 0.0
        %1859 = vmatprep.subr.mxu0 0.0
        %1860 = vmatpush2.xpose.msra.mxu0 0.0
        %1861 = vmatprep.subr.mxu0 0.0
        %1862 = vmatpush2.xpose.msra.mxu0 0.0
        %1863 = vmatprep.subr.mxu0 0.0
        %1864 = vmatpush2.xpose.msra.mxu0 0.0
        %1865 = vmatprep.subr.mxu0 0.0
        %1866 = vmatpush2.xpose.msra.mxu0 0.0
        %1867 = vmatprep.subr.mxu0 0.0
        %1868 = vmatpush2.xpose.msra.mxu0 0.0
        %1869 = vmatprep.subr.mxu0 0.0
        %1870 = vmatpush2.xpose.msra.mxu0 0.0
        %1871 = vmatprep.subr.mxu0 0.0
        %1872 = vmatpush2.xpose.msra.mxu0 0.0
        %1873 = vmatprep.subr.mxu0 0.0
        %1874 = vmatpush2.xpose.msra.mxu0 0.0
        %1875 = vmatprep.subr.mxu0 0.0
        %1876 = vmatpush2.xpose.msra.mxu0 0.0
        %1877 = vmatprep.subr.mxu0 0.0
        %1878 = vmatpush2.xpose.msra.mxu0 0.0
        %1879 = vmatprep.subr.mxu0 0.0
        %1880 = vmatpush2.xpose.msra.mxu0 0.0
        %1881 = vmatprep.subr.mxu0 0.0
        %1882 = vmatpush2.xpose.msra.mxu0 0.0
        %1883 = vmatprep.subr.mxu0 0.0
        %1884 = vmatpush2.xpose.msra.mxu0 0.0
        %1885 = vmatprep.mubr.f32.mxu0 0.0
        %1886 = vmatmul.mubr.f32.gmra.mxu0 %v1817
        %v1887 = vpop.f32.mrf.mxu0
        %v1888 = vadd.f32 %v1810, %v1887
        %v1889 = vpop.f32.mrf.mxu0
        %1890 = vdwg.mxu0
        %v1891 = vsel %vm363, -1e+30, %v1888
        %v1892 = vld [vmem:[#allocation2] sm:$0xff]
        %v1893 = vsel %vm452, %v1891, -inf
        %1894 = vmax.xlane.f32.xlu0 %v1893
        %v1895 = vpop.xlane.xlu0 %1894
        %v1896 = vmax.f32 %v1892, %v1895
        %v1897 = vsub.f32 %v1892, %v1896
        %v1898 = vmul.f32 %v1897, 1.442695
        %v1899 = vpow.pop %v1898
        %1901 = vset.pattern.permute.xlu0 7
        %1902 = vperm.xlu0 %1901, %v1896
        %v1903 = vpop.permute.xlu0 %1902
        %v1905 = vsub.f32 %v1891, %v1903
        %v1906 = vmul.f32 %v1905, 1.442695
        %v1907 = vpow.pop %v1906
        %v1908 = vld [vmem:[#allocation3] sm:$0xff]
        %v1909 = vmul.f32 %v1899, %v1908
        %v1910 = vsel %vm452, %v1907, 0.0
        %1911 = vadd.xlane.f32.xlu0 %v1910
        %v1912 = vpop.xlane.xlu0 %1911
        %v1913 = vadd.f32 %v1909, %v1912
        %vm1914 = vcmask 64568
        %1915 = vst.msk [vmem:[#allocation3] sm:$0xff] %vm1914, %v1913
        %1916 = vst.msk [vmem:[#allocation2] sm:$0xff] %vm1914, %v1896
        %v1917 = vld [vmem:[%s293] sm:$0xff]
        %1919 = vrot.lane.b32.xlu0 %v1917, 16
        %v1920 = vpop.permute.xlu0 %1919
        %v1923 = vsel %vm452, %v1907, 0
        %1925 = vmatprep.subr.mxu0 0.0
        %1926 = vmatpush1.msra.mxu0 0.0
        %1927 = vmatprep.subr.mxu0 0.0
        %1928 = vmatpush1.msra.mxu0 0.0
        %1929 = vmatprep.subr.mxu0 0.0
        %1930 = vmatpush1.msra.mxu0 0.0
        %1931 = vmatprep.subr.mxu0 0.0
        %1932 = vmatpush1.msra.mxu0 0.0
        %1933 = vmatprep.subr.mxu0 0.0
        %1934 = vmatpush1.msra.mxu0 0.0
        %1935 = vmatprep.subr.mxu0 0.0
        %1936 = vmatpush1.msra.mxu0 0.0
        %1937 = vmatprep.subr.mxu0 0.0
        %1938 = vmatpush1.msra.mxu0 0.0
        %1939 = vmatprep.subr.mxu0 0.0
        %1940 = vmatpush1.msra.mxu0 0.0
        %1941 = vmatprep.subr.mxu0 0.0
        %1942 = vmatpush1.msra.mxu0 0.0
        %1943 = vmatprep.subr.mxu0 0.0
        %1944 = vmatpush1.msra.mxu0 0.0
        %1945 = vmatprep.subr.mxu0 0.0
        %1946 = vmatpush1.msra.mxu0 0.0
        %1947 = vmatprep.subr.mxu0 0.0
        %1948 = vmatpush1.msra.mxu0 0.0
        %1949 = vmatprep.subr.mxu0 0.0
        %1950 = vmatpush1.msra.mxu0 0.0
        %1951 = vmatprep.subr.mxu0 0.0
        %1952 = vmatpush1.msra.mxu0 0.0
        %1953 = vmatprep.subr.mxu0 0.0
        %1954 = vmatpush1.msra.mxu0 0.0
        %1955 = vmatprep.subr.mxu0 0.0
        %1956 = vmatpush1.msra.mxu0 %v1920
        %1957 = vmatprep.subr.mxu0 0.0
        %1958 = vmatpush2.msra.mxu0 0.0
        %1959 = vmatprep.subr.mxu0 0.0
        %1960 = vmatpush2.msra.mxu0 0.0
        %1961 = vmatprep.subr.mxu0 0.0
        %1962 = vmatpush2.msra.mxu0 0.0
        %1963 = vmatprep.subr.mxu0 0.0
        %1964 = vmatpush2.msra.mxu0 0.0
        %1965 = vmatprep.subr.mxu0 0.0
        %1966 = vmatpush2.msra.mxu0 0.0
        %1967 = vmatprep.subr.mxu0 0.0
        %1968 = vmatpush2.msra.mxu0 0.0
        %1969 = vmatprep.subr.mxu0 0.0
        %1970 = vmatpush2.msra.mxu0 0.0
        %1971 = vmatprep.subr.mxu0 0.0
        %1972 = vmatpush2.msra.mxu0 0.0
        %1973 = vmatprep.subr.mxu0 0.0
        %1974 = vmatpush2.msra.mxu0 0.0
        %1975 = vmatprep.subr.mxu0 0.0
        %1976 = vmatpush2.msra.mxu0 0.0
        %1977 = vmatprep.subr.mxu0 0.0
        %1978 = vmatpush2.msra.mxu0 0.0
        %1979 = vmatprep.subr.mxu0 0.0
        %1980 = vmatpush2.msra.mxu0 0.0
        %1981 = vmatprep.subr.mxu0 0.0
        %1982 = vmatpush2.msra.mxu0 0.0
        %1983 = vmatprep.subr.mxu0 0.0
        %1984 = vmatpush2.msra.mxu0 0.0
        %1985 = vmatprep.subr.mxu0 0.0
        %1986 = vmatpush2.msra.mxu0 0.0
        %1987 = vmatprep.subr.mxu0 0.0
        %1988 = vmatpush2.msra.mxu0 0.0
        %1989 = vmatprep.mubr.f32.mxu0 0.0
        %1990 = vmatmul.mubr.f32.gmra.mxu0 %v1923
        %v1991 = vpop.f32.mrf.mxu0
        %v1992 = vadd.f32 0.0, %v1991
        %v1993 = vpop.f32.mrf.mxu0
        %1994 = vdwg.mxu0
        %v1995 = vld [vmem:[#allocation4] sm:$0xff]
        %1997 = vset.pattern.permute.xlu0 7
        %1998 = vperm.xlu0 %1997, %v1899
        %v1999 = vpop.permute.xlu0 %1998
        %v2001 = vmul.f32 %v1999, %v1995
        %2003 = vrot.lane.b32.xlu0 %v1992, 112
        %v2004 = vpop.permute.xlu0 %2003
        %v2006 = vadd.f32 %v2001, %v2004
        %vm2007 = vcmask 1048448
        %2008 = vst.msk [vmem:[#allocation4] sm:$0xff] %vm2007, %v2006
        %p2009 = scmp.eq.s32.totalorder %s32, 1
        // Predicated region
        $region57: #{tpu_custom_call.1} parent=35 // pred_check
          %p2010 = pneg %p2009
        $region58: #{tpu_custom_call.1} parent=35 // pred_check_branch
          %2012 = sbr.rel (%p2010) target = $region60
        $region59: #{tpu_custom_call.1} parent=35 // pred_region
          %v2013 = vld [vmem:[#allocation4] sm:$0xff]
          %v2014 = vld [vmem:[#allocation3] sm:$0xff]
          %2016 = vset.pattern.permute.xlu0 0
          %2017 = vperm.xlu0 %2016, %v2014
          %v2018 = vpop.permute.xlu0 %2017
          %v2020 = vrcp.pop %v2018
          %v2021 = vmul.f32 %v2013, %v2020
          %2022 = vst.msk [vmem:[%s328] sm:$0xff] %vm373, %v2021
          %v2023 = vld [vmem:[#allocation4] sm:$0xff]
          %v2024 = vld [vmem:[#allocation3] sm:$0xff]
          %2026 = vset.pattern.permute.xlu0 1
          %2027 = vperm.xlu0 %2026, %v2024
          %v2028 = vpop.permute.xlu0 %2027
          %v2030 = vrcp.pop %v2028
          %v2031 = vmul.f32 %v2023, %v2030
          %2032 = vst.msk [vmem:[%s328] sm:$0xff] %vm765, %v2031
          %v2033 = vld [vmem:[#allocation4] sm:$0xff]
          %v2034 = vld [vmem:[#allocation3] sm:$0xff]
          %2036 = vset.pattern.permute.xlu0 2
          %2037 = vperm.xlu0 %2036, %v2034
          %v2038 = vpop.permute.xlu0 %2037
          %v2040 = vrcp.pop %v2038
          %v2041 = vmul.f32 %v2033, %v2040
          %2042 = vst.msk [vmem:[%s328] sm:$0xff] %vm972, %v2041
          %v2043 = vld [vmem:[#allocation4] sm:$0xff]
          %v2044 = vld [vmem:[#allocation3] sm:$0xff]
          %2046 = vset.pattern.permute.xlu0 3
          %2047 = vperm.xlu0 %2046, %v2044
          %v2048 = vpop.permute.xlu0 %2047
          %v2050 = vrcp.pop %v2048
          %v2051 = vmul.f32 %v2043, %v2050
          %2052 = vst.msk [vmem:[%s328] sm:$0xff] %vm1179, %v2051
          %v2053 = vld [vmem:[#allocation4] sm:$0xff]
          %v2054 = vld [vmem:[#allocation3] sm:$0xff]
          %2056 = vset.pattern.permute.xlu0 4
          %2057 = vperm.xlu0 %2056, %v2054
          %v2058 = vpop.permute.xlu0 %2057
          %v2060 = vrcp.pop %v2058
          %v2061 = vmul.f32 %v2053, %v2060
          %2062 = vst.msk [vmem:[%s328] sm:$0xff] %vm1386, %v2061
          %v2063 = vld [vmem:[#allocation4] sm:$0xff]
          %v2064 = vld [vmem:[#allocation3] sm:$0xff]
          %2066 = vset.pattern.permute.xlu0 5
          %2067 = vperm.xlu0 %2066, %v2064
          %v2068 = vpop.permute.xlu0 %2067
          %v2070 = vrcp.pop %v2068
          %v2071 = vmul.f32 %v2063, %v2070
          %2072 = vst.msk [vmem:[%s328] sm:$0xff] %vm1593, %v2071
          %v2073 = vld [vmem:[#allocation4] sm:$0xff]
          %v2074 = vld [vmem:[#allocation3] sm:$0xff]
          %2076 = vset.pattern.permute.xlu0 6
          %2077 = vperm.xlu0 %2076, %v2074
          %v2078 = vpop.permute.xlu0 %2077
          %v2080 = vrcp.pop %v2078
          %v2081 = vmul.f32 %v2073, %v2080
          %2082 = vst.msk [vmem:[%s328] sm:$0xff] %vm1800, %v2081
          %v2083 = vld [vmem:[#allocation4] sm:$0xff]
          %v2084 = vld [vmem:[#allocation3] sm:$0xff]
          %2086 = vset.pattern.permute.xlu0 7
          %2087 = vperm.xlu0 %2086, %v2084
          %v2088 = vpop.permute.xlu0 %2087
          %v2090 = vrcp.pop %v2088
          %v2091 = vmul.f32 %v2083, %v2090
          %2092 = vst.msk [vmem:[%s328] sm:$0xff] %vm2007, %v2091
        $region60: #{tpu_custom_call.1} parent=35 // pred_fallthru
          _
        %s2093 = sand.u32 %s159, 1
        %s2094 = scalar_lea.sflag [#allocation7], %s2093
        %s2095 = sand.u32 %s159, 1
        %s2096 = smul.addr %s2095, 8
        %s2097 = scalar_lea.vmem [#allocation13], %s2096
        // Predicated region
        $region61: #{tpu_custom_call.1} parent=35 // pred_check
          %p2098 = pneg %p169
        $region62: #{tpu_custom_call.1} parent=35 // pred_check_branch
          %2100 = sbr.rel (%p2098) target = $region64
        $region63: #{tpu_custom_call.1} parent=35 // pred_region
          %s2102 = ssub.s32 128, 128
          %2103 = vsyncadd %s2094, %s2102
          %s2104 = smul.addr %s30, 2
          %s2105 = sadd.s32 %s31, %s2104
          %s2106 = smul.addr %s2105, 128
          %s2107 = scalar_lea.hbm %s4, %s2106
          %s2109 = sshll.u32 %s2097, 4
          %s2110 = int_to_ptr.vmem [resolvable:$true] %s2109
          %2112 = dma.vmem_to_hbm [thread:$0]  %s2110, 128, %s2107, %s2094
        $region64: #{tpu_custom_call.1} parent=35 // pred_fallthru
          _
      $region36: #{tpu_custom_call.1} parent=5 // pred_fallthru
        _
      %p2113 = scmp.le.s32.totalorder 2, %s20
      // Predicated region
      $region65: #{tpu_custom_call.1} parent=5 // pred_check
        %p2114 = pneg %p2113
      $region66: #{tpu_custom_call.1} parent=5 // pred_check_branch
        %2116 = sbr.rel (%p2114) target = $region68
      $region67: #{tpu_custom_call.1} parent=5 // pred_region
        %s2117 = ssub.s32 %s20, 2
        // Predicated region
        $region69: #{tpu_custom_call.1} parent=67 // pred_check
          %p2118 = pneg %p175
        $region70: #{tpu_custom_call.1} parent=67 // pred_check_branch
          %2120 = sbr.rel (%p2118) target = $region72
        $region71: #{tpu_custom_call.1} parent=67 // pred_region
          %s2121 = sand.u32 %s160, 1
          %s2122 = scalar_lea.sflag [#allocation7], %s2121
          %s2123 = sand.u32 %s160, 1
          %s2124 = smul.addr %s2123, 8
          %s2125 = scalar_lea.vmem [#allocation13], %s2124
          %2126 = dma.done %s2122, 128
        $region72: #{tpu_custom_call.1} parent=67 // pred_fallthru
          _
      $region68: #{tpu_custom_call.1} parent=5 // pred_fallthru
        _
    $region6: #{tpu_custom_call.1} parent=1 // loop_footer
      %s24 = sadd.s32 1, %s20
    $region7: #{tpu_custom_call.1} parent=1 // loop_footer_branch
      %19 = sbr.rel target = $region3
    $region8: #{tpu_custom_call.1} parent=1 // loop_exit
      _
    %2127 = vsyncpa [#allocation6], 1
    %s2128 = scalar_lea.sflag [#allocation6], 1
    %2129 = vsyncpa %s2128, 1
    %2130 = vsyncpa [#allocation11], 1
    %s2131 = scalar_lea.sflag [#allocation11], 1
    %2132 = vsyncpa %s2131, 1
    %2133 = vsyncpa [#allocation7], 1
    %s2134 = scalar_lea.sflag [#allocation7], 1
    %2135 = vsyncpa %s2134, 1
    %2136 = vsyncpa [#allocation8], 1
    %s2137 = scalar_lea.sflag [#allocation8], 1
    %2138 = vsyncpa %s2137, 1

</llo_original>
